<compile_context>
chip_gen: v7x
topology: tpu7x:2x2x1
jax: 0.10.0
libtpu: 0.0.40
codegen_flags: <defaults>
</compile_context>

<pallas_src>
import jax
import jax.numpy as jnp
from jax.experimental import pallas as pl
from jax.experimental.pallas import tpu as pltpu

NUM_LAYERS = 3
EMB_DIM = 128
BN_EPS = 1e-5


def mpn_kernel(ope_ref,                                    # SMEM [L] f32 = 1 + eps per layer
               nreal_ref,                                  # SMEM [B] int32 = real nodes/block
               x_ref, A_ref, T_ref, eattr_ref, P_ref,      # per-batch blocks (leading dim 1)
               Wn_ref, bn_ref, We_ref, be_ref,
               gamma_ref, beta_ref, Ws_ref, bs_ref,
               Wp_ref, bp_ref,
               out_ref):
    f32 = jnp.float32
    bf16 = jnp.bfloat16
    b = pl.program_id(0)
    N = x_ref.shape[1]

    # mask / count from an SMEM scalar (no [N,1] HBM input, no XLU reduction)
    n_real = nreal_ref[b]
    inv_cnt = 1.0 / jnp.maximum(n_real.astype(f32), 1.0)
    row_ids = jax.lax.broadcasted_iota(jnp.int32, (N, 1), 0)
    mask = (row_ids < n_real).astype(f32)                  # [N, 1] f32

    # hoist per-layer scalars / rows out of the layer loop
    ope = [ope_ref[l] for l in range(NUM_LAYERS)]          # SMEM scalar reads, once
    gamma = gamma_ref[...]                                 # [L, D] f32
    beta = beta_ref[...]                                   # [L, D] f32
    bs_all = bs_ref[...]                                   # [L, D] f32

    # node encoder (Linear) — bf16 MXU, f32 accumulate; zero padded rows for BN stats
    h = jnp.dot(x_ref[0], Wn_ref[...], preferred_element_type=f32) + bn_ref[...]
    h = h * mask                                           # [N, D] f32

    # bond encoder (Linear) + scatter-add of edge embeddings onto destination nodes;
    # layer-invariant -> computed once in the prologue.
    e_emb = jnp.dot(eattr_ref[0], We_ref[...], preferred_element_type=f32) + be_ref[...]
    edge_sum = jnp.dot(T_ref[0], e_emb.astype(bf16), preferred_element_type=f32)   # [N, D]

    for l in range(NUM_LAYERS):
        # BatchNorm1d (training-mode batch statistics over real nodes), single reduction pass:
        # padded rows of h are zero, so full-array sums == sums over real nodes.
        s1 = jnp.sum(h, axis=0, keepdims=True)             # [1, D]
        s2 = jnp.sum(h * h, axis=0, keepdims=True)         # [1, D]
        mean = s1 * inv_cnt
        var = jnp.maximum(s2 * inv_cnt - mean * mean, 0.0)
        scale = jax.lax.rsqrt(var + BN_EPS) * gamma[l:l + 1, :]
        # NOTE: hb is intentionally NOT masked here; A's columns for padded sources are zero
        # and h is re-masked below, so padded rows never leak into real nodes or BN stats.
        hb = (h - mean) * scale + beta[l:l + 1, :]

        # conv: sum aggregation of (h_j + e_ij) plus (1+eps)*self, then Linear — bf16 MXU.
        hb_bf = hb.astype(bf16)
        aggr = jnp.dot(A_ref[0], hb_bf, preferred_element_type=f32) + edge_sum
        upd = ope[l] * hb + aggr
        h_new = jnp.dot(upd.astype(bf16), Ws_ref[l], preferred_element_type=f32) \
            + bs_all[l:l + 1, :]
        if l < NUM_LAYERS - 1:                             # ReLU on all but the last layer
            h_new = jnp.maximum(h_new, 0.0)
        # dropout with p=0.0 is identity
        h = h_new * mask

    # JK == 'last'; global_add_pool via one-hot graph-membership matmul; graph_pred head.
    gemb = jnp.dot(P_ref[0], h.astype(bf16), preferred_element_type=f32)            # [G, D]
    # head output is lane-dense (padded to 128 tasks) -> unmasked stores
    out_ref[0] = jnp.dot(gemb.astype(bf16), Wp_ref[...],
                         preferred_element_type=f32) + bp_ref[...]


def molecule_predictive_network(one_plus_eps, n_real, x, A, Tm, eattr, P,
                                Wn, bn, We, be, gamma, beta, Ws, bs, Wp_pad, bp_pad,
                                *, n_tasks):
    B, N, F_in = x.shape
    _, _, E = Tm.shape
    F_e = eattr.shape[2]
    G = P.shape[1]
    t_pad = Wp_pad.shape[1]

    smem = pl.BlockSpec(memory_space=pltpu.MemorySpace.SMEM)

    def per_batch(s1, s2):                                 # one mini-batch slab per grid step
        return pl.BlockSpec((1, s1, s2), lambda b: (b, 0, 0))

    def shared(shape):                                     # weights: same block every step
        nd = len(shape)
        return pl.BlockSpec(shape, lambda b, nd=nd: (0,) * nd)

    in_specs = [
        smem,                                              # one_plus_eps [L]
        smem,                                              # n_real       [B]
        per_batch(N, F_in),                                # x
        per_batch(N, N),                                   # A
        per_batch(N, E),                                   # T
        per_batch(E, F_e),                                 # edge_attr
        per_batch(G, N),                                   # P (graph membership)
        shared(Wn.shape), shared(bn.shape),
        shared(We.shape), shared(be.shape),
        shared(gamma.shape), shared(beta.shape),
        shared(Ws.shape), shared(bs.shape),
        shared(Wp_pad.shape), shared(bp_pad.shape),
    ]
    out_specs = pl.BlockSpec((1, G, t_pad), lambda b: (b, 0, 0))

    # VMEM budget from the real footprint: double-buffered per-block inputs/outputs + resident
    # weights + headroom for the f32 [N,D] intermediates (h/hb/aggr/upd/edge_sum ≈ 1 MiB) and
    # compiler scratch.  ~10 MiB total — well inside the v5e/v6e/v7x scoped limits.
    per_block_bytes = (x.nbytes + A.nbytes + Tm.nbytes + eattr.nbytes + P.nbytes) // B
    weight_bytes = sum(int(a.nbytes) for a in
                       (Wn, bn, We, be, gamma, beta, Ws, bs, Wp_pad, bp_pad))
    out_block_bytes = G * t_pad * 4
    vmem_bytes = 2 * (per_block_bytes + out_block_bytes + weight_bytes) + 8 * 1024 * 1024

    out = pl.pallas_call(
        mpn_kernel,
        grid=(B,),
        out_shape=jax.ShapeDtypeStruct((B, G, t_pad), jnp.float32),
        in_specs=in_specs,
        out_specs=out_specs,
        compiler_params=pltpu.CompilerParams(
            dimension_semantics=("parallel",),             # megacore on v7x; no-op on v5e/v6e
            vmem_limit_bytes=int(vmem_bytes)),
    )(one_plus_eps, n_real, x, A, Tm, eattr, P,
      Wn, bn, We, be, gamma, beta, Ws, bs, Wp_pad, bp_pad)
    return out[:, :, :n_tasks]


def reference_f32(one_plus_eps, x, A, Tm, eattr, P, mask, Wn, bn, We, be,
                  gamma, beta, Ws, bs, Wp, bp):
    """Pure-JAX f32 reference (original semantics, single mini-batch)."""
    cnt = jnp.maximum(jnp.sum(mask), 1.0)
    h = (x @ Wn + bn) * mask
    e = eattr @ We + be
    edge_sum = Tm @ e
    for l in range(NUM_LAYERS):
        mean = jnp.sum(h, axis=0, keepdims=True) / cnt
        var = jnp.maximum(jnp.sum(h * h, axis=0, keepdims=True) / cnt - mean * mean, 0.0)
        hb = ((h - mean) * jax.lax.rsqrt(var + BN_EPS) * gamma[l:l + 1] + beta[l:l + 1]) * mask
        aggr = A @ hb + edge_sum
        upd = one_plus_eps[l] * hb + aggr
        h = upd @ Ws[l] + bs[l:l + 1]
        if l < NUM_LAYERS - 1:
            h = jnp.maximum(h, 0.0)
        h = h * mask
    return (P @ h) @ Wp + bp


if __name__ == "__main__":
    # B independent molecule mini-batches (each = one full forward pass / BatchNorm batch),
    # N padded nodes (multiple of 256 -> MXU rows fully filled on v6e/v7x), G graphs, E edges.
    B = 4
    N, G, E = 256, 8, 512
    F_in, F_e, D, T_out = 16, 16, EMB_DIM, 8
    L = NUM_LAYERS
    T_PAD = 128                                            # lane-dense head output
    n_real_list = [240, 200, 256, 224]                     # real nodes per mini-batch

    key = jax.random.PRNGKey(0)
    kw = jax.random.split(key, 4)

    # --- per-mini-batch graph data (deterministic); edges only between real nodes ---
    xs, As, Ts, Ps, eattrs, masks = [], [], [], [], [], []
    for b in range(B):
        kb = jax.random.fold_in(key, 1000 + b)
        k1, k2, k3, k4 = jax.random.split(kb, 4)
        nr = n_real_list[b]
        xb = jax.random.normal(k1, (N, F_in), jnp.float32)
        eb = jax.random.normal(k2, (E, F_e), jnp.float32)
        src = jax.random.randint(k3, (E,), 0, nr)
        dst = jax.random.randint(k4, (E,), 0, nr)
        mask_b = (jnp.arange(N) < nr).astype(jnp.float32)
        gid = jnp.minimum((jnp.arange(N) * G) // nr, G - 1)            # node -> graph id
        A_b = jnp.zeros((N, N), jnp.float32).at[dst, src].add(1.0)     # A[i,j] = #edges j->i
        T_b = jnp.zeros((N, E), jnp.float32).at[dst, jnp.arange(E)].set(1.0)
        P_b = jnp.zeros((G, N), jnp.float32).at[gid, jnp.arange(N)].add(mask_b)
        xs.append(xb); eattrs.append(eb); As.append(A_b); Ts.append(T_b); Ps.append(P_b)
        masks.append(mask_b[:, None])
    x = jnp.stack(xs); eattr = jnp.stack(eattrs)
    A = jnp.stack(As); Tm = jnp.stack(Ts); P = jnp.stack(Ps)
    n_real = jnp.array(n_real_list, jnp.int32)

    # --- parameters (deterministic synthetic init) ---
    eps = jnp.array([0.0, 0.01, 0.02], jnp.float32)                    # GIN eps per layer
    one_plus_eps = 1.0 + eps                                           # precomputed on host
    Wn = 0.1 * jax.random.normal(kw[0], (F_in, D), jnp.float32)
    bn = jnp.zeros((1, D), jnp.float32)
    We = 0.1 * jax.random.normal(kw[1], (F_e, D), jnp.float32)
    be = jnp.zeros((1, D), jnp.float32)
    gamma = jnp.ones((L, D), jnp.float32)
    beta = jnp.zeros((L, D), jnp.float32)
    Ws = (1.0 / jnp.sqrt(D)) * jax.random.normal(kw[2], (L, D, D), jnp.float32)
    bs = jnp.zeros((L, D), jnp.float32)
    Wp = (1.0 / jnp.sqrt(D)) * jax.random.normal(kw[3], (D, T_out), jnp.float32)
    bp = jnp.zeros((1, T_out), jnp.float32)

    # --- bf16 MXU operands (f32 accumulation stays inside the kernel) ---
    bf = jnp.bfloat16
    x_b, eattr_b = x.astype(bf), eattr.astype(bf)
    A_b, T_b, P_b = A.astype(bf), Tm.astype(bf), P.astype(bf)          # exact 0/1/count values
    Wn_b, We_b, Ws_b = Wn.astype(bf), We.astype(bf), Ws.astype(bf)
    Wp_pad = jnp.zeros((D, T_PAD), jnp.float32).at[:, :T_out].set(Wp).astype(bf)
    bp_pad = jnp.zeros((1, T_PAD), jnp.float32).at[:, :T_out].set(bp)

    preds = molecule_predictive_network(
        one_plus_eps, n_real, x_b, A_b, T_b, eattr_b, P_b,
        Wn_b, bn, We_b, be, gamma, beta, Ws_b, bs, Wp_pad, bp_pad,
        n_tasks=T_out)
    jax.block_until_ready(preds)

    assert preds.shape == (B, G, T_out)
    assert bool(jnp.all(jnp.isfinite(preds)))

    # loose sanity check against an f32 pure-JAX reference (kernel runs bf16 on the MXU)
    refs = jnp.stack([
        reference_f32(one_plus_eps, x[b], A[b], Tm[b], eattr[b], P[b], masks[b],
                      Wn, bn, We, be, gamma, beta, Ws, bs, Wp, bp)
        for b in range(B)])
    assert bool(jnp.allclose(preds, refs, rtol=0.1, atol=2.0))

    print("KERNEL_OK")
</pallas_src>

<mosaic_0001>
module attributes {stable_mosaic.version = 11 : i64} {
  func.func @mpn_kernel(%arg0: i32, %arg1: memref<3xf32, #tpu.memory_space<smem>>, %arg2: memref<4xi32, #tpu.memory_space<smem>>, %arg3: memref<1x256x16xbf16, #tpu.memory_space<vmem>>, %arg4: memref<1x256x256xbf16, #tpu.memory_space<vmem>>, %arg5: memref<1x256x512xbf16, #tpu.memory_space<vmem>>, %arg6: memref<1x512x16xbf16, #tpu.memory_space<vmem>>, %arg7: memref<1x8x256xbf16, #tpu.memory_space<vmem>>, %arg8: memref<16x128xbf16, #tpu.memory_space<vmem>>, %arg9: memref<1x128xf32, #tpu.memory_space<vmem>>, %arg10: memref<16x128xbf16, #tpu.memory_space<vmem>>, %arg11: memref<1x128xf32, #tpu.memory_space<vmem>>, %arg12: memref<3x128xf32, #tpu.memory_space<vmem>>, %arg13: memref<3x128xf32, #tpu.memory_space<vmem>>, %arg14: memref<3x128x128xbf16, #tpu.memory_space<vmem>>, %arg15: memref<3x128xf32, #tpu.memory_space<vmem>>, %arg16: memref<128x128xbf16, #tpu.memory_space<vmem>>, %arg17: memref<1x128xf32, #tpu.memory_space<vmem>>, %arg18: memref<1x8x128xf32, #tpu.memory_space<vmem>>) attributes {dimension_semantics = [#tpu.dimension_semantics<parallel>], iteration_bounds = array<i64: 4>, scalar_prefetch = 0 : i64, scratch_operands = 0 : i64, tpu.core_type = #tpu.core_type<tc>, window_params = [{transform_indices = @transform_0, window_bounds = array<i64: 3>}, {transform_indices = @transform_1, window_bounds = array<i64: 4>}, {transform_indices = @transform_2, window_bounds = array<i64: 1, 256, 16>}, {transform_indices = @transform_3, window_bounds = array<i64: 1, 256, 256>}, {transform_indices = @transform_4, window_bounds = array<i64: 1, 256, 512>}, {transform_indices = @transform_5, window_bounds = array<i64: 1, 512, 16>}, {transform_indices = @transform_6, window_bounds = array<i64: 1, 8, 256>}, {pipeline_mode = #tpu.pipeline_mode<synchronous>, transform_indices = @transform_7, window_bounds = array<i64: 16, 128>}, {pipeline_mode = #tpu.pipeline_mode<synchronous>, transform_indices = @transform_8, window_bounds = array<i64: 1, 128>}, {pipeline_mode = #tpu.pipeline_mode<synchronous>, transform_indices = @transform_9, window_bounds = array<i64: 16, 128>}, {pipeline_mode = #tpu.pipeline_mode<synchronous>, transform_indices = @transform_10, window_bounds = array<i64: 1, 128>}, {pipeline_mode = #tpu.pipeline_mode<synchronous>, transform_indices = @transform_11, window_bounds = array<i64: 3, 128>}, {pipeline_mode = #tpu.pipeline_mode<synchronous>, transform_indices = @transform_12, window_bounds = array<i64: 3, 128>}, {pipeline_mode = #tpu.pipeline_mode<synchronous>, transform_indices = @transform_13, window_bounds = array<i64: 3, 128, 128>}, {pipeline_mode = #tpu.pipeline_mode<synchronous>, transform_indices = @transform_14, window_bounds = array<i64: 3, 128>}, {pipeline_mode = #tpu.pipeline_mode<synchronous>, transform_indices = @transform_15, window_bounds = array<i64: 128, 128>}, {pipeline_mode = #tpu.pipeline_mode<synchronous>, transform_indices = @transform_16, window_bounds = array<i64: 1, 128>}, {transform_indices = @transform_17, window_bounds = array<i64: 1, 8, 128>}]} {
    %0 = arith.index_cast %arg0 : i32 to index
    %1 = memref.load %arg2[%0] : memref<4xi32, #tpu.memory_space<smem>>
    %2 = arith.sitofp %1 : i32 to f32
    %cst = arith.constant 1.000000e+00 : f32
    %3 = arith.maximumf %2, %cst : f32
    %cst_0 = arith.constant 1.000000e+00 : f32
    %4 = arith.divf %cst_0, %3 : f32
    %5 = tpu.iota {dimensions = array<i32: 0>} : vector<256x1xi32>
    %6 = vector.broadcast %1 : i32 to vector<256x1xi32>
    %7 = arith.cmpi slt, %5, %6 : vector<256x1xi32>
    %8 = arith.extui %7 : vector<256x1xi1> to vector<256x1xi32>
    %9 = arith.sitofp %8 : vector<256x1xi32> to vector<256x1xf32>
    %c0 = arith.constant 0 : index
    %10 = memref.load %arg1[%c0] : memref<3xf32, #tpu.memory_space<smem>>
    %c1 = arith.constant 1 : index
    %11 = memref.load %arg1[%c1] : memref<3xf32, #tpu.memory_space<smem>>
    %c2 = arith.constant 2 : index
    %12 = memref.load %arg1[%c2] : memref<3xf32, #tpu.memory_space<smem>>
    %c0_1 = arith.constant 0 : index
    %c0_2 = arith.constant 0 : index
    %13 = vector.load %arg12[%c0_1, %c0_2] : memref<3x128xf32, #tpu.memory_space<vmem>>, vector<3x128xf32>
    %c0_3 = arith.constant 0 : index
    %c0_4 = arith.constant 0 : index
    %14 = vector.load %arg13[%c0_3, %c0_4] : memref<3x128xf32, #tpu.memory_space<vmem>>, vector<3x128xf32>
    %c0_5 = arith.constant 0 : index
    %c0_6 = arith.constant 0 : index
    %15 = vector.load %arg15[%c0_5, %c0_6] : memref<3x128xf32, #tpu.memory_space<vmem>>, vector<3x128xf32>
    %c0_7 = arith.constant 0 : index
    %c0_8 = arith.constant 0 : index
    %c0_9 = arith.constant 0 : index
    %16 = vector.load %arg3[%c0_7, %c0_8, %c0_9] : memref<1x256x16xbf16, #tpu.memory_space<vmem>>, vector<1x256x16xbf16>
    %17 = vector.shape_cast %16 : vector<1x256x16xbf16> to vector<256x16xbf16>
    %c0_10 = arith.constant 0 : index
    %c0_11 = arith.constant 0 : index
    %18 = vector.load %arg8[%c0_10, %c0_11] : memref<16x128xbf16, #tpu.memory_space<vmem>>, vector<16x128xbf16>
    %cst_12 = arith.constant dense<0.000000e+00> : vector<256x128xf32>
    %19 = tpu.matmul %17, %18, %cst_12 {dimension_numbers = #tpu.dot_dimension_numbers<[1], [0], [0], [1], [0, 0, 1, 1], [], []>} : vector<256x16xbf16>, vector<16x128xbf16>, vector<256x128xf32> -> vector<256x128xf32>
    %c0_13 = arith.constant 0 : index
    %c0_14 = arith.constant 0 : index
    %20 = vector.load %arg9[%c0_13, %c0_14] : memref<1x128xf32, #tpu.memory_space<vmem>>, vector<1x128xf32>
    %21 = vector.broadcast %20 : vector<1x128xf32> to vector<256x128xf32>
    %22 = arith.addf %19, %21 : vector<256x128xf32>
    %23 = vector.broadcast %9 : vector<256x1xf32> to vector<256x128xf32>
    %24 = arith.mulf %22, %23 : vector<256x128xf32>
    %c0_15 = arith.constant 0 : index
    %c0_16 = arith.constant 0 : index
    %c0_17 = arith.constant 0 : index
    %25 = vector.load %arg6[%c0_15, %c0_16, %c0_17] : memref<1x512x16xbf16, #tpu.memory_space<vmem>>, vector<1x512x16xbf16>
    %26 = vector.shape_cast %25 : vector<1x512x16xbf16> to vector<512x16xbf16>
    %c0_18 = arith.constant 0 : index
    %c0_19 = arith.constant 0 : index
    %27 = vector.load %arg10[%c0_18, %c0_19] : memref<16x128xbf16, #tpu.memory_space<vmem>>, vector<16x128xbf16>
    %cst_20 = arith.constant dense<0.000000e+00> : vector<512x128xf32>
    %28 = tpu.matmul %26, %27, %cst_20 {dimension_numbers = #tpu.dot_dimension_numbers<[1], [0], [0], [1], [0, 0, 1, 1], [], []>} : vector<512x16xbf16>, vector<16x128xbf16>, vector<512x128xf32> -> vector<512x128xf32>
    %c0_21 = arith.constant 0 : index
    %c0_22 = arith.constant 0 : index
    %29 = vector.load %arg11[%c0_21, %c0_22] : memref<1x128xf32, #tpu.memory_space<vmem>>, vector<1x128xf32>
    %30 = vector.broadcast %29 : vector<1x128xf32> to vector<512x128xf32>
    %31 = arith.addf %28, %30 : vector<512x128xf32>
    %c0_23 = arith.constant 0 : index
    %c0_24 = arith.constant 0 : index
    %c0_25 = arith.constant 0 : index
    %32 = vector.load %arg5[%c0_23, %c0_24, %c0_25] : memref<1x256x512xbf16, #tpu.memory_space<vmem>>, vector<1x256x512xbf16>
    %33 = vector.shape_cast %32 : vector<1x256x512xbf16> to vector<256x512xbf16>
    %34 = arith.truncf %31 : vector<512x128xf32> to vector<512x128xbf16>
    %cst_26 = arith.constant dense<0.000000e+00> : vector<256x128xf32>
    %35 = tpu.matmul %33, %34, %cst_26 {dimension_numbers = #tpu.dot_dimension_numbers<[1], [0], [0], [1], [0, 0, 1, 1], [], []>} : vector<256x512xbf16>, vector<512x128xbf16>, vector<256x128xf32> -> vector<256x128xf32>
    %cst_27 = arith.constant dense<0.000000e+00> : vector<128xf32>
    %36 = vector.multi_reduction <add>, %24, %cst_27 [0] : vector<256x128xf32> to vector<128xf32>
    %37 = vector.shape_cast %36 : vector<128xf32> to vector<1x128xf32>
    %38 = arith.mulf %24, %24 : vector<256x128xf32>
    %cst_28 = arith.constant dense<0.000000e+00> : vector<128xf32>
    %39 = vector.multi_reduction <add>, %38, %cst_28 [0] : vector<256x128xf32> to vector<128xf32>
    %40 = vector.shape_cast %39 : vector<128xf32> to vector<1x128xf32>
    %41 = vector.broadcast %4 : f32 to vector<1x128xf32>
    %42 = arith.mulf %37, %41 : vector<1x128xf32>
    %43 = vector.broadcast %4 : f32 to vector<1x128xf32>
    %44 = arith.mulf %40, %43 : vector<1x128xf32>
    %45 = arith.mulf %42, %42 : vector<1x128xf32>
    %46 = arith.subf %44, %45 : vector<1x128xf32>
    %cst_29 = arith.constant 0.000000e+00 : f32
    %47 = vector.broadcast %cst_29 : f32 to vector<1x128xf32>
    %48 = arith.maximumf %46, %47 : vector<1x128xf32>
    %cst_30 = arith.constant 9.99999974E-6 : f32
    %49 = vector.broadcast %cst_30 : f32 to vector<1x128xf32>
    %50 = arith.addf %48, %49 : vector<1x128xf32>
    %51 = math.rsqrt %50 : vector<1x128xf32>
    %52 = vector.extract_strided_slice %13 {offsets = [0, 0], sizes = [1, 128], strides = [1, 1]} : vector<3x128xf32> to vector<1x128xf32>
    %53 = arith.mulf %51, %52 : vector<1x128xf32>
    %54 = vector.broadcast %42 : vector<1x128xf32> to vector<256x128xf32>
    %55 = arith.subf %24, %54 : vector<256x128xf32>
    %56 = vector.broadcast %53 : vector<1x128xf32> to vector<256x128xf32>
    %57 = arith.mulf %55, %56 : vector<256x128xf32>
    %58 = vector.extract_strided_slice %14 {offsets = [0, 0], sizes = [1, 128], strides = [1, 1]} : vector<3x128xf32> to vector<1x128xf32>
    %59 = vector.broadcast %58 : vector<1x128xf32> to vector<256x128xf32>
    %60 = arith.addf %57, %59 : vector<256x128xf32>
    %61 = arith.truncf %60 : vector<256x128xf32> to vector<256x128xbf16>
    %c0_31 = arith.constant 0 : index
    %c0_32 = arith.constant 0 : index
    %c0_33 = arith.constant 0 : index
    %62 = vector.load %arg4[%c0_31, %c0_32, %c0_33] : memref<1x256x256xbf16, #tpu.memory_space<vmem>>, vector<1x256x256xbf16>
    %63 = vector.shape_cast %62 : vector<1x256x256xbf16> to vector<256x256xbf16>
    %cst_34 = arith.constant dense<0.000000e+00> : vector<256x128xf32>
    %64 = tpu.matmul %63, %61, %cst_34 {dimension_numbers = #tpu.dot_dimension_numbers<[1], [0], [0], [1], [0, 0, 1, 1], [], []>} : vector<256x256xbf16>, vector<256x128xbf16>, vector<256x128xf32> -> vector<256x128xf32>
    %65 = arith.addf %64, %35 : vector<256x128xf32>
    %66 = vector.broadcast %10 : f32 to vector<256x128xf32>
    %67 = arith.mulf %66, %60 : vector<256x128xf32>
    %68 = arith.addf %67, %65 : vector<256x128xf32>
    %69 = arith.truncf %68 : vector<256x128xf32> to vector<256x128xbf16>
    %c0_35 = arith.constant 0 : index
    %c0_36 = arith.constant 0 : index
    %c0_37 = arith.constant 0 : index
    %70 = vector.load %arg14[%c0_35, %c0_36, %c0_37] : memref<3x128x128xbf16, #tpu.memory_space<vmem>>, vector<1x128x128xbf16>
    %71 = vector.shape_cast %70 : vector<1x128x128xbf16> to vector<128x128xbf16>
    %cst_38 = arith.constant dense<0.000000e+00> : vector<256x128xf32>
    %72 = tpu.matmul %69, %71, %cst_38 {dimension_numbers = #tpu.dot_dimension_numbers<[1], [0], [0], [1], [0, 0, 1, 1], [], []>} : vector<256x128xbf16>, vector<128x128xbf16>, vector<256x128xf32> -> vector<256x128xf32>
    %73 = vector.extract_strided_slice %15 {offsets = [0, 0], sizes = [1, 128], strides = [1, 1]} : vector<3x128xf32> to vector<1x128xf32>
    %74 = vector.broadcast %73 : vector<1x128xf32> to vector<256x128xf32>
    %75 = arith.addf %72, %74 : vector<256x128xf32>
    %cst_39 = arith.constant 0.000000e+00 : f32
    %76 = vector.broadcast %cst_39 : f32 to vector<256x128xf32>
    %77 = arith.maximumf %75, %76 : vector<256x128xf32>
    %78 = vector.broadcast %9 : vector<256x1xf32> to vector<256x128xf32>
    %79 = arith.mulf %77, %78 : vector<256x128xf32>
    %cst_40 = arith.constant dense<0.000000e+00> : vector<128xf32>
    %80 = vector.multi_reduction <add>, %79, %cst_40 [0] : vector<256x128xf32> to vector<128xf32>
    %81 = vector.shape_cast %80 : vector<128xf32> to vector<1x128xf32>
    %82 = arith.mulf %79, %79 : vector<256x128xf32>
    %cst_41 = arith.constant dense<0.000000e+00> : vector<128xf32>
    %83 = vector.multi_reduction <add>, %82, %cst_41 [0] : vector<256x128xf32> to vector<128xf32>
    %84 = vector.shape_cast %83 : vector<128xf32> to vector<1x128xf32>
    %85 = vector.broadcast %4 : f32 to vector<1x128xf32>
    %86 = arith.mulf %81, %85 : vector<1x128xf32>
    %87 = vector.broadcast %4 : f32 to vector<1x128xf32>
    %88 = arith.mulf %84, %87 : vector<1x128xf32>
    %89 = arith.mulf %86, %86 : vector<1x128xf32>
    %90 = arith.subf %88, %89 : vector<1x128xf32>
    %cst_42 = arith.constant 0.000000e+00 : f32
    %91 = vector.broadcast %cst_42 : f32 to vector<1x128xf32>
    %92 = arith.maximumf %90, %91 : vector<1x128xf32>
    %cst_43 = arith.constant 9.99999974E-6 : f32
    %93 = vector.broadcast %cst_43 : f32 to vector<1x128xf32>
    %94 = arith.addf %92, %93 : vector<1x128xf32>
    %95 = math.rsqrt %94 : vector<1x128xf32>
    %96 = vector.extract_strided_slice %13 {offsets = [1, 0], sizes = [1, 128], strides = [1, 1]} : vector<3x128xf32> to vector<1x128xf32>
    %97 = arith.mulf %95, %96 : vector<1x128xf32>
    %98 = vector.broadcast %86 : vector<1x128xf32> to vector<256x128xf32>
    %99 = arith.subf %79, %98 : vector<256x128xf32>
    %100 = vector.broadcast %97 : vector<1x128xf32> to vector<256x128xf32>
    %101 = arith.mulf %99, %100 : vector<256x128xf32>
    %102 = vector.extract_strided_slice %14 {offsets = [1, 0], sizes = [1, 128], strides = [1, 1]} : vector<3x128xf32> to vector<1x128xf32>
    %103 = vector.broadcast %102 : vector<1x128xf32> to vector<256x128xf32>
    %104 = arith.addf %101, %103 : vector<256x128xf32>
    %105 = arith.truncf %104 : vector<256x128xf32> to vector<256x128xbf16>
    %c0_44 = arith.constant 0 : index
    %c0_45 = arith.constant 0 : index
    %c0_46 = arith.constant 0 : index
    %106 = vector.load %arg4[%c0_44, %c0_45, %c0_46] : memref<1x256x256xbf16, #tpu.memory_space<vmem>>, vector<1x256x256xbf16>
    %107 = vector.shape_cast %106 : vector<1x256x256xbf16> to vector<256x256xbf16>
    %cst_47 = arith.constant dense<0.000000e+00> : vector<256x128xf32>
    %108 = tpu.matmul %107, %105, %cst_47 {dimension_numbers = #tpu.dot_dimension_numbers<[1], [0], [0], [1], [0, 0, 1, 1], [], []>} : vector<256x256xbf16>, vector<256x128xbf16>, vector<256x128xf32> -> vector<256x128xf32>
    %109 = arith.addf %108, %35 : vector<256x128xf32>
    %110 = vector.broadcast %11 : f32 to vector<256x128xf32>
    %111 = arith.mulf %110, %104 : vector<256x128xf32>
    %112 = arith.addf %111, %109 : vector<256x128xf32>
    %113 = arith.truncf %112 : vector<256x128xf32> to vector<256x128xbf16>
    %c1_48 = arith.constant 1 : index
    %c0_49 = arith.constant 0 : index
    %c0_50 = arith.constant 0 : index
    %114 = vector.load %arg14[%c1_48, %c0_49, %c0_50] : memref<3x128x128xbf16, #tpu.memory_space<vmem>>, vector<1x128x128xbf16>
    %115 = vector.shape_cast %114 : vector<1x128x128xbf16> to vector<128x128xbf16>
    %cst_51 = arith.constant dense<0.000000e+00> : vector<256x128xf32>
    %116 = tpu.matmul %113, %115, %cst_51 {dimension_numbers = #tpu.dot_dimension_numbers<[1], [0], [0], [1], [0, 0, 1, 1], [], []>} : vector<256x128xbf16>, vector<128x128xbf16>, vector<256x128xf32> -> vector<256x128xf32>
    %117 = vector.extract_strided_slice %15 {offsets = [1, 0], sizes = [1, 128], strides = [1, 1]} : vector<3x128xf32> to vector<1x128xf32>
    %118 = vector.broadcast %117 : vector<1x128xf32> to vector<256x128xf32>
    %119 = arith.addf %116, %118 : vector<256x128xf32>
    %cst_52 = arith.constant 0.000000e+00 : f32
    %120 = vector.broadcast %cst_52 : f32 to vector<256x128xf32>
    %121 = arith.maximumf %119, %120 : vector<256x128xf32>
    %122 = vector.broadcast %9 : vector<256x1xf32> to vector<256x128xf32>
    %123 = arith.mulf %121, %122 : vector<256x128xf32>
    %cst_53 = arith.constant dense<0.000000e+00> : vector<128xf32>
    %124 = vector.multi_reduction <add>, %123, %cst_53 [0] : vector<256x128xf32> to vector<128xf32>
    %125 = vector.shape_cast %124 : vector<128xf32> to vector<1x128xf32>
    %126 = arith.mulf %123, %123 : vector<256x128xf32>
    %cst_54 = arith.constant dense<0.000000e+00> : vector<128xf32>
    %127 = vector.multi_reduction <add>, %126, %cst_54 [0] : vector<256x128xf32> to vector<128xf32>
    %128 = vector.shape_cast %127 : vector<128xf32> to vector<1x128xf32>
    %129 = vector.broadcast %4 : f32 to vector<1x128xf32>
    %130 = arith.mulf %125, %129 : vector<1x128xf32>
    %131 = vector.broadcast %4 : f32 to vector<1x128xf32>
    %132 = arith.mulf %128, %131 : vector<1x128xf32>
    %133 = arith.mulf %130, %130 : vector<1x128xf32>
    %134 = arith.subf %132, %133 : vector<1x128xf32>
    %cst_55 = arith.constant 0.000000e+00 : f32
    %135 = vector.broadcast %cst_55 : f32 to vector<1x128xf32>
    %136 = arith.maximumf %134, %135 : vector<1x128xf32>
    %cst_56 = arith.constant 9.99999974E-6 : f32
    %137 = vector.broadcast %cst_56 : f32 to vector<1x128xf32>
    %138 = arith.addf %136, %137 : vector<1x128xf32>
    %139 = math.rsqrt %138 : vector<1x128xf32>
    %140 = vector.extract_strided_slice %13 {offsets = [2, 0], sizes = [1, 128], strides = [1, 1]} : vector<3x128xf32> to vector<1x128xf32>
    %141 = arith.mulf %139, %140 : vector<1x128xf32>
    %142 = vector.broadcast %130 : vector<1x128xf32> to vector<256x128xf32>
    %143 = arith.subf %123, %142 : vector<256x128xf32>
    %144 = vector.broadcast %141 : vector<1x128xf32> to vector<256x128xf32>
    %145 = arith.mulf %143, %144 : vector<256x128xf32>
    %146 = vector.extract_strided_slice %14 {offsets = [2, 0], sizes = [1, 128], strides = [1, 1]} : vector<3x128xf32> to vector<1x128xf32>
    %147 = vector.broadcast %146 : vector<1x128xf32> to vector<256x128xf32>
    %148 = arith.addf %145, %147 : vector<256x128xf32>
    %149 = arith.truncf %148 : vector<256x128xf32> to vector<256x128xbf16>
    %c0_57 = arith.constant 0 : index
    %c0_58 = arith.constant 0 : index
    %c0_59 = arith.constant 0 : index
    %150 = vector.load %arg4[%c0_57, %c0_58, %c0_59] : memref<1x256x256xbf16, #tpu.memory_space<vmem>>, vector<1x256x256xbf16>
    %151 = vector.shape_cast %150 : vector<1x256x256xbf16> to vector<256x256xbf16>
    %cst_60 = arith.constant dense<0.000000e+00> : vector<256x128xf32>
    %152 = tpu.matmul %151, %149, %cst_60 {dimension_numbers = #tpu.dot_dimension_numbers<[1], [0], [0], [1], [0, 0, 1, 1], [], []>} : vector<256x256xbf16>, vector<256x128xbf16>, vector<256x128xf32> -> vector<256x128xf32>
    %153 = arith.addf %152, %35 : vector<256x128xf32>
    %154 = vector.broadcast %12 : f32 to vector<256x128xf32>
    %155 = arith.mulf %154, %148 : vector<256x128xf32>
    %156 = arith.addf %155, %153 : vector<256x128xf32>
    %157 = arith.truncf %156 : vector<256x128xf32> to vector<256x128xbf16>
    %c2_61 = arith.constant 2 : index
    %c0_62 = arith.constant 0 : index
    %c0_63 = arith.constant 0 : index
    %158 = vector.load %arg14[%c2_61, %c0_62, %c0_63] : memref<3x128x128xbf16, #tpu.memory_space<vmem>>, vector<1x128x128xbf16>
    %159 = vector.shape_cast %158 : vector<1x128x128xbf16> to vector<128x128xbf16>
    %cst_64 = arith.constant dense<0.000000e+00> : vector<256x128xf32>
    %160 = tpu.matmul %157, %159, %cst_64 {dimension_numbers = #tpu.dot_dimension_numbers<[1], [0], [0], [1], [0, 0, 1, 1], [], []>} : vector<256x128xbf16>, vector<128x128xbf16>, vector<256x128xf32> -> vector<256x128xf32>
    %161 = vector.extract_strided_slice %15 {offsets = [2, 0], sizes = [1, 128], strides = [1, 1]} : vector<3x128xf32> to vector<1x128xf32>
    %162 = vector.broadcast %161 : vector<1x128xf32> to vector<256x128xf32>
    %163 = arith.addf %160, %162 : vector<256x128xf32>
    %164 = vector.broadcast %9 : vector<256x1xf32> to vector<256x128xf32>
    %165 = arith.mulf %163, %164 : vector<256x128xf32>
    %c0_65 = arith.constant 0 : index
    %c0_66 = arith.constant 0 : index
    %c0_67 = arith.constant 0 : index
    %166 = vector.load %arg7[%c0_65, %c0_66, %c0_67] : memref<1x8x256xbf16, #tpu.memory_space<vmem>>, vector<1x8x256xbf16>
    %167 = vector.shape_cast %166 : vector<1x8x256xbf16> to vector<8x256xbf16>
    %168 = arith.truncf %165 : vector<256x128xf32> to vector<256x128xbf16>
    %cst_68 = arith.constant dense<0.000000e+00> : vector<8x128xf32>
    %169 = tpu.matmul %167, %168, %cst_68 {dimension_numbers = #tpu.dot_dimension_numbers<[1], [0], [0], [1], [0, 0, 1, 1], [], []>} : vector<8x256xbf16>, vector<256x128xbf16>, vector<8x128xf32> -> vector<8x128xf32>
    %170 = arith.truncf %169 : vector<8x128xf32> to vector<8x128xbf16>
    %c0_69 = arith.constant 0 : index
    %c0_70 = arith.constant 0 : index
    %171 = vector.load %arg16[%c0_69, %c0_70] : memref<128x128xbf16, #tpu.memory_space<vmem>>, vector<128x128xbf16>
    %cst_71 = arith.constant dense<0.000000e+00> : vector<8x128xf32>
    %172 = tpu.matmul %170, %171, %cst_71 {dimension_numbers = #tpu.dot_dimension_numbers<[1], [0], [0], [1], [0, 0, 1, 1], [], []>} : vector<8x128xbf16>, vector<128x128xbf16>, vector<8x128xf32> -> vector<8x128xf32>
    %c0_72 = arith.constant 0 : index
    %c0_73 = arith.constant 0 : index
    %173 = vector.load %arg17[%c0_72, %c0_73] : memref<1x128xf32, #tpu.memory_space<vmem>>, vector<1x128xf32>
    %174 = vector.broadcast %173 : vector<1x128xf32> to vector<8x128xf32>
    %175 = arith.addf %172, %174 : vector<8x128xf32>
    %c0_74 = arith.constant 0 : index
    %c0_75 = arith.constant 0 : index
    %c0_76 = arith.constant 0 : index
    %176 = vector.load %arg18[%c0_74, %c0_75, %c0_76] : memref<1x8x128xf32, #tpu.memory_space<vmem>>, vector<1x8x128xf32>
    %177 = vector.shape_cast %176 : vector<1x8x128xf32> to vector<8x128xf32>
    %178 = vector.shape_cast %175 : vector<8x128xf32> to vector<1x8x128xf32>
    tpu.vector_store %arg18[%c0_74, %c0_75, %c0_76], %178 {strides = array<i32>} : memref<1x8x128xf32, #tpu.memory_space<vmem>>, vector<1x8x128xf32>,
    return
  }
  func.func @transform_0(%arg0: i32) -> i32 {
    %c0_i32 = arith.constant 0 : i32
    %c0_i32_0 = arith.constant 0 : i32
    return %c0_i32 : i32
  }
  func.func @transform_1(%arg0: i32) -> i32 {
    %c0_i32 = arith.constant 0 : i32
    %c0_i32_0 = arith.constant 0 : i32
    return %c0_i32 : i32
  }
  func.func @transform_2(%arg0: i32) -> (i32, i32, i32) {
    %c0_i32 = arith.constant 0 : i32
    %c0_i32_0 = arith.constant 0 : i32
    %c0_i32_1 = arith.constant 0 : i32
    return %arg0, %c0_i32, %c0_i32_0 : i32, i32, i32
  }
  func.func @transform_3(%arg0: i32) -> (i32, i32, i32) {
    %c0_i32 = arith.constant 0 : i32
    %c0_i32_0 = arith.constant 0 : i32
    %c0_i32_1 = arith.constant 0 : i32
    return %arg0, %c0_i32, %c0_i32_0 : i32, i32, i32
  }
  func.func @transform_4(%arg0: i32) -> (i32, i32, i32) {
    %c0_i32 = arith.constant 0 : i32
    %c0_i32_0 = arith.constant 0 : i32
    %c0_i32_1 = arith.constant 0 : i32
    return %arg0, %c0_i32, %c0_i32_0 : i32, i32, i32
  }
  func.func @transform_5(%arg0: i32) -> (i32, i32, i32) {
    %c0_i32 = arith.constant 0 : i32
    %c0_i32_0 = arith.constant 0 : i32
    %c0_i32_1 = arith.constant 0 : i32
    return %arg0, %c0_i32, %c0_i32_0 : i32, i32, i32
  }
  func.func @transform_6(%arg0: i32) -> (i32, i32, i32) {
    %c0_i32 = arith.constant 0 : i32
    %c0_i32_0 = arith.constant 0 : i32
    %c0_i32_1 = arith.constant 0 : i32
    return %arg0, %c0_i32, %c0_i32_0 : i32, i32, i32
  }
  func.func @transform_7(%arg0: i32) -> (i32, i32) {
    %c0_i32 = arith.constant 0 : i32
    %c0_i32_0 = arith.constant 0 : i32
    %c0_i32_1 = arith.constant 0 : i32
    return %c0_i32, %c0_i32_0 : i32, i32
  }
  func.func @transform_8(%arg0: i32) -> (i32, i32) {
    %c0_i32 = arith.constant 0 : i32
    %c0_i32_0 = arith.constant 0 : i32
    %c0_i32_1 = arith.constant 0 : i32
    return %c0_i32, %c0_i32_0 : i32, i32
  }
  func.func @transform_9(%arg0: i32) -> (i32, i32) {
    %c0_i32 = arith.constant 0 : i32
    %c0_i32_0 = arith.constant 0 : i32
    %c0_i32_1 = arith.constant 0 : i32
    return %c0_i32, %c0_i32_0 : i32, i32
  }
  func.func @transform_10(%arg0: i32) -> (i32, i32) {
    %c0_i32 = arith.constant 0 : i32
    %c0_i32_0 = arith.constant 0 : i32
    %c0_i32_1 = arith.constant 0 : i32
    return %c0_i32, %c0_i32_0 : i32, i32
  }
  func.func @transform_11(%arg0: i32) -> (i32, i32) {
    %c0_i32 = arith.constant 0 : i32
    %c0_i32_0 = arith.constant 0 : i32
    %c0_i32_1 = arith.constant 0 : i32
    return %c0_i32, %c0_i32_0 : i32, i32
  }
  func.func @transform_12(%arg0: i32) -> (i32, i32) {
    %c0_i32 = arith.constant 0 : i32
    %c0_i32_0 = arith.constant 0 : i32
    %c0_i32_1 = arith.constant 0 : i32
    return %c0_i32, %c0_i32_0 : i32, i32
  }
  func.func @transform_13(%arg0: i32) -> (i32, i32, i32) {
    %c0_i32 = arith.constant 0 : i32
    %c0_i32_0 = arith.constant 0 : i32
    %c0_i32_1 = arith.constant 0 : i32
    %c0_i32_2 = arith.constant 0 : i32
    return %c0_i32, %c0_i32_0, %c0_i32_1 : i32, i32, i32
  }
  func.func @transform_14(%arg0: i32) -> (i32, i32) {
    %c0_i32 = arith.constant 0 : i32
    %c0_i32_0 = arith.constant 0 : i32
    %c0_i32_1 = arith.constant 0 : i32
    return %c0_i32, %c0_i32_0 : i32, i32
  }
  func.func @transform_15(%arg0: i32) -> (i32, i32) {
    %c0_i32 = arith.constant 0 : i32
    %c0_i32_0 = arith.constant 0 : i32
    %c0_i32_1 = arith.constant 0 : i32
    return %c0_i32, %c0_i32_0 : i32, i32
  }
  func.func @transform_16(%arg0: i32) -> (i32, i32) {
    %c0_i32 = arith.constant 0 : i32
    %c0_i32_0 = arith.constant 0 : i32
    %c0_i32_1 = arith.constant 0 : i32
    return %c0_i32, %c0_i32_0 : i32, i32
  }
  func.func @transform_17(%arg0: i32) -> (i32, i32, i32) {
    %c0_i32 = arith.constant 0 : i32
    %c0_i32_0 = arith.constant 0 : i32
    %c0_i32_1 = arith.constant 0 : i32
    return %arg0, %c0_i32, %c0_i32_0 : i32, i32, i32
  }
}

</mosaic_0001>

<llo_original>
// kernel: tpu_custom_call.1
$region0: #{tpu_custom_call.1}
  #allocation0 [shape = 'u32[]', space=smem, size = 0x4, offset = 0x4, fixed_abs, tag = 'smem constant byte address 0x4 - core index']
  #allocation1 [shape = 'u32[144,128]{1,0:T(1,128)}', space=vmem, size = 0x12000, scoped, tag = 'internal scratch']
  %s0 = inlined_call_operand.vmem [shape: f32[3], index: 0, kind: input, shape index: {}]
  %s1 = inlined_call_operand.vmem [shape: s32[4], index: 1, kind: input, shape index: {}]
  %s2 = inlined_call_operand.vmem [shape: bf16[4,256,16], index: 2, kind: input, shape index: {}]
  %s3 = inlined_call_operand.vmem [shape: bf16[4,256,256], index: 3, kind: input, shape index: {}]
  %s4 = inlined_call_operand.hbm [shape: bf16[4,256,512], index: 4, kind: input, shape index: {}]
  %s5 = inlined_call_operand.vmem [shape: bf16[4,512,16], index: 5, kind: input, shape index: {}]
  %s6 = inlined_call_operand.vmem [shape: bf16[4,8,256], index: 6, kind: input, shape index: {}]
  %s7 = inlined_call_operand.vmem [shape: bf16[16,128], index: 7, kind: input, shape index: {}]
  %s8 = inlined_call_operand.vmem [shape: f32[1,128], index: 8, kind: input, shape index: {}]
  %s9 = inlined_call_operand.vmem [shape: bf16[16,128], index: 9, kind: input, shape index: {}]
  %s10 = inlined_call_operand.vmem [shape: f32[1,128], index: 10, kind: input, shape index: {}]
  %s11 = inlined_call_operand.vmem [shape: f32[3,128], index: 11, kind: input, shape index: {}]
  %s12 = inlined_call_operand.vmem [shape: f32[3,128], index: 12, kind: input, shape index: {}]
  %s13 = inlined_call_operand.vmem [shape: bf16[3,128,128], index: 13, kind: input, shape index: {}]
  %s14 = inlined_call_operand.vmem [shape: f32[3,128], index: 14, kind: input, shape index: {}]
  %s15 = inlined_call_operand.vmem [shape: bf16[128,128], index: 15, kind: input, shape index: {}]
  %s16 = inlined_call_operand.vmem [shape: f32[1,128], index: 16, kind: input, shape index: {}]
  %s17 = inlined_call_operand.hbm [shape: f32[4,8,128], index: 17, kind: output, shape index: {}]
  %s18 = sld [smem:[#allocation0]]
  $region113: #{tpu_custom_call.1} parent=0
    _
  %s20 = ssub.s32 1, %s18
  %s21 = scalar_select 0, %s20, %s18
  $region1: #{tpu_custom_call.1} parent=0
    #allocation2 [shape = 'u8[512]{0}', space=smem, size = 0x200, scoped, tag = 'input window, operand 0, single buffered']
    #allocation3 [shape = 's32[2]{0}', space=sflag, size = 0x8, scoped, tag = 'scoped memory for tpu_custom_call.1']
    #allocation4 [shape = 's32[2]{0}', space=sflag, size = 0x8, scoped, tag = 'scoped memory for tpu_custom_call.1']
    #allocation5 [shape = 's32[2]{0}', space=sflag, size = 0x8, scoped, tag = 'scoped memory for tpu_custom_call.1']
    #allocation6 [shape = 'u8[512]{0}', space=smem, size = 0x200, scoped, tag = 'input window, operand 1, single buffered']
    #allocation7 [shape = 's32[1]{0}', space=sflag, size = 0x4, scoped, tag = 'scoped memory for tpu_custom_call.1']
    #allocation8 [shape = 'u8[524288]{0}', space=vmem, size = 0x80000, scoped, tag = 'input window, operand 4']
    #allocation9 [shape = 'u8[8192]{0}', space=vmem, size = 0x2000, scoped, tag = 'output window, operand 0']
    %22 = vsyncpa [#allocation5], 0
    %23 = vsyncpa [#allocation7], 0
    %24 = vsyncpa [#allocation3], 0
    %s25 = scalar_lea.sflag [#allocation3], 1
    %26 = vsyncpa %s25, 0
    %27 = vsyncpa [#allocation4], 0
    %s28 = scalar_lea.sflag [#allocation4], 1
    %29 = vsyncpa %s28, 0
    loop: start=0, step=1, limit=6
    $region2: #{tpu_custom_call.1} parent=1 // loop_pre_header
      _
    $region3: #{tpu_custom_call.1} parent=1 // loop_header
      %s31 = sphi 0, %s35
      %p32 = scmp.ge.s32.totalorder %s31, 6
      %s39 = sphi 0, %s39
      %s41 = sphi 0, %s39
      %s42 = sphi 0, %s41
      %s56 = sphi 0, %s42
      %s60 = sphi 0, %s60
      %s62 = sphi 0, %s60
      %s63 = sphi 0, %s62
      %s77 = sphi 0, %s63
      %s83 = sphi 0, %s85
      %s86 = sphi 0, %s83
      %s87 = sphi 0, %s86
      %s103 = sphi 0, %s87
      %s109 = sphi 0, %s111
      %s112 = sphi 0, %s109
      %s113 = sphi 0, %s112
      %s129 = sphi 0, %s113
      %s135 = sphi 0, %s137
      %s138 = sphi 0, %s135
      %s139 = sphi 0, %s138
      %s155 = sphi 0, %s139
      %s161 = sphi 0, %s163
      %s164 = sphi 0, %s161
      %s165 = sphi 0, %s164
      %s181 = sphi 0, %s165
      %s187 = sphi 0, %s189
      %s190 = sphi 0, %s187
      %s191 = sphi 0, %s190
      %s207 = sphi 0, %s191
      %s211 = sphi 0, %s211
      %s213 = sphi 0, %s211
      %s214 = sphi 0, %s213
      %s228 = sphi 0, %s214
      %s232 = sphi 0, %s232
      %s234 = sphi 0, %s232
      %s235 = sphi 0, %s234
      %s249 = sphi 0, %s235
      %s253 = sphi 0, %s253
      %s255 = sphi 0, %s253
      %s256 = sphi 0, %s255
      %s270 = sphi 0, %s256
      %s274 = sphi 0, %s274
      %s276 = sphi 0, %s274
      %s277 = sphi 0, %s276
      %s291 = sphi 0, %s277
      %s295 = sphi 0, %s295
      %s297 = sphi 0, %s295
      %s298 = sphi 0, %s297
      %s312 = sphi 0, %s298
      %s316 = sphi 0, %s316
      %s318 = sphi 0, %s316
      %s319 = sphi 0, %s318
      %s333 = sphi 0, %s319
      %s337 = sphi 0, %s337
      %s339 = sphi 0, %s337
      %s340 = sphi 0, %s339
      %s354 = sphi 0, %s340
      %s358 = sphi 0, %s358
      %s360 = sphi 0, %s358
      %s361 = sphi 0, %s360
      %s375 = sphi 0, %s361
      %s379 = sphi 0, %s379
      %s381 = sphi 0, %s379
      %s382 = sphi 0, %s381
      %s396 = sphi 0, %s382
      %s400 = sphi 0, %s400
      %s402 = sphi 0, %s400
      %s403 = sphi 0, %s402
      %s417 = sphi 0, %s403
      %s423 = sphi 0, %s425
      %s426 = sphi 0, %s423
      %s427 = sphi 0, %s426
      %s443 = sphi 0, %s427
    $region4: #{tpu_custom_call.1} parent=1 // loop_header_branch
      %34 = sbr.rel (%p32) target = $region8
    $region5: #{tpu_custom_call.1} parent=1 // loop_body
      %s36 = ssub.s32 %s31, 1
      %s37 = ssub.s32 %s31, 2
      %s38 = sadd.s32 %s31, 1
      %s40 = sadd.s32 %s39, 1
      %p43 = scmp.eq.s32.totalorder %s31, 3
      %p44 = scmp.ne.s32.totalorder %s39, %s41
      %p45 = scmp.eq.s32.totalorder %s31, 0
      %p46 = por %p44, %p45
      %p47 = scmp.ne.s32.totalorder %s39, %s41
      %p48 = scmp.eq.s32.totalorder %s36, 3
      %p49 = por %p47, %p48
      %p50 = scmp.ne.s32.totalorder %s41, %s42
      %p51 = scmp.eq.s32.totalorder %s36, 0
      %p52 = por %p50, %p51
      %p53 = scmp.ne.s32.totalorder %s41, %s42
      %p54 = scmp.eq.s32.totalorder %s37, 3
      %p55 = por %p53, %p54
      %p57 = scmp.ne.s32.totalorder %s42, %s56
      %p58 = scmp.eq.s32.totalorder %s37, 0
      %p59 = por %p57, %p58
      %s61 = sadd.s32 %s60, 1
      %p64 = scmp.eq.s32.totalorder %s31, 3
      %p65 = scmp.ne.s32.totalorder %s60, %s62
      %p66 = scmp.eq.s32.totalorder %s31, 0
      %p67 = por %p65, %p66
      %p68 = scmp.ne.s32.totalorder %s60, %s62
      %p69 = scmp.eq.s32.totalorder %s36, 3
      %p70 = por %p68, %p69
      %p71 = scmp.ne.s32.totalorder %s62, %s63
      %p72 = scmp.eq.s32.totalorder %s36, 0
      %p73 = por %p71, %p72
      %p74 = scmp.ne.s32.totalorder %s62, %s63
      %p75 = scmp.eq.s32.totalorder %s37, 3
      %p76 = por %p74, %p75
      %p78 = scmp.ne.s32.totalorder %s63, %s77
      %p79 = scmp.eq.s32.totalorder %s37, 0
      %p80 = por %p78, %p79
      %s81 = ssub.s32 %s31, %s38
      %p82 = scmp.eq.s32.totalorder %s81, 0
      %s84 = sadd.s32 %s83, 1
      %s85 = scalar_select %p82, %s83, %s84
      %p88 = pneg %p82
      %p89 = scmp.eq.s32.totalorder %s31, 3
      %p90 = por %p88, %p89
      %p91 = scmp.ne.s32.totalorder %s83, %s86
      %p92 = scmp.eq.s32.totalorder %s31, 0
      %p93 = por %p91, %p92
      %p94 = scmp.ne.s32.totalorder %s83, %s86
      %p95 = scmp.eq.s32.totalorder %s36, 3
      %p96 = por %p94, %p95
      %p97 = scmp.ne.s32.totalorder %s86, %s87
      %p98 = scmp.eq.s32.totalorder %s36, 0
      %p99 = por %p97, %p98
      %p100 = scmp.ne.s32.totalorder %s86, %s87
      %p101 = scmp.eq.s32.totalorder %s37, 3
      %p102 = por %p100, %p101
      %p104 = scmp.ne.s32.totalorder %s87, %s103
      %p105 = scmp.eq.s32.totalorder %s37, 0
      %p106 = por %p104, %p105
      %s107 = ssub.s32 %s31, %s38
      %p108 = scmp.eq.s32.totalorder %s107, 0
      %s110 = sadd.s32 %s109, 1
      %s111 = scalar_select %p108, %s109, %s110
      %p114 = pneg %p108
      %p115 = scmp.eq.s32.totalorder %s31, 3
      %p116 = por %p114, %p115
      %p117 = scmp.ne.s32.totalorder %s109, %s112
      %p118 = scmp.eq.s32.totalorder %s31, 0
      %p119 = por %p117, %p118
      %p120 = scmp.ne.s32.totalorder %s109, %s112
      %p121 = scmp.eq.s32.totalorder %s36, 3
      %p122 = por %p120, %p121
      %p123 = scmp.ne.s32.totalorder %s112, %s113
      %p124 = scmp.eq.s32.totalorder %s36, 0
      %p125 = por %p123, %p124
      %p126 = scmp.ne.s32.totalorder %s112, %s113
      %p127 = scmp.eq.s32.totalorder %s37, 3
      %p128 = por %p126, %p127
      %p130 = scmp.ne.s32.totalorder %s113, %s129
      %p131 = scmp.eq.s32.totalorder %s37, 0
      %p132 = por %p130, %p131
      %s133 = ssub.s32 %s31, %s38
      %p134 = scmp.eq.s32.totalorder %s133, 0
      %s136 = sadd.s32 %s135, 1
      %s137 = scalar_select %p134, %s135, %s136
      %p140 = pneg %p134
      %p141 = scmp.eq.s32.totalorder %s31, 3
      %p142 = por %p140, %p141
      %p143 = scmp.ne.s32.totalorder %s135, %s138
      %p144 = scmp.eq.s32.totalorder %s31, 0
      %p145 = por %p143, %p144
      %p146 = scmp.ne.s32.totalorder %s135, %s138
      %p147 = scmp.eq.s32.totalorder %s36, 3
      %p148 = por %p146, %p147
      %p149 = scmp.ne.s32.totalorder %s138, %s139
      %p150 = scmp.eq.s32.totalorder %s36, 0
      %p151 = por %p149, %p150
      %p152 = scmp.ne.s32.totalorder %s138, %s139
      %p153 = scmp.eq.s32.totalorder %s37, 3
      %p154 = por %p152, %p153
      %p156 = scmp.ne.s32.totalorder %s139, %s155
      %p157 = scmp.eq.s32.totalorder %s37, 0
      %p158 = por %p156, %p157
      %s159 = ssub.s32 %s31, %s38
      %p160 = scmp.eq.s32.totalorder %s159, 0
      %s162 = sadd.s32 %s161, 1
      %s163 = scalar_select %p160, %s161, %s162
      %p166 = pneg %p160
      %p167 = scmp.eq.s32.totalorder %s31, 3
      %p168 = por %p166, %p167
      %p169 = scmp.ne.s32.totalorder %s161, %s164
      %p170 = scmp.eq.s32.totalorder %s31, 0
      %p171 = por %p169, %p170
      %p172 = scmp.ne.s32.totalorder %s161, %s164
      %p173 = scmp.eq.s32.totalorder %s36, 3
      %p174 = por %p172, %p173
      %p175 = scmp.ne.s32.totalorder %s164, %s165
      %p176 = scmp.eq.s32.totalorder %s36, 0
      %p177 = por %p175, %p176
      %p178 = scmp.ne.s32.totalorder %s164, %s165
      %p179 = scmp.eq.s32.totalorder %s37, 3
      %p180 = por %p178, %p179
      %p182 = scmp.ne.s32.totalorder %s165, %s181
      %p183 = scmp.eq.s32.totalorder %s37, 0
      %p184 = por %p182, %p183
      %s185 = ssub.s32 %s31, %s38
      %p186 = scmp.eq.s32.totalorder %s185, 0
      %s188 = sadd.s32 %s187, 1
      %s189 = scalar_select %p186, %s187, %s188
      %p192 = pneg %p186
      %p193 = scmp.eq.s32.totalorder %s31, 3
      %p194 = por %p192, %p193
      %p195 = scmp.ne.s32.totalorder %s187, %s190
      %p196 = scmp.eq.s32.totalorder %s31, 0
      %p197 = por %p195, %p196
      %p198 = scmp.ne.s32.totalorder %s187, %s190
      %p199 = scmp.eq.s32.totalorder %s36, 3
      %p200 = por %p198, %p199
      %p201 = scmp.ne.s32.totalorder %s190, %s191
      %p202 = scmp.eq.s32.totalorder %s36, 0
      %p203 = por %p201, %p202
      %p204 = scmp.ne.s32.totalorder %s190, %s191
      %p205 = scmp.eq.s32.totalorder %s37, 3
      %p206 = por %p204, %p205
      %p208 = scmp.ne.s32.totalorder %s191, %s207
      %p209 = scmp.eq.s32.totalorder %s37, 0
      %p210 = por %p208, %p209
      %s212 = sadd.s32 %s211, 1
      %p215 = scmp.eq.s32.totalorder %s31, 3
      %p216 = scmp.ne.s32.totalorder %s211, %s213
      %p217 = scmp.eq.s32.totalorder %s31, 0
      %p218 = por %p216, %p217
      %p219 = scmp.ne.s32.totalorder %s211, %s213
      %p220 = scmp.eq.s32.totalorder %s36, 3
      %p221 = por %p219, %p220
      %p222 = scmp.ne.s32.totalorder %s213, %s214
      %p223 = scmp.eq.s32.totalorder %s36, 0
      %p224 = por %p222, %p223
      %p225 = scmp.ne.s32.totalorder %s213, %s214
      %p226 = scmp.eq.s32.totalorder %s37, 3
      %p227 = por %p225, %p226
      %p229 = scmp.ne.s32.totalorder %s214, %s228
      %p230 = scmp.eq.s32.totalorder %s37, 0
      %p231 = por %p229, %p230
      %s233 = sadd.s32 %s232, 1
      %p236 = scmp.eq.s32.totalorder %s31, 3
      %p237 = scmp.ne.s32.totalorder %s232, %s234
      %p238 = scmp.eq.s32.totalorder %s31, 0
      %p239 = por %p237, %p238
      %p240 = scmp.ne.s32.totalorder %s232, %s234
      %p241 = scmp.eq.s32.totalorder %s36, 3
      %p242 = por %p240, %p241
      %p243 = scmp.ne.s32.totalorder %s234, %s235
      %p244 = scmp.eq.s32.totalorder %s36, 0
      %p245 = por %p243, %p244
      %p246 = scmp.ne.s32.totalorder %s234, %s235
      %p247 = scmp.eq.s32.totalorder %s37, 3
      %p248 = por %p246, %p247
      %p250 = scmp.ne.s32.totalorder %s235, %s249
      %p251 = scmp.eq.s32.totalorder %s37, 0
      %p252 = por %p250, %p251
      %s254 = sadd.s32 %s253, 1
      %p257 = scmp.eq.s32.totalorder %s31, 3
      %p258 = scmp.ne.s32.totalorder %s253, %s255
      %p259 = scmp.eq.s32.totalorder %s31, 0
      %p260 = por %p258, %p259
      %p261 = scmp.ne.s32.totalorder %s253, %s255
      %p262 = scmp.eq.s32.totalorder %s36, 3
      %p263 = por %p261, %p262
      %p264 = scmp.ne.s32.totalorder %s255, %s256
      %p265 = scmp.eq.s32.totalorder %s36, 0
      %p266 = por %p264, %p265
      %p267 = scmp.ne.s32.totalorder %s255, %s256
      %p268 = scmp.eq.s32.totalorder %s37, 3
      %p269 = por %p267, %p268
      %p271 = scmp.ne.s32.totalorder %s256, %s270
      %p272 = scmp.eq.s32.totalorder %s37, 0
      %p273 = por %p271, %p272
      %s275 = sadd.s32 %s274, 1
      %p278 = scmp.eq.s32.totalorder %s31, 3
      %p279 = scmp.ne.s32.totalorder %s274, %s276
      %p280 = scmp.eq.s32.totalorder %s31, 0
      %p281 = por %p279, %p280
      %p282 = scmp.ne.s32.totalorder %s274, %s276
      %p283 = scmp.eq.s32.totalorder %s36, 3
      %p284 = por %p282, %p283
      %p285 = scmp.ne.s32.totalorder %s276, %s277
      %p286 = scmp.eq.s32.totalorder %s36, 0
      %p287 = por %p285, %p286
      %p288 = scmp.ne.s32.totalorder %s276, %s277
      %p289 = scmp.eq.s32.totalorder %s37, 3
      %p290 = por %p288, %p289
      %p292 = scmp.ne.s32.totalorder %s277, %s291
      %p293 = scmp.eq.s32.totalorder %s37, 0
      %p294 = por %p292, %p293
      %s296 = sadd.s32 %s295, 1
      %p299 = scmp.eq.s32.totalorder %s31, 3
      %p300 = scmp.ne.s32.totalorder %s295, %s297
      %p301 = scmp.eq.s32.totalorder %s31, 0
      %p302 = por %p300, %p301
      %p303 = scmp.ne.s32.totalorder %s295, %s297
      %p304 = scmp.eq.s32.totalorder %s36, 3
      %p305 = por %p303, %p304
      %p306 = scmp.ne.s32.totalorder %s297, %s298
      %p307 = scmp.eq.s32.totalorder %s36, 0
      %p308 = por %p306, %p307
      %p309 = scmp.ne.s32.totalorder %s297, %s298
      %p310 = scmp.eq.s32.totalorder %s37, 3
      %p311 = por %p309, %p310
      %p313 = scmp.ne.s32.totalorder %s298, %s312
      %p314 = scmp.eq.s32.totalorder %s37, 0
      %p315 = por %p313, %p314
      %s317 = sadd.s32 %s316, 1
      %p320 = scmp.eq.s32.totalorder %s31, 3
      %p321 = scmp.ne.s32.totalorder %s316, %s318
      %p322 = scmp.eq.s32.totalorder %s31, 0
      %p323 = por %p321, %p322
      %p324 = scmp.ne.s32.totalorder %s316, %s318
      %p325 = scmp.eq.s32.totalorder %s36, 3
      %p326 = por %p324, %p325
      %p327 = scmp.ne.s32.totalorder %s318, %s319
      %p328 = scmp.eq.s32.totalorder %s36, 0
      %p329 = por %p327, %p328
      %p330 = scmp.ne.s32.totalorder %s318, %s319
      %p331 = scmp.eq.s32.totalorder %s37, 3
      %p332 = por %p330, %p331
      %p334 = scmp.ne.s32.totalorder %s319, %s333
      %p335 = scmp.eq.s32.totalorder %s37, 0
      %p336 = por %p334, %p335
      %s338 = sadd.s32 %s337, 1
      %p341 = scmp.eq.s32.totalorder %s31, 3
      %p342 = scmp.ne.s32.totalorder %s337, %s339
      %p343 = scmp.eq.s32.totalorder %s31, 0
      %p344 = por %p342, %p343
      %p345 = scmp.ne.s32.totalorder %s337, %s339
      %p346 = scmp.eq.s32.totalorder %s36, 3
      %p347 = por %p345, %p346
      %p348 = scmp.ne.s32.totalorder %s339, %s340
      %p349 = scmp.eq.s32.totalorder %s36, 0
      %p350 = por %p348, %p349
      %p351 = scmp.ne.s32.totalorder %s339, %s340
      %p352 = scmp.eq.s32.totalorder %s37, 3
      %p353 = por %p351, %p352
      %p355 = scmp.ne.s32.totalorder %s340, %s354
      %p356 = scmp.eq.s32.totalorder %s37, 0
      %p357 = por %p355, %p356
      %s359 = sadd.s32 %s358, 1
      %p362 = scmp.eq.s32.totalorder %s31, 3
      %p363 = scmp.ne.s32.totalorder %s358, %s360
      %p364 = scmp.eq.s32.totalorder %s31, 0
      %p365 = por %p363, %p364
      %p366 = scmp.ne.s32.totalorder %s358, %s360
      %p367 = scmp.eq.s32.totalorder %s36, 3
      %p368 = por %p366, %p367
      %p369 = scmp.ne.s32.totalorder %s360, %s361
      %p370 = scmp.eq.s32.totalorder %s36, 0
      %p371 = por %p369, %p370
      %p372 = scmp.ne.s32.totalorder %s360, %s361
      %p373 = scmp.eq.s32.totalorder %s37, 3
      %p374 = por %p372, %p373
      %p376 = scmp.ne.s32.totalorder %s361, %s375
      %p377 = scmp.eq.s32.totalorder %s37, 0
      %p378 = por %p376, %p377
      %s380 = sadd.s32 %s379, 1
      %p383 = scmp.eq.s32.totalorder %s31, 3
      %p384 = scmp.ne.s32.totalorder %s379, %s381
      %p385 = scmp.eq.s32.totalorder %s31, 0
      %p386 = por %p384, %p385
      %p387 = scmp.ne.s32.totalorder %s379, %s381
      %p388 = scmp.eq.s32.totalorder %s36, 3
      %p389 = por %p387, %p388
      %p390 = scmp.ne.s32.totalorder %s381, %s382
      %p391 = scmp.eq.s32.totalorder %s36, 0
      %p392 = por %p390, %p391
      %p393 = scmp.ne.s32.totalorder %s381, %s382
      %p394 = scmp.eq.s32.totalorder %s37, 3
      %p395 = por %p393, %p394
      %p397 = scmp.ne.s32.totalorder %s382, %s396
      %p398 = scmp.eq.s32.totalorder %s37, 0
      %p399 = por %p397, %p398
      %s401 = sadd.s32 %s400, 1
      %p404 = scmp.eq.s32.totalorder %s31, 3
      %p405 = scmp.ne.s32.totalorder %s400, %s402
      %p406 = scmp.eq.s32.totalorder %s31, 0
      %p407 = por %p405, %p406
      %p408 = scmp.ne.s32.totalorder %s400, %s402
      %p409 = scmp.eq.s32.totalorder %s36, 3
      %p410 = por %p408, %p409
      %p411 = scmp.ne.s32.totalorder %s402, %s403
      %p412 = scmp.eq.s32.totalorder %s36, 0
      %p413 = por %p411, %p412
      %p414 = scmp.ne.s32.totalorder %s402, %s403
      %p415 = scmp.eq.s32.totalorder %s37, 3
      %p416 = por %p414, %p415
      %p418 = scmp.ne.s32.totalorder %s403, %s417
      %p419 = scmp.eq.s32.totalorder %s37, 0
      %p420 = por %p418, %p419
      %s421 = ssub.s32 %s31, %s38
      %p422 = scmp.eq.s32.totalorder %s421, 0
      %s424 = sadd.s32 %s423, 1
      %s425 = scalar_select %p422, %s423, %s424
      %p428 = pneg %p422
      %p429 = scmp.eq.s32.totalorder %s31, 3
      %p430 = por %p428, %p429
      %p431 = scmp.ne.s32.totalorder %s423, %s426
      %p432 = scmp.eq.s32.totalorder %s31, 0
      %p433 = por %p431, %p432
      %p434 = scmp.ne.s32.totalorder %s423, %s426
      %p435 = scmp.eq.s32.totalorder %s36, 3
      %p436 = por %p434, %p435
      %p437 = scmp.ne.s32.totalorder %s426, %s427
      %p438 = scmp.eq.s32.totalorder %s36, 0
      %p439 = por %p437, %p438
      %p440 = scmp.ne.s32.totalorder %s426, %s427
      %p441 = scmp.eq.s32.totalorder %s37, 3
      %p442 = por %p440, %p441
      %p444 = scmp.ne.s32.totalorder %s427, %s443
      %p445 = scmp.eq.s32.totalorder %s37, 0
      %p446 = por %p444, %p445
      %p447 = scmp.le.s32.totalorder 1, %s31
      %p448 = scmp.lt.s32.totalorder %s31, 5
      %p449 = pnand %p447, %p448
      %p450 = pneg %p449
      // Predicated region
      $region9: #{tpu_custom_call.1} parent=5 // pred_check
        _
      $region10: #{tpu_custom_call.1} parent=5 // pred_check_branch
        %452 = sbr.rel (%p449) target = $region12
      $region11: #{tpu_custom_call.1} parent=5 // pred_region
        %s453 = ssub.s32 %s31, 1
        // Predicated region
        $region13: #{tpu_custom_call.1} parent=11 // pred_check
          %p454 = pneg %p52
        $region14: #{tpu_custom_call.1} parent=11 // pred_check_branch
          %456 = sbr.rel (%p454) target = $region16
        $region15: #{tpu_custom_call.1} parent=11 // pred_region
          %s458 = ssub.s32 16, 16
          %459 = vsyncadd [#allocation5], %s458
          %s461 = sshll.u32 %s0, 4
          %s462 = int_to_ptr.vmem [resolvable:$true] %s461
          %464 = dma.vmem_to_smem %s462, 16, [#allocation2], [#allocation5]
        $region16: #{tpu_custom_call.1} parent=11 // pred_fallthru
          _
        // Predicated region
        $region17: #{tpu_custom_call.1} parent=11 // pred_check
          %p465 = pneg %p73
        $region18: #{tpu_custom_call.1} parent=11 // pred_check_branch
          %467 = sbr.rel (%p465) target = $region20
        $region19: #{tpu_custom_call.1} parent=11 // pred_region
          %s469 = ssub.s32 16, 16
          %470 = vsyncadd [#allocation7], %s469
          %s472 = sshll.u32 %s1, 4
          %s473 = int_to_ptr.vmem [resolvable:$true] %s472
          %475 = dma.vmem_to_smem %s473, 16, [#allocation6], [#allocation7]
        $region20: #{tpu_custom_call.1} parent=11 // pred_fallthru
          _
        // Predicated region
        $region21: #{tpu_custom_call.1} parent=11 // pred_check
          %p476 = pneg %p224
        $region22: #{tpu_custom_call.1} parent=11 // pred_check_branch
          %478 = sbr.rel (%p476) target = $region24
        $region23: #{tpu_custom_call.1} parent=11 // pred_region
          _
        $region24: #{tpu_custom_call.1} parent=11 // pred_fallthru
          _
        // Predicated region
        $region25: #{tpu_custom_call.1} parent=11 // pred_check
          %p479 = pneg %p245
        $region26: #{tpu_custom_call.1} parent=11 // pred_check_branch
          %481 = sbr.rel (%p479) target = $region28
        $region27: #{tpu_custom_call.1} parent=11 // pred_region
          _
        $region28: #{tpu_custom_call.1} parent=11 // pred_fallthru
          _
        // Predicated region
        $region29: #{tpu_custom_call.1} parent=11 // pred_check
          %p482 = pneg %p266
        $region30: #{tpu_custom_call.1} parent=11 // pred_check_branch
          %484 = sbr.rel (%p482) target = $region32
        $region31: #{tpu_custom_call.1} parent=11 // pred_region
          _
        $region32: #{tpu_custom_call.1} parent=11 // pred_fallthru
          _
        // Predicated region
        $region33: #{tpu_custom_call.1} parent=11 // pred_check
          %p485 = pneg %p287
        $region34: #{tpu_custom_call.1} parent=11 // pred_check_branch
          %487 = sbr.rel (%p485) target = $region36
        $region35: #{tpu_custom_call.1} parent=11 // pred_region
          _
        $region36: #{tpu_custom_call.1} parent=11 // pred_fallthru
          _
        // Predicated region
        $region37: #{tpu_custom_call.1} parent=11 // pred_check
          %p488 = pneg %p308
        $region38: #{tpu_custom_call.1} parent=11 // pred_check_branch
          %490 = sbr.rel (%p488) target = $region40
        $region39: #{tpu_custom_call.1} parent=11 // pred_region
          _
        $region40: #{tpu_custom_call.1} parent=11 // pred_fallthru
          _
        // Predicated region
        $region41: #{tpu_custom_call.1} parent=11 // pred_check
          %p491 = pneg %p329
        $region42: #{tpu_custom_call.1} parent=11 // pred_check_branch
          %493 = sbr.rel (%p491) target = $region44
        $region43: #{tpu_custom_call.1} parent=11 // pred_region
          _
        $region44: #{tpu_custom_call.1} parent=11 // pred_fallthru
          _
        // Predicated region
        $region45: #{tpu_custom_call.1} parent=11 // pred_check
          %p494 = pneg %p350
        $region46: #{tpu_custom_call.1} parent=11 // pred_check_branch
          %496 = sbr.rel (%p494) target = $region48
        $region47: #{tpu_custom_call.1} parent=11 // pred_region
          _
        $region48: #{tpu_custom_call.1} parent=11 // pred_fallthru
          _
        // Predicated region
        $region49: #{tpu_custom_call.1} parent=11 // pred_check
          %p497 = pneg %p371
        $region50: #{tpu_custom_call.1} parent=11 // pred_check_branch
          %499 = sbr.rel (%p497) target = $region52
        $region51: #{tpu_custom_call.1} parent=11 // pred_region
          _
        $region52: #{tpu_custom_call.1} parent=11 // pred_fallthru
          _
        // Predicated region
        $region53: #{tpu_custom_call.1} parent=11 // pred_check
          %p500 = pneg %p392
        $region54: #{tpu_custom_call.1} parent=11 // pred_check_branch
          %502 = sbr.rel (%p500) target = $region56
        $region55: #{tpu_custom_call.1} parent=11 // pred_region
          _
        $region56: #{tpu_custom_call.1} parent=11 // pred_fallthru
          _
        // Predicated region
        $region57: #{tpu_custom_call.1} parent=11 // pred_check
          %p503 = pneg %p413
        $region58: #{tpu_custom_call.1} parent=11 // pred_check_branch
          %505 = sbr.rel (%p503) target = $region60
        $region59: #{tpu_custom_call.1} parent=11 // pred_region
          _
        $region60: #{tpu_custom_call.1} parent=11 // pred_fallthru
          _
      $region12: #{tpu_custom_call.1} parent=5 // pred_fallthru
        _
      %p506 = scmp.lt.s32.totalorder %s31, 4
      // Predicated region
      $region61: #{tpu_custom_call.1} parent=5 // pred_check
        %p507 = pneg %p506
      $region62: #{tpu_custom_call.1} parent=5 // pred_check_branch
        %509 = sbr.rel (%p507) target = $region64
      $region63: #{tpu_custom_call.1} parent=5 // pred_region
        // Predicated region
        $region65: #{tpu_custom_call.1} parent=63 // pred_check
          %p510 = pneg %p93
        $region66: #{tpu_custom_call.1} parent=63 // pred_check_branch
          %512 = sbr.rel (%p510) target = $region68
        $region67: #{tpu_custom_call.1} parent=63 // pred_region
          %p513 = scmp.lt.s32.totalorder %s31, 3
          %s514 = scalar_select %p513, %s31, 3
          %s515 = smul.addr %s514, 32
          %s516 = smul.addr %s515, 4
          %s517 = scalar_lea.vmem %s2, %s516
        $region68: #{tpu_custom_call.1} parent=63 // pred_fallthru
          _
        // Predicated region
        $region69: #{tpu_custom_call.1} parent=63 // pred_check
          %p518 = pneg %p119
        $region70: #{tpu_custom_call.1} parent=63 // pred_check_branch
          %520 = sbr.rel (%p518) target = $region72
        $region71: #{tpu_custom_call.1} parent=63 // pred_region
          %p521 = scmp.lt.s32.totalorder %s31, 3
          %s522 = scalar_select %p521, %s31, 3
          %s523 = smul.addr %s522, 64
          %s524 = smul.addr %s523, 4
          %s525 = scalar_lea.vmem %s3, %s524
        $region72: #{tpu_custom_call.1} parent=63 // pred_fallthru
          _
        // Predicated region
        $region73: #{tpu_custom_call.1} parent=63 // pred_check
          %p526 = pneg %p145
        $region74: #{tpu_custom_call.1} parent=63 // pred_check_branch
          %528 = sbr.rel (%p526) target = $region76
        $region75: #{tpu_custom_call.1} parent=63 // pred_region
          %s529 = sand.u32 %s135, 1
          %s530 = scalar_lea.sflag [#allocation3], %s529
          %s531 = sand.u32 %s135, 1
          %s532 = smul.addr %s531, 512
          %s533 = scalar_lea.vmem [#allocation8], %s532
          %s535 = ssub.s32 8192, 8192
          %536 = vsyncadd %s530, %s535
          %s537 = smul.addr %s31, 128
          %s538 = smul.addr %s537, 64
          %s539 = scalar_lea.hbm %s4, %s538
          %s540 = sshll.u32 %s533, 4
          %s541 = int_to_ptr.vmem [resolvable:$true] %s540
          %546 = dma.hbm_to_vmem [thread:$0]  %s539, 8192, %s541, %s530, 256, 256, 16
        $region76: #{tpu_custom_call.1} parent=63 // pred_fallthru
          _
        // Predicated region
        $region77: #{tpu_custom_call.1} parent=63 // pred_check
          %p547 = pneg %p171
        $region78: #{tpu_custom_call.1} parent=63 // pred_check_branch
          %549 = sbr.rel (%p547) target = $region80
        $region79: #{tpu_custom_call.1} parent=63 // pred_region
          %p550 = scmp.lt.s32.totalorder %s31, 3
          %s551 = scalar_select %p550, %s31, 3
          %s552 = smul.addr %s551, 64
          %s553 = smul.addr %s552, 4
          %s554 = scalar_lea.vmem %s5, %s553
        $region80: #{tpu_custom_call.1} parent=63 // pred_fallthru
          _
        // Predicated region
        $region81: #{tpu_custom_call.1} parent=63 // pred_check
          %p555 = pneg %p197
        $region82: #{tpu_custom_call.1} parent=63 // pred_check_branch
          %557 = sbr.rel (%p555) target = $region84
        $region83: #{tpu_custom_call.1} parent=63 // pred_region
          %p558 = scmp.lt.s32.totalorder %s31, 3
          %s559 = scalar_select %p558, %s31, 3
          %s560 = smul.addr %s559, 2
          %s561 = smul.addr %s560, 4
          %s562 = scalar_lea.vmem %s6, %s561
        $region84: #{tpu_custom_call.1} parent=63 // pred_fallthru
          _
      $region64: #{tpu_custom_call.1} parent=5 // pred_fallthru
        _
      %p563 = scmp.le.s32.totalorder 1, %s31
      %p564 = scmp.lt.s32.totalorder %s31, 5
      %p565 = pnand %p563, %p564
      %p566 = pneg %p565
      // Predicated region
      $region85: #{tpu_custom_call.1} parent=5 // pred_check
        _
      $region86: #{tpu_custom_call.1} parent=5 // pred_check_branch
        %568 = sbr.rel (%p565) target = $region88
      $region87: #{tpu_custom_call.1} parent=5 // pred_region
        %s569 = ssub.s32 %s31, 1
        // Predicated region
        $region89: #{tpu_custom_call.1} parent=87 // pred_check
          %p570 = pneg %p52
        $region90: #{tpu_custom_call.1} parent=87 // pred_check_branch
          %572 = sbr.rel (%p570) target = $region92
        $region91: #{tpu_custom_call.1} parent=87 // pred_region
          %573 = dma.done [#allocation5], 16
        $region92: #{tpu_custom_call.1} parent=87 // pred_fallthru
          _
        // Predicated region
        $region93: #{tpu_custom_call.1} parent=87 // pred_check
          %p574 = pneg %p73
        $region94: #{tpu_custom_call.1} parent=87 // pred_check_branch
          %576 = sbr.rel (%p574) target = $region96
        $region95: #{tpu_custom_call.1} parent=87 // pred_region
          %577 = dma.done [#allocation7], 16
        $region96: #{tpu_custom_call.1} parent=87 // pred_fallthru
          _
        %s578 = sand.u32 %s138, 1
        %s579 = scalar_lea.sflag [#allocation3], %s578
        %s580 = sand.u32 %s138, 1
        %s581 = smul.addr %s580, 512
        %s582 = scalar_lea.vmem [#allocation8], %s581
        // Predicated region
        $region97: #{tpu_custom_call.1} parent=87 // pred_check
          %p583 = pneg %p151
        $region98: #{tpu_custom_call.1} parent=87 // pred_check_branch
          %585 = sbr.rel (%p583) target = $region100
        $region99: #{tpu_custom_call.1} parent=87 // pred_region
          %586 = dma.done %s579, 8192
        $region100: #{tpu_custom_call.1} parent=87 // pred_fallthru
          _
        %587 = sfence
        %p588 = pneg %p52
        %p589 = pneg %p49
        %p590 = pneg %p73
        %p591 = pneg %p70
        %p592 = scmp.lt.s32.totalorder %s36, 3
        %s593 = scalar_select %p592, %s36, 3
        %s594 = smul.addr %s593, 32
        %s595 = smul.addr %s594, 4
        %s596 = scalar_lea.vmem %s2, %s595
        %p597 = pneg %p99
        %p598 = pneg %p96
        %p599 = scmp.lt.s32.totalorder %s36, 3
        %s600 = scalar_select %p599, %s36, 3
        %s601 = smul.addr %s600, 64
        %s602 = smul.addr %s601, 4
        %s603 = scalar_lea.vmem %s3, %s602
        %p604 = pneg %p125
        %p605 = pneg %p122
        %s606 = sand.u32 %s138, 1
        %s607 = scalar_lea.sflag [#allocation3], %s606
        %s608 = sand.u32 %s138, 1
        %s609 = smul.addr %s608, 512
        %s610 = scalar_lea.vmem [#allocation8], %s609
        %p611 = pneg %p151
        %p612 = pneg %p148
        %p613 = scmp.lt.s32.totalorder %s36, 3
        %s614 = scalar_select %p613, %s36, 3
        %s615 = smul.addr %s614, 64
        %s616 = smul.addr %s615, 4
        %s617 = scalar_lea.vmem %s5, %s616
        %p618 = pneg %p177
        %p619 = pneg %p174
        %p620 = scmp.lt.s32.totalorder %s36, 3
        %s621 = scalar_select %p620, %s36, 3
        %s622 = smul.addr %s621, 2
        %s623 = smul.addr %s622, 4
        %s624 = scalar_lea.vmem %s6, %s623
        %p625 = pneg %p203
        %p626 = pneg %p200
        %p627 = pneg %p224
        %p628 = pneg %p221
        %p629 = pneg %p245
        %p630 = pneg %p242
        %p631 = pneg %p266
        %p632 = pneg %p263
        %p633 = pneg %p287
        %p634 = pneg %p284
        %p635 = pneg %p308
        %p636 = pneg %p305
        %p637 = pneg %p329
        %p638 = pneg %p326
        %p639 = pneg %p350
        %p640 = pneg %p347
        %p641 = pneg %p371
        %p642 = pneg %p368
        %p643 = pneg %p392
        %p644 = pneg %p389
        %p645 = pneg %p413
        %p646 = pneg %p410
        %p647 = pneg %p439
        %p648 = pneg %p436
        %s649 = sand.u32 %s426, 1
        %s650 = scalar_lea.sflag [#allocation4], %s649
        %s651 = sand.u32 %s426, 1
        %s652 = smul.addr %s651, 8
        %s653 = scalar_lea.vmem [#allocation9], %s652
        %p654 = scmp.lt.s32.totalorder %s36, 3
        %s655 = scalar_select %p654, %s36, 3
        %s656 = smul.addr %s655, 32
        %s657 = smul.addr %s656, 4
        %s658 = scalar_lea.vmem %s2, %s657
        %p659 = scmp.lt.s32.totalorder %s36, 3
        %s660 = scalar_select %p659, %s36, 3
        %s661 = smul.addr %s660, 64
        %s662 = smul.addr %s661, 4
        %s663 = scalar_lea.vmem %s3, %s662
        %p664 = scmp.lt.s32.totalorder %s36, 3
        %s665 = scalar_select %p664, %s36, 3
        %s666 = smul.addr %s665, 64
        %s667 = smul.addr %s666, 4
        %s668 = scalar_lea.vmem %s5, %s667
        %p669 = scmp.lt.s32.totalorder %s36, 3
        %s670 = scalar_select %p669, %s36, 3
        %s671 = smul.addr %s670, 2
        %s672 = smul.addr %s671, 4
        %s673 = scalar_lea.vmem %s6, %s672
        %s675 = sld [smem:[#allocation6 + %s36]]
        %s676 = scvt.s32.f32 %s675
        %s677 = smax.f32 %s676, 1.0
        %v678 = vstv %s677
        %v679 = vrcp.pop %v678
        %s680 = vtos %v679
        %v681 = vlaneseq
        %v682 = vshrl.u32 %v681, 7
        %v683 = vadd.s32 %v682, 8
        %v684 = vadd.s32 %v682, 16
        %v685 = vadd.s32 %v682, 24
        %v686 = vadd.s32 %v682, 32
        %v687 = vadd.s32 %v682, 40
        %v688 = vadd.s32 %v682, 48
        %v689 = vadd.s32 %v682, 56
        %v690 = vadd.s32 %v682, 64
        %v691 = vadd.s32 %v682, 72
        %v692 = vadd.s32 %v682, 80
        %v693 = vadd.s32 %v682, 88
        %v694 = vadd.s32 %v682, 96
        %v695 = vadd.s32 %v682, 104
        %v696 = vadd.s32 %v682, 112
        %v697 = vadd.s32 %v682, 120
        %v698 = vadd.s32 %v682, 128
        %v699 = vadd.s32 %v682, 136
        %v700 = vadd.s32 %v682, 144
        %v701 = vadd.s32 %v682, 152
        %v702 = vadd.s32 %v682, 160
        %v703 = vadd.s32 %v682, 168
        %v704 = vadd.s32 %v682, 176
        %v705 = vadd.s32 %v682, 184
        %v706 = vadd.s32 %v682, 192
        %v707 = vadd.s32 %v682, 200
        %v708 = vadd.s32 %v682, 208
        %v709 = vadd.s32 %v682, 216
        %v710 = vadd.s32 %v682, 224
        %v711 = vadd.s32 %v682, 232
        %v712 = vadd.s32 %v682, 240
        %v713 = vadd.s32 %v682, 248
        %v714 = vstv %s675
        %vm715 = vcmp.lt.s32.totalorder %v682, %v714
        %vm716 = vcmp.lt.s32.totalorder %v683, %v714
        %vm717 = vcmp.lt.s32.totalorder %v684, %v714
        %vm718 = vcmp.lt.s32.totalorder %v685, %v714
        %vm719 = vcmp.lt.s32.totalorder %v686, %v714
        %vm720 = vcmp.lt.s32.totalorder %v687, %v714
        %vm721 = vcmp.lt.s32.totalorder %v688, %v714
        %vm722 = vcmp.lt.s32.totalorder %v689, %v714
        %vm723 = vcmp.lt.s32.totalorder %v690, %v714
        %vm724 = vcmp.lt.s32.totalorder %v691, %v714
        %vm725 = vcmp.lt.s32.totalorder %v692, %v714
        %vm726 = vcmp.lt.s32.totalorder %v693, %v714
        %vm727 = vcmp.lt.s32.totalorder %v694, %v714
        %vm728 = vcmp.lt.s32.totalorder %v695, %v714
        %vm729 = vcmp.lt.s32.totalorder %v696, %v714
        %vm730 = vcmp.lt.s32.totalorder %v697, %v714
        %vm731 = vcmp.lt.s32.totalorder %v698, %v714
        %vm732 = vcmp.lt.s32.totalorder %v699, %v714
        %vm733 = vcmp.lt.s32.totalorder %v700, %v714
        %vm734 = vcmp.lt.s32.totalorder %v701, %v714
        %vm735 = vcmp.lt.s32.totalorder %v702, %v714
        %vm736 = vcmp.lt.s32.totalorder %v703, %v714
        %vm737 = vcmp.lt.s32.totalorder %v704, %v714
        %vm738 = vcmp.lt.s32.totalorder %v705, %v714
        %vm739 = vcmp.lt.s32.totalorder %v706, %v714
        %vm740 = vcmp.lt.s32.totalorder %v707, %v714
        %vm741 = vcmp.lt.s32.totalorder %v708, %v714
        %vm742 = vcmp.lt.s32.totalorder %v709, %v714
        %vm743 = vcmp.lt.s32.totalorder %v710, %v714
        %vm744 = vcmp.lt.s32.totalorder %v711, %v714
        %vm745 = vcmp.lt.s32.totalorder %v712, %v714
        %vm746 = vcmp.lt.s32.totalorder %v713, %v714
        %v747 = vsel %vm715, 1, 0
        %v748 = vsel %vm716, 1, 0
        %v749 = vsel %vm717, 1, 0
        %v750 = vsel %vm718, 1, 0
        %v751 = vsel %vm719, 1, 0
        %v752 = vsel %vm720, 1, 0
        %v753 = vsel %vm721, 1, 0
        %v754 = vsel %vm722, 1, 0
        %v755 = vsel %vm723, 1, 0
        %v756 = vsel %vm724, 1, 0
        %v757 = vsel %vm725, 1, 0
        %v758 = vsel %vm726, 1, 0
        %v759 = vsel %vm727, 1, 0
        %v760 = vsel %vm728, 1, 0
        %v761 = vsel %vm729, 1, 0
        %v762 = vsel %vm730, 1, 0
        %v763 = vsel %vm731, 1, 0
        %v764 = vsel %vm732, 1, 0
        %v765 = vsel %vm733, 1, 0
        %v766 = vsel %vm734, 1, 0
        %v767 = vsel %vm735, 1, 0
        %v768 = vsel %vm736, 1, 0
        %v769 = vsel %vm737, 1, 0
        %v770 = vsel %vm738, 1, 0
        %v771 = vsel %vm739, 1, 0
        %v772 = vsel %vm740, 1, 0
        %v773 = vsel %vm741, 1, 0
        %v774 = vsel %vm742, 1, 0
        %v775 = vsel %vm743, 1, 0
        %v776 = vsel %vm744, 1, 0
        %v777 = vsel %vm745, 1, 0
        %v778 = vsel %vm746, 1, 0
        %v779 = vcvt.s32.f32 %v747
        %v780 = vcvt.s32.f32 %v748
        %v781 = vcvt.s32.f32 %v749
        %v782 = vcvt.s32.f32 %v750
        %v783 = vcvt.s32.f32 %v751
        %v784 = vcvt.s32.f32 %v752
        %v785 = vcvt.s32.f32 %v753
        %v786 = vcvt.s32.f32 %v754
        %v787 = vcvt.s32.f32 %v755
        %v788 = vcvt.s32.f32 %v756
        %v789 = vcvt.s32.f32 %v757
        %v790 = vcvt.s32.f32 %v758
        %v791 = vcvt.s32.f32 %v759
        %v792 = vcvt.s32.f32 %v760
        %v793 = vcvt.s32.f32 %v761
        %v794 = vcvt.s32.f32 %v762
        %v795 = vcvt.s32.f32 %v763
        %v796 = vcvt.s32.f32 %v764
        %v797 = vcvt.s32.f32 %v765
        %v798 = vcvt.s32.f32 %v766
        %v799 = vcvt.s32.f32 %v767
        %v800 = vcvt.s32.f32 %v768
        %v801 = vcvt.s32.f32 %v769
        %v802 = vcvt.s32.f32 %v770
        %v803 = vcvt.s32.f32 %v771
        %v804 = vcvt.s32.f32 %v772
        %v805 = vcvt.s32.f32 %v773
        %v806 = vcvt.s32.f32 %v774
        %v807 = vcvt.s32.f32 %v775
        %v808 = vcvt.s32.f32 %v776
        %v809 = vcvt.s32.f32 %v777
        %v810 = vcvt.s32.f32 %v778
        %s811 = sld [smem:[#allocation2]]
        %s812 = sld [smem:[#allocation2 + $0x1]]
        %s813 = sld [smem:[#allocation2 + $0x2]]
        %v814 = vld [vmem:[%s11] sm:$0x7]
        %v815 = vld [vmem:[%s12] sm:$0x7]
        %v816 = vld [vmem:[%s14] sm:$0x7]
        %v817 = vld [vmem:[%s658] sm:$0xf]
        %v818 = vld [vmem:[%s658 + $0x4] sm:$0xf]
        %v819 = vld [vmem:[%s658 + $0x8] sm:$0xf]
        %v820 = vld [vmem:[%s658 + $0xc] sm:$0xf]
        %v821 = vld [vmem:[%s658 + $0x10] sm:$0xf]
        %v822 = vld [vmem:[%s658 + $0x14] sm:$0xf]
        %v823 = vld [vmem:[%s658 + $0x18] sm:$0xf]
        %v824 = vld [vmem:[%s658 + $0x1c] sm:$0xf]
        %v825 = vld [vmem:[%s658 + $0x20] sm:$0xf]
        %v826 = vld [vmem:[%s658 + $0x24] sm:$0xf]
        %v827 = vld [vmem:[%s658 + $0x28] sm:$0xf]
        %v828 = vld [vmem:[%s658 + $0x2c] sm:$0xf]
        %v829 = vld [vmem:[%s658 + $0x30] sm:$0xf]
        %v830 = vld [vmem:[%s658 + $0x34] sm:$0xf]
        %v831 = vld [vmem:[%s658 + $0x38] sm:$0xf]
        %v832 = vld [vmem:[%s658 + $0x3c] sm:$0xf]
        %v833 = vld [vmem:[%s658 + $0x40] sm:$0xf]
        %v834 = vld [vmem:[%s658 + $0x44] sm:$0xf]
        %v835 = vld [vmem:[%s658 + $0x48] sm:$0xf]
        %v836 = vld [vmem:[%s658 + $0x4c] sm:$0xf]
        %v837 = vld [vmem:[%s658 + $0x50] sm:$0xf]
        %v838 = vld [vmem:[%s658 + $0x54] sm:$0xf]
        %v839 = vld [vmem:[%s658 + $0x58] sm:$0xf]
        %v840 = vld [vmem:[%s658 + $0x5c] sm:$0xf]
        %v841 = vld [vmem:[%s658 + $0x60] sm:$0xf]
        %v842 = vld [vmem:[%s658 + $0x64] sm:$0xf]
        %v843 = vld [vmem:[%s658 + $0x68] sm:$0xf]
        %v844 = vld [vmem:[%s658 + $0x6c] sm:$0xf]
        %v845 = vld [vmem:[%s658 + $0x70] sm:$0xf]
        %v846 = vld [vmem:[%s658 + $0x74] sm:$0xf]
        %v847 = vld [vmem:[%s658 + $0x78] sm:$0xf]
        %v848 = vld [vmem:[%s658 + $0x7c] sm:$0xf]
        %v849 = vld [vmem:[%s7] sm:$0xf]
        %v850 = vld [vmem:[%s7 + $0x4] sm:$0xf]
        %v851 = vld [vmem:[%s8] sm:$0x1]
        %v853 = vlaneseq
        %v854 = vshrl.u32 %v853, 7
        %v855 = vsub.s32 0, %v854
        %v856 = vrot.slane %v851, %v855
        %v890 = vunpack.c.l.b16 %v817
        %v891 = vunpack.c.l.b16 %v818
        %v892 = vunpack.c.l.b16 %v819
        %v893 = vunpack.c.l.b16 %v820
        %v894 = vunpack.c.l.b16 %v821
        %v895 = vunpack.c.l.b16 %v822
        %v896 = vunpack.c.l.b16 %v823
        %v897 = vunpack.c.l.b16 %v824
        %v898 = vunpack.c.l.b16 %v825
        %v899 = vunpack.c.l.b16 %v826
        %v900 = vunpack.c.l.b16 %v827
        %v901 = vunpack.c.l.b16 %v828
        %v902 = vunpack.c.l.b16 %v829
        %v903 = vunpack.c.l.b16 %v830
        %v904 = vunpack.c.l.b16 %v831
        %v905 = vunpack.c.l.b16 %v832
        %v906 = vunpack.c.l.b16 %v833
        %v907 = vunpack.c.l.b16 %v834
        %v908 = vunpack.c.l.b16 %v835
        %v909 = vunpack.c.l.b16 %v836
        %v910 = vunpack.c.l.b16 %v837
        %v911 = vunpack.c.l.b16 %v838
        %v912 = vunpack.c.l.b16 %v839
        %v913 = vunpack.c.l.b16 %v840
        %v914 = vunpack.c.l.b16 %v841
        %v915 = vunpack.c.l.b16 %v842
        %v916 = vunpack.c.l.b16 %v843
        %v917 = vunpack.c.l.b16 %v844
        %v918 = vunpack.c.l.b16 %v845
        %v919 = vunpack.c.l.b16 %v846
        %v920 = vunpack.c.l.b16 %v847
        %v921 = vunpack.c.l.b16 %v848
        %v922 = vpack.c.b16 %v891, %v890
        %v923 = vpack.c.b16 %v893, %v892
        %v924 = vpack.c.b16 %v895, %v894
        %v925 = vpack.c.b16 %v897, %v896
        %v926 = vpack.c.b16 %v899, %v898
        %v927 = vpack.c.b16 %v901, %v900
        %v928 = vpack.c.b16 %v903, %v902
        %v929 = vpack.c.b16 %v905, %v904
        %v930 = vpack.c.b16 %v907, %v906
        %v931 = vpack.c.b16 %v909, %v908
        %v932 = vpack.c.b16 %v911, %v910
        %v933 = vpack.c.b16 %v913, %v912
        %v934 = vpack.c.b16 %v915, %v914
        %v935 = vpack.c.b16 %v917, %v916
        %v936 = vpack.c.b16 %v919, %v918
        %v937 = vpack.c.b16 %v921, %v920
        %v940 = vunpack.c.l.b16 %v849
        %v941 = vunpack.c.l.b16 %v850
        %v942 = vpack.c.b16 %v941, %v940
        %vm944 = vcmask 130048
        %v946 = vsel %vm944, %v922, 0
        %v949 = vsel %vm944, %v923, 0
        %v952 = vsel %vm944, %v924, 0
        %v955 = vsel %vm944, %v925, 0
        %v958 = vsel %vm944, %v926, 0
        %v961 = vsel %vm944, %v927, 0
        %v964 = vsel %vm944, %v928, 0
        %v967 = vsel %vm944, %v929, 0
        %v970 = vsel %vm944, %v930, 0
        %v973 = vsel %vm944, %v931, 0
        %v976 = vsel %vm944, %v932, 0
        %v979 = vsel %vm944, %v933, 0
        %v982 = vsel %vm944, %v934, 0
        %v985 = vsel %vm944, %v935, 0
        %v988 = vsel %vm944, %v936, 0
        %v991 = vsel %vm944, %v937, 0
        %993 = vmatprep.subr.bf16.mxu0 0
        %994 = vmatpush1.bf16.msra.mxu0 %v942
        %995 = vmatprep.subr.bf16.mxu0 0
        %996 = vmatpush1.bf16.msra.mxu0 0
        %997 = vmatprep.subr.bf16.mxu0 0
        %998 = vmatpush1.bf16.msra.mxu0 0
        %999 = vmatprep.subr.bf16.mxu0 0
        %1000 = vmatpush1.bf16.msra.mxu0 0
        %1001 = vmatprep.subr.bf16.mxu0 0
        %1002 = vmatpush1.bf16.msra.mxu0 0
        %1003 = vmatprep.subr.bf16.mxu0 0
        %1004 = vmatpush1.bf16.msra.mxu0 0
        %1005 = vmatprep.subr.bf16.mxu0 0
        %1006 = vmatpush1.bf16.msra.mxu0 0
        %1007 = vmatprep.subr.bf16.mxu0 0
        %1008 = vmatpush1.bf16.msra.mxu0 0
        %1009 = vmatprep.subr.bf16.mxu0 0
        %1010 = vmatpush1.bf16.msra.mxu0 0
        %1011 = vmatprep.subr.bf16.mxu0 0
        %1012 = vmatpush1.bf16.msra.mxu0 0
        %1013 = vmatprep.subr.bf16.mxu0 0
        %1014 = vmatpush1.bf16.msra.mxu0 0
        %1015 = vmatprep.subr.bf16.mxu0 0
        %1016 = vmatpush1.bf16.msra.mxu0 0
        %1017 = vmatprep.subr.bf16.mxu0 0
        %1018 = vmatpush1.bf16.msra.mxu0 0
        %1019 = vmatprep.subr.bf16.mxu0 0
        %1020 = vmatpush1.bf16.msra.mxu0 0
        %1021 = vmatprep.subr.bf16.mxu0 0
        %1022 = vmatpush1.bf16.msra.mxu0 0
        %1023 = vmatprep.subr.bf16.mxu0 0
        %1024 = vmatpush1.bf16.msra.mxu0 0
        %1025 = vmatprep.mubr.bf16.mxu0 0
        %1026 = vmatmul.mubr.bf16.gmra.mrb[0].mxu0 %v946
        %v1027 = vpop.f32.mrb[0].mxu0
        %v1028 = vadd.f32 %v856, %v1027
        %v1029 = vpop.f32.mrb[0].mxu0
        %v1030 = vpop.f32.mrb[0].mxu0
        %v1031 = vadd.f32 %v856, %v1030
        %v1032 = vpop.f32.mrb[0].mxu0
        %1033 = vmatprep.mubr.bf16.mxu0 0
        %1034 = vmatmul.mubr.bf16.gmra.mrb[0].mxu0 %v949
        %v1035 = vpop.f32.mrb[0].mxu0
        %v1036 = vadd.f32 %v856, %v1035
        %v1037 = vpop.f32.mrb[0].mxu0
        %v1038 = vpop.f32.mrb[0].mxu0
        %v1039 = vadd.f32 %v856, %v1038
        %v1040 = vpop.f32.mrb[0].mxu0
        %1041 = vmatprep.mubr.bf16.mxu0 0
        %1042 = vmatmul.mubr.bf16.gmra.mrb[0].mxu0 %v952
        %v1043 = vpop.f32.mrb[0].mxu0
        %v1044 = vadd.f32 %v856, %v1043
        %v1045 = vpop.f32.mrb[0].mxu0
        %v1046 = vpop.f32.mrb[0].mxu0
        %v1047 = vadd.f32 %v856, %v1046
        %v1048 = vpop.f32.mrb[0].mxu0
        %1049 = vmatprep.mubr.bf16.mxu0 0
        %1050 = vmatmul.mubr.bf16.gmra.mrb[0].mxu0 %v955
        %v1051 = vpop.f32.mrb[0].mxu0
        %v1052 = vadd.f32 %v856, %v1051
        %v1053 = vpop.f32.mrb[0].mxu0
        %v1054 = vpop.f32.mrb[0].mxu0
        %v1055 = vadd.f32 %v856, %v1054
        %v1056 = vpop.f32.mrb[0].mxu0
        %1057 = vmatprep.mubr.bf16.mxu0 0
        %1058 = vmatmul.mubr.bf16.gmra.mrb[0].mxu0 %v958
        %v1059 = vpop.f32.mrb[0].mxu0
        %v1060 = vadd.f32 %v856, %v1059
        %v1061 = vpop.f32.mrb[0].mxu0
        %v1062 = vpop.f32.mrb[0].mxu0
        %v1063 = vadd.f32 %v856, %v1062
        %v1064 = vpop.f32.mrb[0].mxu0
        %1065 = vmatprep.mubr.bf16.mxu0 0
        %1066 = vmatmul.mubr.bf16.gmra.mrb[0].mxu0 %v961
        %v1067 = vpop.f32.mrb[0].mxu0
        %v1068 = vadd.f32 %v856, %v1067
        %v1069 = vpop.f32.mrb[0].mxu0
        %v1070 = vpop.f32.mrb[0].mxu0
        %v1071 = vadd.f32 %v856, %v1070
        %v1072 = vpop.f32.mrb[0].mxu0
        %1073 = vmatprep.mubr.bf16.mxu0 0
        %1074 = vmatmul.mubr.bf16.gmra.mrb[0].mxu0 %v964
        %v1075 = vpop.f32.mrb[0].mxu0
        %v1076 = vadd.f32 %v856, %v1075
        %v1077 = vpop.f32.mrb[0].mxu0
        %v1078 = vpop.f32.mrb[0].mxu0
        %v1079 = vadd.f32 %v856, %v1078
        %v1080 = vpop.f32.mrb[0].mxu0
        %1081 = vmatprep.mubr.bf16.mxu0 0
        %1082 = vmatmul.mubr.bf16.gmra.mrb[0].mxu0 %v967
        %v1083 = vpop.f32.mrb[0].mxu0
        %v1084 = vadd.f32 %v856, %v1083
        %v1085 = vpop.f32.mrb[0].mxu0
        %v1086 = vpop.f32.mrb[0].mxu0
        %v1087 = vadd.f32 %v856, %v1086
        %v1088 = vpop.f32.mrb[0].mxu0
        %1089 = vmatprep.mubr.bf16.mxu0 0
        %1090 = vmatmul.mubr.bf16.gmra.mrb[0].mxu0 %v970
        %v1091 = vpop.f32.mrb[0].mxu0
        %v1092 = vadd.f32 %v856, %v1091
        %v1093 = vpop.f32.mrb[0].mxu0
        %v1094 = vpop.f32.mrb[0].mxu0
        %v1095 = vadd.f32 %v856, %v1094
        %v1096 = vpop.f32.mrb[0].mxu0
        %1097 = vmatprep.mubr.bf16.mxu0 0
        %1098 = vmatmul.mubr.bf16.gmra.mrb[0].mxu0 %v973
        %v1099 = vpop.f32.mrb[0].mxu0
        %v1100 = vadd.f32 %v856, %v1099
        %v1101 = vpop.f32.mrb[0].mxu0
        %v1102 = vpop.f32.mrb[0].mxu0
        %v1103 = vadd.f32 %v856, %v1102
        %v1104 = vpop.f32.mrb[0].mxu0
        %1105 = vmatprep.mubr.bf16.mxu0 0
        %1106 = vmatmul.mubr.bf16.gmra.mrb[0].mxu0 %v976
        %v1107 = vpop.f32.mrb[0].mxu0
        %v1108 = vadd.f32 %v856, %v1107
        %v1109 = vpop.f32.mrb[0].mxu0
        %v1110 = vpop.f32.mrb[0].mxu0
        %v1111 = vadd.f32 %v856, %v1110
        %v1112 = vpop.f32.mrb[0].mxu0
        %1113 = vmatprep.mubr.bf16.mxu0 0
        %1114 = vmatmul.mubr.bf16.gmra.mrb[0].mxu0 %v979
        %v1115 = vpop.f32.mrb[0].mxu0
        %v1116 = vadd.f32 %v856, %v1115
        %v1117 = vpop.f32.mrb[0].mxu0
        %v1118 = vpop.f32.mrb[0].mxu0
        %v1119 = vadd.f32 %v856, %v1118
        %v1120 = vpop.f32.mrb[0].mxu0
        %1121 = vmatprep.mubr.bf16.mxu0 0
        %1122 = vmatmul.mubr.bf16.gmra.mrb[0].mxu0 %v982
        %v1123 = vpop.f32.mrb[0].mxu0
        %v1124 = vadd.f32 %v856, %v1123
        %v1125 = vpop.f32.mrb[0].mxu0
        %v1126 = vpop.f32.mrb[0].mxu0
        %v1127 = vadd.f32 %v856, %v1126
        %v1128 = vpop.f32.mrb[0].mxu0
        %1129 = vmatprep.mubr.bf16.mxu0 0
        %1130 = vmatmul.mubr.bf16.gmra.mrb[0].mxu0 %v985
        %v1131 = vpop.f32.mrb[0].mxu0
        %v1132 = vadd.f32 %v856, %v1131
        %v1133 = vpop.f32.mrb[0].mxu0
        %v1134 = vpop.f32.mrb[0].mxu0
        %v1135 = vadd.f32 %v856, %v1134
        %v1136 = vpop.f32.mrb[0].mxu0
        %1137 = vmatprep.mubr.bf16.mxu0 0
        %1138 = vmatmul.mubr.bf16.gmra.mrb[0].mxu0 %v988
        %v1139 = vpop.f32.mrb[0].mxu0
        %v1140 = vadd.f32 %v856, %v1139
        %v1141 = vpop.f32.mrb[0].mxu0
        %v1142 = vpop.f32.mrb[0].mxu0
        %v1143 = vadd.f32 %v856, %v1142
        %v1144 = vpop.f32.mrb[0].mxu0
        %1145 = vmatprep.mubr.bf16.mxu0 0
        %1146 = vmatmul.mubr.bf16.gmra.mrb[0].mxu0 %v991
        %v1147 = vpop.f32.mrb[0].mxu0
        %v1148 = vadd.f32 %v856, %v1147
        %v1149 = vpop.f32.mrb[0].mxu0
        %v1150 = vpop.f32.mrb[0].mxu0
        %v1151 = vadd.f32 %v856, %v1150
        %v1152 = vpop.f32.mrb[0].mxu0
        %1153 = vdwg.mxu0
        %v1154 = vmul.f32 %v1028, %v779
        %v1155 = vmul.f32 %v1031, %v780
        %v1156 = vmul.f32 %v1036, %v781
        %v1157 = vmul.f32 %v1039, %v782
        %v1158 = vmul.f32 %v1044, %v783
        %v1159 = vmul.f32 %v1047, %v784
        %v1160 = vmul.f32 %v1052, %v785
        %v1161 = vmul.f32 %v1055, %v786
        %v1162 = vmul.f32 %v1060, %v787
        %v1163 = vmul.f32 %v1063, %v788
        %v1164 = vmul.f32 %v1068, %v789
        %v1165 = vmul.f32 %v1071, %v790
        %v1166 = vmul.f32 %v1076, %v791
        %v1167 = vmul.f32 %v1079, %v792
        %v1168 = vmul.f32 %v1084, %v793
        %v1169 = vmul.f32 %v1087, %v794
        %v1170 = vmul.f32 %v1092, %v795
        %v1171 = vmul.f32 %v1095, %v796
        %v1172 = vmul.f32 %v1100, %v797
        %v1173 = vmul.f32 %v1103, %v798
        %v1174 = vmul.f32 %v1108, %v799
        %v1175 = vmul.f32 %v1111, %v800
        %v1176 = vmul.f32 %v1116, %v801
        %v1177 = vmul.f32 %v1119, %v802
        %v1178 = vmul.f32 %v1124, %v803
        %v1179 = vmul.f32 %v1127, %v804
        %v1180 = vmul.f32 %v1132, %v805
        %v1181 = vmul.f32 %v1135, %v806
        %v1182 = vmul.f32 %v1140, %v807
        %v1183 = vmul.f32 %v1143, %v808
        %v1184 = vmul.f32 %v1148, %v809
        %v1185 = vmul.f32 %v1151, %v810
        %v1186 = vld [vmem:[%s668] sm:$0xf]
        %v1187 = vld [vmem:[%s668 + $0x4] sm:$0xf]
        %v1188 = vld [vmem:[%s668 + $0x8] sm:$0xf]
        %v1189 = vld [vmem:[%s668 + $0xc] sm:$0xf]
        %v1190 = vld [vmem:[%s668 + $0x10] sm:$0xf]
        %v1191 = vld [vmem:[%s668 + $0x14] sm:$0xf]
        %v1192 = vld [vmem:[%s668 + $0x18] sm:$0xf]
        %v1193 = vld [vmem:[%s668 + $0x1c] sm:$0xf]
        %v1194 = vld [vmem:[%s668 + $0x20] sm:$0xf]
        %v1195 = vld [vmem:[%s668 + $0x24] sm:$0xf]
        %v1196 = vld [vmem:[%s668 + $0x28] sm:$0xf]
        %v1197 = vld [vmem:[%s668 + $0x2c] sm:$0xf]
        %v1198 = vld [vmem:[%s668 + $0x30] sm:$0xf]
        %v1199 = vld [vmem:[%s668 + $0x34] sm:$0xf]
        %v1200 = vld [vmem:[%s668 + $0x38] sm:$0xf]
        %v1201 = vld [vmem:[%s668 + $0x3c] sm:$0xf]
        %v1202 = vld [vmem:[%s668 + $0x40] sm:$0xf]
        %v1203 = vld [vmem:[%s668 + $0x44] sm:$0xf]
        %v1204 = vld [vmem:[%s668 + $0x48] sm:$0xf]
        %v1205 = vld [vmem:[%s668 + $0x4c] sm:$0xf]
        %v1206 = vld [vmem:[%s668 + $0x50] sm:$0xf]
        %v1207 = vld [vmem:[%s668 + $0x54] sm:$0xf]
        %v1208 = vld [vmem:[%s668 + $0x58] sm:$0xf]
        %v1209 = vld [vmem:[%s668 + $0x5c] sm:$0xf]
        %v1210 = vld [vmem:[%s668 + $0x60] sm:$0xf]
        %v1211 = vld [vmem:[%s668 + $0x64] sm:$0xf]
        %v1212 = vld [vmem:[%s668 + $0x68] sm:$0xf]
        %v1213 = vld [vmem:[%s668 + $0x6c] sm:$0xf]
        %v1214 = vld [vmem:[%s668 + $0x70] sm:$0xf]
        %v1215 = vld [vmem:[%s668 + $0x74] sm:$0xf]
        %v1216 = vld [vmem:[%s668 + $0x78] sm:$0xf]
        %v1217 = vld [vmem:[%s668 + $0x7c] sm:$0xf]
        %v1218 = vld [vmem:[%s668 + $0x80] sm:$0xf]
        %v1219 = vld [vmem:[%s668 + $0x84] sm:$0xf]
        %v1220 = vld [vmem:[%s668 + $0x88] sm:$0xf]
        %v1221 = vld [vmem:[%s668 + $0x8c] sm:$0xf]
        %v1222 = vld [vmem:[%s668 + $0x90] sm:$0xf]
        %v1223 = vld [vmem:[%s668 + $0x94] sm:$0xf]
        %v1224 = vld [vmem:[%s668 + $0x98] sm:$0xf]
        %v1225 = vld [vmem:[%s668 + $0x9c] sm:$0xf]
        %v1226 = vld [vmem:[%s668 + $0xa0] sm:$0xf]
        %v1227 = vld [vmem:[%s668 + $0xa4] sm:$0xf]
        %v1228 = vld [vmem:[%s668 + $0xa8] sm:$0xf]
        %v1229 = vld [vmem:[%s668 + $0xac] sm:$0xf]
        %v1230 = vld [vmem:[%s668 + $0xb0] sm:$0xf]
        %v1231 = vld [vmem:[%s668 + $0xb4] sm:$0xf]
        %v1232 = vld [vmem:[%s668 + $0xb8] sm:$0xf]
        %v1233 = vld [vmem:[%s668 + $0xbc] sm:$0xf]
        %v1234 = vld [vmem:[%s668 + $0xc0] sm:$0xf]
        %v1235 = vld [vmem:[%s668 + $0xc4] sm:$0xf]
        %v1236 = vld [vmem:[%s668 + $0xc8] sm:$0xf]
        %v1237 = vld [vmem:[%s668 + $0xcc] sm:$0xf]
        %v1238 = vld [vmem:[%s668 + $0xd0] sm:$0xf]
        %v1239 = vld [vmem:[%s668 + $0xd4] sm:$0xf]
        %v1240 = vld [vmem:[%s668 + $0xd8] sm:$0xf]
        %v1241 = vld [vmem:[%s668 + $0xdc] sm:$0xf]
        %v1242 = vld [vmem:[%s668 + $0xe0] sm:$0xf]
        %v1243 = vld [vmem:[%s668 + $0xe4] sm:$0xf]
        %v1244 = vld [vmem:[%s668 + $0xe8] sm:$0xf]
        %v1245 = vld [vmem:[%s668 + $0xec] sm:$0xf]
        %v1246 = vld [vmem:[%s668 + $0xf0] sm:$0xf]
        %v1247 = vld [vmem:[%s668 + $0xf4] sm:$0xf]
        %v1248 = vld [vmem:[%s668 + $0xf8] sm:$0xf]
        %v1249 = vld [vmem:[%s668 + $0xfc] sm:$0xf]
        %v1250 = vld [vmem:[%s9] sm:$0xf]
        %v1251 = vld [vmem:[%s9 + $0x4] sm:$0xf]
        %v1252 = vld [vmem:[%s10] sm:$0x1]
        %v1254 = vlaneseq
        %v1255 = vshrl.u32 %v1254, 7
        %v1256 = vsub.s32 0, %v1255
        %v1257 = vrot.slane %v1252, %v1256
        %v1323 = vunpack.c.l.b16 %v1186
        %v1324 = vunpack.c.l.b16 %v1187
        %v1325 = vunpack.c.l.b16 %v1188
        %v1326 = vunpack.c.l.b16 %v1189
        %v1327 = vunpack.c.l.b16 %v1190
        %v1328 = vunpack.c.l.b16 %v1191
        %v1329 = vunpack.c.l.b16 %v1192
        %v1330 = vunpack.c.l.b16 %v1193
        %v1331 = vunpack.c.l.b16 %v1194
        %v1332 = vunpack.c.l.b16 %v1195
        %v1333 = vunpack.c.l.b16 %v1196
        %v1334 = vunpack.c.l.b16 %v1197
        %v1335 = vunpack.c.l.b16 %v1198
        %v1336 = vunpack.c.l.b16 %v1199
        %v1337 = vunpack.c.l.b16 %v1200
        %v1338 = vunpack.c.l.b16 %v1201
        %v1339 = vunpack.c.l.b16 %v1202
        %v1340 = vunpack.c.l.b16 %v1203
        %v1341 = vunpack.c.l.b16 %v1204
        %v1342 = vunpack.c.l.b16 %v1205
        %v1343 = vunpack.c.l.b16 %v1206
        %v1344 = vunpack.c.l.b16 %v1207
        %v1345 = vunpack.c.l.b16 %v1208
        %v1346 = vunpack.c.l.b16 %v1209
        %v1347 = vunpack.c.l.b16 %v1210
        %v1348 = vunpack.c.l.b16 %v1211
        %v1349 = vunpack.c.l.b16 %v1212
        %v1350 = vunpack.c.l.b16 %v1213
        %v1351 = vunpack.c.l.b16 %v1214
        %v1352 = vunpack.c.l.b16 %v1215
        %v1353 = vunpack.c.l.b16 %v1216
        %v1354 = vunpack.c.l.b16 %v1217
        %v1355 = vunpack.c.l.b16 %v1218
        %v1356 = vunpack.c.l.b16 %v1219
        %v1357 = vunpack.c.l.b16 %v1220
        %v1358 = vunpack.c.l.b16 %v1221
        %v1359 = vunpack.c.l.b16 %v1222
        %v1360 = vunpack.c.l.b16 %v1223
        %v1361 = vunpack.c.l.b16 %v1224
        %v1362 = vunpack.c.l.b16 %v1225
        %v1363 = vunpack.c.l.b16 %v1226
        %v1364 = vunpack.c.l.b16 %v1227
        %v1365 = vunpack.c.l.b16 %v1228
        %v1366 = vunpack.c.l.b16 %v1229
        %v1367 = vunpack.c.l.b16 %v1230
        %v1368 = vunpack.c.l.b16 %v1231
        %v1369 = vunpack.c.l.b16 %v1232
        %v1370 = vunpack.c.l.b16 %v1233
        %v1371 = vunpack.c.l.b16 %v1234
        %v1372 = vunpack.c.l.b16 %v1235
        %v1373 = vunpack.c.l.b16 %v1236
        %v1374 = vunpack.c.l.b16 %v1237
        %v1375 = vunpack.c.l.b16 %v1238
        %v1376 = vunpack.c.l.b16 %v1239
        %v1377 = vunpack.c.l.b16 %v1240
        %v1378 = vunpack.c.l.b16 %v1241
        %v1379 = vunpack.c.l.b16 %v1242
        %v1380 = vunpack.c.l.b16 %v1243
        %v1381 = vunpack.c.l.b16 %v1244
        %v1382 = vunpack.c.l.b16 %v1245
        %v1383 = vunpack.c.l.b16 %v1246
        %v1384 = vunpack.c.l.b16 %v1247
        %v1385 = vunpack.c.l.b16 %v1248
        %v1386 = vunpack.c.l.b16 %v1249
        %v1387 = vpack.c.b16 %v1324, %v1323
        %v1388 = vpack.c.b16 %v1326, %v1325
        %v1389 = vpack.c.b16 %v1328, %v1327
        %v1390 = vpack.c.b16 %v1330, %v1329
        %v1391 = vpack.c.b16 %v1332, %v1331
        %v1392 = vpack.c.b16 %v1334, %v1333
        %v1393 = vpack.c.b16 %v1336, %v1335
        %v1394 = vpack.c.b16 %v1338, %v1337
        %v1395 = vpack.c.b16 %v1340, %v1339
        %v1396 = vpack.c.b16 %v1342, %v1341
        %v1397 = vpack.c.b16 %v1344, %v1343
        %v1398 = vpack.c.b16 %v1346, %v1345
        %v1399 = vpack.c.b16 %v1348, %v1347
        %v1400 = vpack.c.b16 %v1350, %v1349
        %v1401 = vpack.c.b16 %v1352, %v1351
        %v1402 = vpack.c.b16 %v1354, %v1353
        %v1403 = vpack.c.b16 %v1356, %v1355
        %v1404 = vpack.c.b16 %v1358, %v1357
        %v1405 = vpack.c.b16 %v1360, %v1359
        %v1406 = vpack.c.b16 %v1362, %v1361
        %v1407 = vpack.c.b16 %v1364, %v1363
        %v1408 = vpack.c.b16 %v1366, %v1365
        %v1409 = vpack.c.b16 %v1368, %v1367
        %v1410 = vpack.c.b16 %v1370, %v1369
        %v1411 = vpack.c.b16 %v1372, %v1371
        %v1412 = vpack.c.b16 %v1374, %v1373
        %v1413 = vpack.c.b16 %v1376, %v1375
        %v1414 = vpack.c.b16 %v1378, %v1377
        %v1415 = vpack.c.b16 %v1380, %v1379
        %v1416 = vpack.c.b16 %v1382, %v1381
        %v1417 = vpack.c.b16 %v1384, %v1383
        %v1418 = vpack.c.b16 %v1386, %v1385
        %v1421 = vunpack.c.l.b16 %v1250
        %v1422 = vunpack.c.l.b16 %v1251
        %v1423 = vpack.c.b16 %v1422, %v1421
        %v1426 = vsel %vm944, %v1387, 0
        %v1429 = vsel %vm944, %v1388, 0
        %v1432 = vsel %vm944, %v1389, 0
        %v1435 = vsel %vm944, %v1390, 0
        %v1438 = vsel %vm944, %v1391, 0
        %v1441 = vsel %vm944, %v1392, 0
        %v1444 = vsel %vm944, %v1393, 0
        %v1447 = vsel %vm944, %v1394, 0
        %v1450 = vsel %vm944, %v1395, 0
        %v1453 = vsel %vm944, %v1396, 0
        %v1456 = vsel %vm944, %v1397, 0
        %v1459 = vsel %vm944, %v1398, 0
        %v1462 = vsel %vm944, %v1399, 0
        %v1465 = vsel %vm944, %v1400, 0
        %v1468 = vsel %vm944, %v1401, 0
        %v1471 = vsel %vm944, %v1402, 0
        %v1474 = vsel %vm944, %v1403, 0
        %v1477 = vsel %vm944, %v1404, 0
        %v1480 = vsel %vm944, %v1405, 0
        %v1483 = vsel %vm944, %v1406, 0
        %v1486 = vsel %vm944, %v1407, 0
        %v1489 = vsel %vm944, %v1408, 0
        %v1492 = vsel %vm944, %v1409, 0
        %v1495 = vsel %vm944, %v1410, 0
        %v1498 = vsel %vm944, %v1411, 0
        %v1501 = vsel %vm944, %v1412, 0
        %v1504 = vsel %vm944, %v1413, 0
        %v1507 = vsel %vm944, %v1414, 0
        %v1510 = vsel %vm944, %v1415, 0
        %v1513 = vsel %vm944, %v1416, 0
        %v1516 = vsel %vm944, %v1417, 0
        %v1519 = vsel %vm944, %v1418, 0
        %1521 = vmatprep.subr.bf16.mxu0 0
        %1522 = vmatpush1.bf16.msra.mxu0 %v1423
        %1523 = vmatprep.subr.bf16.mxu0 0
        %1524 = vmatpush1.bf16.msra.mxu0 0
        %1525 = vmatprep.subr.bf16.mxu0 0
        %1526 = vmatpush1.bf16.msra.mxu0 0
        %1527 = vmatprep.subr.bf16.mxu0 0
        %1528 = vmatpush1.bf16.msra.mxu0 0
        %1529 = vmatprep.subr.bf16.mxu0 0
        %1530 = vmatpush1.bf16.msra.mxu0 0
        %1531 = vmatprep.subr.bf16.mxu0 0
        %1532 = vmatpush1.bf16.msra.mxu0 0
        %1533 = vmatprep.subr.bf16.mxu0 0
        %1534 = vmatpush1.bf16.msra.mxu0 0
        %1535 = vmatprep.subr.bf16.mxu0 0
        %1536 = vmatpush1.bf16.msra.mxu0 0
        %1537 = vmatprep.subr.bf16.mxu0 0
        %1538 = vmatpush1.bf16.msra.mxu0 0
        %1539 = vmatprep.subr.bf16.mxu0 0
        %1540 = vmatpush1.bf16.msra.mxu0 0
        %1541 = vmatprep.subr.bf16.mxu0 0
        %1542 = vmatpush1.bf16.msra.mxu0 0
        %1543 = vmatprep.subr.bf16.mxu0 0
        %1544 = vmatpush1.bf16.msra.mxu0 0
        %1545 = vmatprep.subr.bf16.mxu0 0
        %1546 = vmatpush1.bf16.msra.mxu0 0
        %1547 = vmatprep.subr.bf16.mxu0 0
        %1548 = vmatpush1.bf16.msra.mxu0 0
        %1549 = vmatprep.subr.bf16.mxu0 0
        %1550 = vmatpush1.bf16.msra.mxu0 0
        %1551 = vmatprep.subr.bf16.mxu0 0
        %1552 = vmatpush1.bf16.msra.mxu0 0
        %1553 = vmatprep.mubr.bf16.mxu0 0
        %1554 = vmatmul.mubr.bf16.gmra.mrb[0].mxu0 %v1426
        %v1555 = vpop.f32.mrb[0].mxu0
        %v1556 = vadd.f32 %v1257, %v1555
        %v1557 = vpop.f32.mrb[0].mxu0
        %v1558 = vpop.f32.mrb[0].mxu0
        %v1559 = vadd.f32 %v1257, %v1558
        %v1560 = vpop.f32.mrb[0].mxu0
        %1561 = vmatprep.mubr.bf16.mxu0 0
        %1562 = vmatmul.mubr.bf16.gmra.mrb[0].mxu0 %v1429
        %v1563 = vpop.f32.mrb[0].mxu0
        %v1564 = vadd.f32 %v1257, %v1563
        %v1565 = vpop.f32.mrb[0].mxu0
        %v1566 = vpop.f32.mrb[0].mxu0
        %v1567 = vadd.f32 %v1257, %v1566
        %v1568 = vpop.f32.mrb[0].mxu0
        %1569 = vmatprep.mubr.bf16.mxu0 0
        %1570 = vmatmul.mubr.bf16.gmra.mrb[0].mxu0 %v1432
        %v1571 = vpop.f32.mrb[0].mxu0
        %v1572 = vadd.f32 %v1257, %v1571
        %v1573 = vpop.f32.mrb[0].mxu0
        %v1574 = vpop.f32.mrb[0].mxu0
        %v1575 = vadd.f32 %v1257, %v1574
        %v1576 = vpop.f32.mrb[0].mxu0
        %1577 = vmatprep.mubr.bf16.mxu0 0
        %1578 = vmatmul.mubr.bf16.gmra.mrb[0].mxu0 %v1435
        %v1579 = vpop.f32.mrb[0].mxu0
        %v1580 = vadd.f32 %v1257, %v1579
        %v1581 = vpop.f32.mrb[0].mxu0
        %v1582 = vpop.f32.mrb[0].mxu0
        %v1583 = vadd.f32 %v1257, %v1582
        %v1584 = vpop.f32.mrb[0].mxu0
        %1585 = vmatprep.mubr.bf16.mxu0 0
        %1586 = vmatmul.mubr.bf16.gmra.mrb[0].mxu0 %v1438
        %v1587 = vpop.f32.mrb[0].mxu0
        %v1588 = vadd.f32 %v1257, %v1587
        %v1589 = vpop.f32.mrb[0].mxu0
        %v1590 = vpop.f32.mrb[0].mxu0
        %v1591 = vadd.f32 %v1257, %v1590
        %v1592 = vpop.f32.mrb[0].mxu0
        %1593 = vmatprep.mubr.bf16.mxu0 0
        %1594 = vmatmul.mubr.bf16.gmra.mrb[0].mxu0 %v1441
        %v1595 = vpop.f32.mrb[0].mxu0
        %v1596 = vadd.f32 %v1257, %v1595
        %v1597 = vpop.f32.mrb[0].mxu0
        %v1598 = vpop.f32.mrb[0].mxu0
        %v1599 = vadd.f32 %v1257, %v1598
        %v1600 = vpop.f32.mrb[0].mxu0
        %1601 = vmatprep.mubr.bf16.mxu0 0
        %1602 = vmatmul.mubr.bf16.gmra.mrb[0].mxu0 %v1444
        %v1603 = vpop.f32.mrb[0].mxu0
        %v1604 = vadd.f32 %v1257, %v1603
        %v1605 = vpop.f32.mrb[0].mxu0
        %v1606 = vpop.f32.mrb[0].mxu0
        %v1607 = vadd.f32 %v1257, %v1606
        %v1608 = vpop.f32.mrb[0].mxu0
        %1609 = vmatprep.mubr.bf16.mxu0 0
        %1610 = vmatmul.mubr.bf16.gmra.mrb[0].mxu0 %v1447
        %v1611 = vpop.f32.mrb[0].mxu0
        %v1612 = vadd.f32 %v1257, %v1611
        %v1613 = vpop.f32.mrb[0].mxu0
        %v1614 = vpop.f32.mrb[0].mxu0
        %v1615 = vadd.f32 %v1257, %v1614
        %v1616 = vpop.f32.mrb[0].mxu0
        %1617 = vmatprep.mubr.bf16.mxu0 0
        %1618 = vmatmul.mubr.bf16.gmra.mrb[0].mxu0 %v1450
        %v1619 = vpop.f32.mrb[0].mxu0
        %v1620 = vadd.f32 %v1257, %v1619
        %v1621 = vpop.f32.mrb[0].mxu0
        %v1622 = vpop.f32.mrb[0].mxu0
        %v1623 = vadd.f32 %v1257, %v1622
        %v1624 = vpop.f32.mrb[0].mxu0
        %1625 = vmatprep.mubr.bf16.mxu0 0
        %1626 = vmatmul.mubr.bf16.gmra.mrb[0].mxu0 %v1453
        %v1627 = vpop.f32.mrb[0].mxu0
        %v1628 = vadd.f32 %v1257, %v1627
        %v1629 = vpop.f32.mrb[0].mxu0
        %v1630 = vpop.f32.mrb[0].mxu0
        %v1631 = vadd.f32 %v1257, %v1630
        %v1632 = vpop.f32.mrb[0].mxu0
        %1633 = vmatprep.mubr.bf16.mxu0 0
        %1634 = vmatmul.mubr.bf16.gmra.mrb[0].mxu0 %v1456
        %v1635 = vpop.f32.mrb[0].mxu0
        %v1636 = vadd.f32 %v1257, %v1635
        %v1637 = vpop.f32.mrb[0].mxu0
        %v1638 = vpop.f32.mrb[0].mxu0
        %v1639 = vadd.f32 %v1257, %v1638
        %v1640 = vpop.f32.mrb[0].mxu0
        %1641 = vmatprep.mubr.bf16.mxu0 0
        %1642 = vmatmul.mubr.bf16.gmra.mrb[0].mxu0 %v1459
        %v1643 = vpop.f32.mrb[0].mxu0
        %v1644 = vadd.f32 %v1257, %v1643
        %v1645 = vpop.f32.mrb[0].mxu0
        %v1646 = vpop.f32.mrb[0].mxu0
        %v1647 = vadd.f32 %v1257, %v1646
        %v1648 = vpop.f32.mrb[0].mxu0
        %1649 = vmatprep.mubr.bf16.mxu0 0
        %1650 = vmatmul.mubr.bf16.gmra.mrb[0].mxu0 %v1462
        %v1651 = vpop.f32.mrb[0].mxu0
        %v1652 = vadd.f32 %v1257, %v1651
        %v1653 = vpop.f32.mrb[0].mxu0
        %v1654 = vpop.f32.mrb[0].mxu0
        %v1655 = vadd.f32 %v1257, %v1654
        %v1656 = vpop.f32.mrb[0].mxu0
        %1657 = vmatprep.mubr.bf16.mxu0 0
        %1658 = vmatmul.mubr.bf16.gmra.mrb[0].mxu0 %v1465
        %v1659 = vpop.f32.mrb[0].mxu0
        %v1660 = vadd.f32 %v1257, %v1659
        %v1661 = vpop.f32.mrb[0].mxu0
        %v1662 = vpop.f32.mrb[0].mxu0
        %v1663 = vadd.f32 %v1257, %v1662
        %v1664 = vpop.f32.mrb[0].mxu0
        %1665 = vmatprep.mubr.bf16.mxu0 0
        %1666 = vmatmul.mubr.bf16.gmra.mrb[0].mxu0 %v1468
        %v1667 = vpop.f32.mrb[0].mxu0
        %v1668 = vadd.f32 %v1257, %v1667
        %v1669 = vpop.f32.mrb[0].mxu0
        %v1670 = vpop.f32.mrb[0].mxu0
        %v1671 = vadd.f32 %v1257, %v1670
        %v1672 = vpop.f32.mrb[0].mxu0
        %1673 = vmatprep.mubr.bf16.mxu0 0
        %1674 = vmatmul.mubr.bf16.gmra.mrb[0].mxu0 %v1471
        %v1675 = vpop.f32.mrb[0].mxu0
        %v1676 = vadd.f32 %v1257, %v1675
        %v1677 = vpop.f32.mrb[0].mxu0
        %v1678 = vpop.f32.mrb[0].mxu0
        %v1679 = vadd.f32 %v1257, %v1678
        %v1680 = vpop.f32.mrb[0].mxu0
        %1681 = vmatprep.mubr.bf16.mxu0 0
        %1682 = vmatmul.mubr.bf16.gmra.mrb[0].mxu0 %v1474
        %v1683 = vpop.f32.mrb[0].mxu0
        %v1684 = vadd.f32 %v1257, %v1683
        %v1685 = vpop.f32.mrb[0].mxu0
        %v1686 = vpop.f32.mrb[0].mxu0
        %v1687 = vadd.f32 %v1257, %v1686
        %v1688 = vpop.f32.mrb[0].mxu0
        %1689 = vmatprep.mubr.bf16.mxu0 0
        %1690 = vmatmul.mubr.bf16.gmra.mrb[0].mxu0 %v1477
        %v1691 = vpop.f32.mrb[0].mxu0
        %v1692 = vadd.f32 %v1257, %v1691
        %v1693 = vpop.f32.mrb[0].mxu0
        %v1694 = vpop.f32.mrb[0].mxu0
        %v1695 = vadd.f32 %v1257, %v1694
        %v1696 = vpop.f32.mrb[0].mxu0
        %1697 = vmatprep.mubr.bf16.mxu0 0
        %1698 = vmatmul.mubr.bf16.gmra.mrb[0].mxu0 %v1480
        %v1699 = vpop.f32.mrb[0].mxu0
        %v1700 = vadd.f32 %v1257, %v1699
        %v1701 = vpop.f32.mrb[0].mxu0
        %v1702 = vpop.f32.mrb[0].mxu0
        %v1703 = vadd.f32 %v1257, %v1702
        %v1704 = vpop.f32.mrb[0].mxu0
        %1705 = vmatprep.mubr.bf16.mxu0 0
        %1706 = vmatmul.mubr.bf16.gmra.mrb[0].mxu0 %v1483
        %v1707 = vpop.f32.mrb[0].mxu0
        %v1708 = vadd.f32 %v1257, %v1707
        %v1709 = vpop.f32.mrb[0].mxu0
        %v1710 = vpop.f32.mrb[0].mxu0
        %v1711 = vadd.f32 %v1257, %v1710
        %v1712 = vpop.f32.mrb[0].mxu0
        %1713 = vmatprep.mubr.bf16.mxu0 0
        %1714 = vmatmul.mubr.bf16.gmra.mrb[0].mxu0 %v1486
        %v1715 = vpop.f32.mrb[0].mxu0
        %v1716 = vadd.f32 %v1257, %v1715
        %v1717 = vpop.f32.mrb[0].mxu0
        %v1718 = vpop.f32.mrb[0].mxu0
        %v1719 = vadd.f32 %v1257, %v1718
        %v1720 = vpop.f32.mrb[0].mxu0
        %1721 = vmatprep.mubr.bf16.mxu0 0
        %1722 = vmatmul.mubr.bf16.gmra.mrb[0].mxu0 %v1489
        %v1723 = vpop.f32.mrb[0].mxu0
        %v1724 = vadd.f32 %v1257, %v1723
        %v1725 = vpop.f32.mrb[0].mxu0
        %v1726 = vpop.f32.mrb[0].mxu0
        %v1727 = vadd.f32 %v1257, %v1726
        %v1728 = vpop.f32.mrb[0].mxu0
        %1729 = vmatprep.mubr.bf16.mxu0 0
        %1730 = vmatmul.mubr.bf16.gmra.mrb[0].mxu0 %v1492
        %v1731 = vpop.f32.mrb[0].mxu0
        %v1732 = vadd.f32 %v1257, %v1731
        %v1733 = vpop.f32.mrb[0].mxu0
        %v1734 = vpop.f32.mrb[0].mxu0
        %v1735 = vadd.f32 %v1257, %v1734
        %v1736 = vpop.f32.mrb[0].mxu0
        %1737 = vmatprep.mubr.bf16.mxu0 0
        %1738 = vmatmul.mubr.bf16.gmra.mrb[0].mxu0 %v1495
        %v1739 = vpop.f32.mrb[0].mxu0
        %v1740 = vadd.f32 %v1257, %v1739
        %v1741 = vpop.f32.mrb[0].mxu0
        %v1742 = vpop.f32.mrb[0].mxu0
        %v1743 = vadd.f32 %v1257, %v1742
        %v1744 = vpop.f32.mrb[0].mxu0
        %1745 = vmatprep.mubr.bf16.mxu0 0
        %1746 = vmatmul.mubr.bf16.gmra.mrb[0].mxu0 %v1498
        %v1747 = vpop.f32.mrb[0].mxu0
        %v1748 = vadd.f32 %v1257, %v1747
        %v1749 = vpop.f32.mrb[0].mxu0
        %v1750 = vpop.f32.mrb[0].mxu0
        %v1751 = vadd.f32 %v1257, %v1750
        %v1752 = vpop.f32.mrb[0].mxu0
        %1753 = vmatprep.mubr.bf16.mxu0 0
        %1754 = vmatmul.mubr.bf16.gmra.mrb[0].mxu0 %v1501
        %v1755 = vpop.f32.mrb[0].mxu0
        %v1756 = vadd.f32 %v1257, %v1755
        %v1757 = vpop.f32.mrb[0].mxu0
        %v1758 = vpop.f32.mrb[0].mxu0
        %v1759 = vadd.f32 %v1257, %v1758
        %v1760 = vpop.f32.mrb[0].mxu0
        %1761 = vmatprep.mubr.bf16.mxu0 0
        %1762 = vmatmul.mubr.bf16.gmra.mrb[0].mxu0 %v1504
        %v1763 = vpop.f32.mrb[0].mxu0
        %v1764 = vadd.f32 %v1257, %v1763
        %v1765 = vpop.f32.mrb[0].mxu0
        %v1766 = vpop.f32.mrb[0].mxu0
        %v1767 = vadd.f32 %v1257, %v1766
        %v1768 = vpop.f32.mrb[0].mxu0
        %1769 = vmatprep.mubr.bf16.mxu0 0
        %1770 = vmatmul.mubr.bf16.gmra.mrb[0].mxu0 %v1507
        %v1771 = vpop.f32.mrb[0].mxu0
        %v1772 = vadd.f32 %v1257, %v1771
        %v1773 = vpop.f32.mrb[0].mxu0
        %v1774 = vpop.f32.mrb[0].mxu0
        %v1775 = vadd.f32 %v1257, %v1774
        %v1776 = vpop.f32.mrb[0].mxu0
        %1777 = vmatprep.mubr.bf16.mxu0 0
        %1778 = vmatmul.mubr.bf16.gmra.mrb[0].mxu0 %v1510
        %v1779 = vpop.f32.mrb[0].mxu0
        %v1780 = vadd.f32 %v1257, %v1779
        %v1781 = vpop.f32.mrb[0].mxu0
        %v1782 = vpop.f32.mrb[0].mxu0
        %v1783 = vadd.f32 %v1257, %v1782
        %v1784 = vpop.f32.mrb[0].mxu0
        %1785 = vmatprep.mubr.bf16.mxu0 0
        %1786 = vmatmul.mubr.bf16.gmra.mrb[0].mxu0 %v1513
        %v1787 = vpop.f32.mrb[0].mxu0
        %v1788 = vadd.f32 %v1257, %v1787
        %v1789 = vpop.f32.mrb[0].mxu0
        %v1790 = vpop.f32.mrb[0].mxu0
        %v1791 = vadd.f32 %v1257, %v1790
        %v1792 = vpop.f32.mrb[0].mxu0
        %1793 = vmatprep.mubr.bf16.mxu0 0
        %1794 = vmatmul.mubr.bf16.gmra.mrb[0].mxu0 %v1516
        %v1795 = vpop.f32.mrb[0].mxu0
        %v1796 = vadd.f32 %v1257, %v1795
        %v1797 = vpop.f32.mrb[0].mxu0
        %v1798 = vpop.f32.mrb[0].mxu0
        %v1799 = vadd.f32 %v1257, %v1798
        %v1800 = vpop.f32.mrb[0].mxu0
        %1801 = vmatprep.mubr.bf16.mxu0 0
        %1802 = vmatmul.mubr.bf16.gmra.mrb[0].mxu0 %v1519
        %v1803 = vpop.f32.mrb[0].mxu0
        %v1804 = vadd.f32 %v1257, %v1803
        %v1805 = vpop.f32.mrb[0].mxu0
        %v1806 = vpop.f32.mrb[0].mxu0
        %v1807 = vadd.f32 %v1257, %v1806
        %v1808 = vpop.f32.mrb[0].mxu0
        %1809 = vdwg.mxu0
        %v1810 = vld [vmem:[%s582] sm:$0xff]
        %v1811 = vld [vmem:[%s582 + $0x8] sm:$0xff]
        %v1812 = vld [vmem:[%s582 + $0x10] sm:$0xff]
        %v1813 = vld [vmem:[%s582 + $0x18] sm:$0xff]
        %v1814 = vld [vmem:[%s582 + $0x20] sm:$0xff]
        %v1815 = vld [vmem:[%s582 + $0x28] sm:$0xff]
        %v1816 = vld [vmem:[%s582 + $0x30] sm:$0xff]
        %v1817 = vld [vmem:[%s582 + $0x38] sm:$0xff]
        %v1818 = vld [vmem:[%s582 + $0x40] sm:$0xff]
        %v1819 = vld [vmem:[%s582 + $0x48] sm:$0xff]
        %v1820 = vld [vmem:[%s582 + $0x50] sm:$0xff]
        %v1821 = vld [vmem:[%s582 + $0x58] sm:$0xff]
        %v1822 = vld [vmem:[%s582 + $0x60] sm:$0xff]
        %v1823 = vld [vmem:[%s582 + $0x68] sm:$0xff]
        %v1824 = vld [vmem:[%s582 + $0x70] sm:$0xff]
        %v1825 = vld [vmem:[%s582 + $0x78] sm:$0xff]
        %v1826 = vld [vmem:[%s582 + $0x80] sm:$0xff]
        %v1827 = vld [vmem:[%s582 + $0x88] sm:$0xff]
        %v1828 = vld [vmem:[%s582 + $0x90] sm:$0xff]
        %v1829 = vld [vmem:[%s582 + $0x98] sm:$0xff]
        %v1830 = vld [vmem:[%s582 + $0xa0] sm:$0xff]
        %v1831 = vld [vmem:[%s582 + $0xa8] sm:$0xff]
        %v1832 = vld [vmem:[%s582 + $0xb0] sm:$0xff]
        %v1833 = vld [vmem:[%s582 + $0xb8] sm:$0xff]
        %v1834 = vld [vmem:[%s582 + $0xc0] sm:$0xff]
        %v1835 = vld [vmem:[%s582 + $0xc8] sm:$0xff]
        %v1836 = vld [vmem:[%s582 + $0xd0] sm:$0xff]
        %v1837 = vld [vmem:[%s582 + $0xd8] sm:$0xff]
        %v1838 = vld [vmem:[%s582 + $0xe0] sm:$0xff]
        %v1839 = vld [vmem:[%s582 + $0xe8] sm:$0xff]
        %v1840 = vld [vmem:[%s582 + $0xf0] sm:$0xff]
        %v1841 = vld [vmem:[%s582 + $0xf8] sm:$0xff]
        %v1842 = vld [vmem:[%s582 + $0x100] sm:$0xff]
        %v1843 = vld [vmem:[%s582 + $0x108] sm:$0xff]
        %v1844 = vld [vmem:[%s582 + $0x110] sm:$0xff]
        %v1845 = vld [vmem:[%s582 + $0x118] sm:$0xff]
        %v1846 = vld [vmem:[%s582 + $0x120] sm:$0xff]
        %v1847 = vld [vmem:[%s582 + $0x128] sm:$0xff]
        %v1848 = vld [vmem:[%s582 + $0x130] sm:$0xff]
        %v1849 = vld [vmem:[%s582 + $0x138] sm:$0xff]
        %v1850 = vld [vmem:[%s582 + $0x140] sm:$0xff]
        %v1851 = vld [vmem:[%s582 + $0x148] sm:$0xff]
        %v1852 = vld [vmem:[%s582 + $0x150] sm:$0xff]
        %v1853 = vld [vmem:[%s582 + $0x158] sm:$0xff]
        %v1854 = vld [vmem:[%s582 + $0x160] sm:$0xff]
        %v1855 = vld [vmem:[%s582 + $0x168] sm:$0xff]
        %v1856 = vld [vmem:[%s582 + $0x170] sm:$0xff]
        %v1857 = vld [vmem:[%s582 + $0x178] sm:$0xff]
        %v1858 = vld [vmem:[%s582 + $0x180] sm:$0xff]
        %v1859 = vld [vmem:[%s582 + $0x188] sm:$0xff]
        %v1860 = vld [vmem:[%s582 + $0x190] sm:$0xff]
        %v1861 = vld [vmem:[%s582 + $0x198] sm:$0xff]
        %v1862 = vld [vmem:[%s582 + $0x1a0] sm:$0xff]
        %v1863 = vld [vmem:[%s582 + $0x1a8] sm:$0xff]
        %v1864 = vld [vmem:[%s582 + $0x1b0] sm:$0xff]
        %v1865 = vld [vmem:[%s582 + $0x1b8] sm:$0xff]
        %v1866 = vld [vmem:[%s582 + $0x1c0] sm:$0xff]
        %v1867 = vld [vmem:[%s582 + $0x1c8] sm:$0xff]
        %v1868 = vld [vmem:[%s582 + $0x1d0] sm:$0xff]
        %v1869 = vld [vmem:[%s582 + $0x1d8] sm:$0xff]
        %v1870 = vld [vmem:[%s582 + $0x1e0] sm:$0xff]
        %v1871 = vld [vmem:[%s582 + $0x1e8] sm:$0xff]
        %v1872 = vld [vmem:[%s582 + $0x1f0] sm:$0xff]
        %v1873 = vld [vmem:[%s582 + $0x1f8] sm:$0xff]
        %v1874 = vpack.c.bf16 %v1559, %v1556
        %v1875 = vpack.c.bf16 %v1567, %v1564
        %v1876 = vpack.c.bf16 %v1575, %v1572
        %v1877 = vpack.c.bf16 %v1583, %v1580
        %v1878 = vpack.c.bf16 %v1591, %v1588
        %v1879 = vpack.c.bf16 %v1599, %v1596
        %v1880 = vpack.c.bf16 %v1607, %v1604
        %v1881 = vpack.c.bf16 %v1615, %v1612
        %v1882 = vpack.c.bf16 %v1623, %v1620
        %v1883 = vpack.c.bf16 %v1631, %v1628
        %v1884 = vpack.c.bf16 %v1639, %v1636
        %v1885 = vpack.c.bf16 %v1647, %v1644
        %v1886 = vpack.c.bf16 %v1655, %v1652
        %v1887 = vpack.c.bf16 %v1663, %v1660
        %v1888 = vpack.c.bf16 %v1671, %v1668
        %v1889 = vpack.c.bf16 %v1679, %v1676
        %v1890 = vpack.c.bf16 %v1687, %v1684
        %v1891 = vpack.c.bf16 %v1695, %v1692
        %v1892 = vpack.c.bf16 %v1703, %v1700
        %v1893 = vpack.c.bf16 %v1711, %v1708
        %v1894 = vpack.c.bf16 %v1719, %v1716
        %v1895 = vpack.c.bf16 %v1727, %v1724
        %v1896 = vpack.c.bf16 %v1735, %v1732
        %v1897 = vpack.c.bf16 %v1743, %v1740
        %v1898 = vpack.c.bf16 %v1751, %v1748
        %v1899 = vpack.c.bf16 %v1759, %v1756
        %v1900 = vpack.c.bf16 %v1767, %v1764
        %v1901 = vpack.c.bf16 %v1775, %v1772
        %v1902 = vpack.c.bf16 %v1783, %v1780
        %v1903 = vpack.c.bf16 %v1791, %v1788
        %v1904 = vpack.c.bf16 %v1799, %v1796
        %v1905 = vpack.c.bf16 %v1807, %v1804
        %v1970 = vunpack.c.l.b16 %v1810
        %v1971 = vunpack.c.h.b16 %v1810
        %v1972 = vunpack.c.l.b16 %v1811
        %v1973 = vunpack.c.h.b16 %v1811
        %v1974 = vunpack.c.l.b16 %v1812
        %v1975 = vunpack.c.h.b16 %v1812
        %v1976 = vunpack.c.l.b16 %v1813
        %v1977 = vunpack.c.h.b16 %v1813
        %v1978 = vunpack.c.l.b16 %v1814
        %v1979 = vunpack.c.h.b16 %v1814
        %v1980 = vunpack.c.l.b16 %v1815
        %v1981 = vunpack.c.h.b16 %v1815
        %v1982 = vunpack.c.l.b16 %v1816
        %v1983 = vunpack.c.h.b16 %v1816
        %v1984 = vunpack.c.l.b16 %v1817
        %v1985 = vunpack.c.h.b16 %v1817
        %v1986 = vunpack.c.l.b16 %v1818
        %v1987 = vunpack.c.h.b16 %v1818
        %v1988 = vunpack.c.l.b16 %v1819
        %v1989 = vunpack.c.h.b16 %v1819
        %v1990 = vunpack.c.l.b16 %v1820
        %v1991 = vunpack.c.h.b16 %v1820
        %v1992 = vunpack.c.l.b16 %v1821
        %v1993 = vunpack.c.h.b16 %v1821
        %v1994 = vunpack.c.l.b16 %v1822
        %v1995 = vunpack.c.h.b16 %v1822
        %v1996 = vunpack.c.l.b16 %v1823
        %v1997 = vunpack.c.h.b16 %v1823
        %v1998 = vunpack.c.l.b16 %v1824
        %v1999 = vunpack.c.h.b16 %v1824
        %v2000 = vunpack.c.l.b16 %v1825
        %v2001 = vunpack.c.h.b16 %v1825
        %v2002 = vunpack.c.l.b16 %v1826
        %v2003 = vunpack.c.h.b16 %v1826
        %v2004 = vunpack.c.l.b16 %v1827
        %v2005 = vunpack.c.h.b16 %v1827
        %v2006 = vunpack.c.l.b16 %v1828
        %v2007 = vunpack.c.h.b16 %v1828
        %v2008 = vunpack.c.l.b16 %v1829
        %v2009 = vunpack.c.h.b16 %v1829
        %v2010 = vunpack.c.l.b16 %v1830
        %v2011 = vunpack.c.h.b16 %v1830
        %v2012 = vunpack.c.l.b16 %v1831
        %v2013 = vunpack.c.h.b16 %v1831
        %v2014 = vunpack.c.l.b16 %v1832
        %v2015 = vunpack.c.h.b16 %v1832
        %v2016 = vunpack.c.l.b16 %v1833
        %v2017 = vunpack.c.h.b16 %v1833
        %v2018 = vunpack.c.l.b16 %v1834
        %v2019 = vunpack.c.h.b16 %v1834
        %v2020 = vunpack.c.l.b16 %v1835
        %v2021 = vunpack.c.h.b16 %v1835
        %v2022 = vunpack.c.l.b16 %v1836
        %v2023 = vunpack.c.h.b16 %v1836
        %v2024 = vunpack.c.l.b16 %v1837
        %v2025 = vunpack.c.h.b16 %v1837
        %v2026 = vunpack.c.l.b16 %v1838
        %v2027 = vunpack.c.h.b16 %v1838
        %v2028 = vunpack.c.l.b16 %v1839
        %v2029 = vunpack.c.h.b16 %v1839
        %v2030 = vunpack.c.l.b16 %v1840
        %v2031 = vunpack.c.h.b16 %v1840
        %v2032 = vunpack.c.l.b16 %v1841
        %v2033 = vunpack.c.h.b16 %v1841
        %v2034 = vunpack.c.l.b16 %v1842
        %v2035 = vunpack.c.h.b16 %v1842
        %v2036 = vunpack.c.l.b16 %v1843
        %v2037 = vunpack.c.h.b16 %v1843
        %v2038 = vunpack.c.l.b16 %v1844
        %v2039 = vunpack.c.h.b16 %v1844
        %v2040 = vunpack.c.l.b16 %v1845
        %v2041 = vunpack.c.h.b16 %v1845
        %v2042 = vunpack.c.l.b16 %v1846
        %v2043 = vunpack.c.h.b16 %v1846
        %v2044 = vunpack.c.l.b16 %v1847
        %v2045 = vunpack.c.h.b16 %v1847
        %v2046 = vunpack.c.l.b16 %v1848
        %v2047 = vunpack.c.h.b16 %v1848
        %v2048 = vunpack.c.l.b16 %v1849
        %v2049 = vunpack.c.h.b16 %v1849
        %v2050 = vunpack.c.l.b16 %v1850
        %v2051 = vunpack.c.h.b16 %v1850
        %v2052 = vunpack.c.l.b16 %v1851
        %v2053 = vunpack.c.h.b16 %v1851
        %v2054 = vunpack.c.l.b16 %v1852
        %v2055 = vunpack.c.h.b16 %v1852
        %v2056 = vunpack.c.l.b16 %v1853
        %v2057 = vunpack.c.h.b16 %v1853
        %v2058 = vunpack.c.l.b16 %v1854
        %v2059 = vunpack.c.h.b16 %v1854
        %v2060 = vunpack.c.l.b16 %v1855
        %v2061 = vunpack.c.h.b16 %v1855
        %v2062 = vunpack.c.l.b16 %v1856
        %v2063 = vunpack.c.h.b16 %v1856
        %v2064 = vunpack.c.l.b16 %v1857
        %v2065 = vunpack.c.h.b16 %v1857
        %v2066 = vunpack.c.l.b16 %v1858
        %v2067 = vunpack.c.h.b16 %v1858
        %v2068 = vunpack.c.l.b16 %v1859
        %v2069 = vunpack.c.h.b16 %v1859
        %v2070 = vunpack.c.l.b16 %v1860
        %v2071 = vunpack.c.h.b16 %v1860
        %v2072 = vunpack.c.l.b16 %v1861
        %v2073 = vunpack.c.h.b16 %v1861
        %v2074 = vunpack.c.l.b16 %v1862
        %v2075 = vunpack.c.h.b16 %v1862
        %v2076 = vunpack.c.l.b16 %v1863
        %v2077 = vunpack.c.h.b16 %v1863
        %v2078 = vunpack.c.l.b16 %v1864
        %v2079 = vunpack.c.h.b16 %v1864
        %v2080 = vunpack.c.l.b16 %v1865
        %v2081 = vunpack.c.h.b16 %v1865
        %v2082 = vunpack.c.l.b16 %v1866
        %v2083 = vunpack.c.h.b16 %v1866
        %v2084 = vunpack.c.l.b16 %v1867
        %v2085 = vunpack.c.h.b16 %v1867
        %v2086 = vunpack.c.l.b16 %v1868
        %v2087 = vunpack.c.h.b16 %v1868
        %v2088 = vunpack.c.l.b16 %v1869
        %v2089 = vunpack.c.h.b16 %v1869
        %v2090 = vunpack.c.l.b16 %v1870
        %v2091 = vunpack.c.h.b16 %v1870
        %v2092 = vunpack.c.l.b16 %v1871
        %v2093 = vunpack.c.h.b16 %v1871
        %v2094 = vunpack.c.l.b16 %v1872
        %v2095 = vunpack.c.h.b16 %v1872
        %v2096 = vunpack.c.l.b16 %v1873
        %v2097 = vunpack.c.h.b16 %v1873
        %v2098 = vpack.c.b16 %v1974, %v1970
        %v2099 = vpack.c.b16 %v1975, %v1971
        %v2100 = vpack.c.b16 %v1976, %v1972
        %v2101 = vpack.c.b16 %v1977, %v1973
        %v2102 = vpack.c.b16 %v1982, %v1978
        %v2103 = vpack.c.b16 %v1983, %v1979
        %v2104 = vpack.c.b16 %v1984, %v1980
        %v2105 = vpack.c.b16 %v1985, %v1981
        %v2106 = vpack.c.b16 %v1990, %v1986
        %v2107 = vpack.c.b16 %v1991, %v1987
        %v2108 = vpack.c.b16 %v1992, %v1988
        %v2109 = vpack.c.b16 %v1993, %v1989
        %v2110 = vpack.c.b16 %v1998, %v1994
        %v2111 = vpack.c.b16 %v1999, %v1995
        %v2112 = vpack.c.b16 %v2000, %v1996
        %v2113 = vpack.c.b16 %v2001, %v1997
        %v2114 = vpack.c.b16 %v2006, %v2002
        %v2115 = vpack.c.b16 %v2007, %v2003
        %v2116 = vpack.c.b16 %v2008, %v2004
        %v2117 = vpack.c.b16 %v2009, %v2005
        %v2118 = vpack.c.b16 %v2014, %v2010
        %v2119 = vpack.c.b16 %v2015, %v2011
        %v2120 = vpack.c.b16 %v2016, %v2012
        %v2121 = vpack.c.b16 %v2017, %v2013
        %v2122 = vpack.c.b16 %v2022, %v2018
        %v2123 = vpack.c.b16 %v2023, %v2019
        %v2124 = vpack.c.b16 %v2024, %v2020
        %v2125 = vpack.c.b16 %v2025, %v2021
        %v2126 = vpack.c.b16 %v2030, %v2026
        %v2127 = vpack.c.b16 %v2031, %v2027
        %v2128 = vpack.c.b16 %v2032, %v2028
        %v2129 = vpack.c.b16 %v2033, %v2029
        %v2130 = vpack.c.b16 %v2038, %v2034
        %v2131 = vpack.c.b16 %v2039, %v2035
        %v2132 = vpack.c.b16 %v2040, %v2036
        %v2133 = vpack.c.b16 %v2041, %v2037
        %v2134 = vpack.c.b16 %v2046, %v2042
        %v2135 = vpack.c.b16 %v2047, %v2043
        %v2136 = vpack.c.b16 %v2048, %v2044
        %v2137 = vpack.c.b16 %v2049, %v2045
        %v2138 = vpack.c.b16 %v2054, %v2050
        %v2139 = vpack.c.b16 %v2055, %v2051
        %v2140 = vpack.c.b16 %v2056, %v2052
        %v2141 = vpack.c.b16 %v2057, %v2053
        %v2142 = vpack.c.b16 %v2062, %v2058
        %v2143 = vpack.c.b16 %v2063, %v2059
        %v2144 = vpack.c.b16 %v2064, %v2060
        %v2145 = vpack.c.b16 %v2065, %v2061
        %v2146 = vpack.c.b16 %v2070, %v2066
        %v2147 = vpack.c.b16 %v2071, %v2067
        %v2148 = vpack.c.b16 %v2072, %v2068
        %v2149 = vpack.c.b16 %v2073, %v2069
        %v2150 = vpack.c.b16 %v2078, %v2074
        %v2151 = vpack.c.b16 %v2079, %v2075
        %v2152 = vpack.c.b16 %v2080, %v2076
        %v2153 = vpack.c.b16 %v2081, %v2077
        %v2154 = vpack.c.b16 %v2086, %v2082
        %v2155 = vpack.c.b16 %v2087, %v2083
        %v2156 = vpack.c.b16 %v2088, %v2084
        %v2157 = vpack.c.b16 %v2089, %v2085
        %v2158 = vpack.c.b16 %v2094, %v2090
        %v2159 = vpack.c.b16 %v2095, %v2091
        %v2160 = vpack.c.b16 %v2096, %v2092
        %v2161 = vpack.c.b16 %v2097, %v2093
        %2226 = vmatprep.subr.bf16.mxu0 0
        %2227 = vmatpush1.bf16.msra.mxu0 %v1874
        %2228 = vmatprep.subr.bf16.mxu0 0
        %2229 = vmatpush1.bf16.msra.mxu0 %v1875
        %2230 = vmatprep.subr.bf16.mxu0 0
        %2231 = vmatpush1.bf16.msra.mxu0 %v1876
        %2232 = vmatprep.subr.bf16.mxu0 0
        %2233 = vmatpush1.bf16.msra.mxu0 %v1877
        %2234 = vmatprep.subr.bf16.mxu0 0
        %2235 = vmatpush1.bf16.msra.mxu0 %v1878
        %2236 = vmatprep.subr.bf16.mxu0 0
        %2237 = vmatpush1.bf16.msra.mxu0 %v1879
        %2238 = vmatprep.subr.bf16.mxu0 0
        %2239 = vmatpush1.bf16.msra.mxu0 %v1880
        %2240 = vmatprep.subr.bf16.mxu0 0
        %2241 = vmatpush1.bf16.msra.mxu0 %v1881
        %2242 = vmatprep.subr.bf16.mxu0 0
        %2243 = vmatpush1.bf16.msra.mxu0 %v1882
        %2244 = vmatprep.subr.bf16.mxu0 0
        %2245 = vmatpush1.bf16.msra.mxu0 %v1883
        %2246 = vmatprep.subr.bf16.mxu0 0
        %2247 = vmatpush1.bf16.msra.mxu0 %v1884
        %2248 = vmatprep.subr.bf16.mxu0 0
        %2249 = vmatpush1.bf16.msra.mxu0 %v1885
        %2250 = vmatprep.subr.bf16.mxu0 0
        %2251 = vmatpush1.bf16.msra.mxu0 %v1886
        %2252 = vmatprep.subr.bf16.mxu0 0
        %2253 = vmatpush1.bf16.msra.mxu0 %v1887
        %2254 = vmatprep.subr.bf16.mxu0 0
        %2255 = vmatpush1.bf16.msra.mxu0 %v1888
        %2256 = vmatprep.subr.bf16.mxu0 0
        %2257 = vmatpush1.bf16.msra.mxu0 %v1889
        %2258 = vmatprep.mubr.bf16.mxu0 %v2099
        %2259 = vmatmul.mubr.bf16.gmra.mrb[0].mxu0 %v2098
        %v2260 = vpop.f32.mrb[0].mxu0
        %v2261 = vadd.f32 0.0, %v2260
        %v2262 = vpop.f32.mrb[0].mxu0
        %v2263 = vpop.f32.mrb[0].mxu0
        %v2264 = vadd.f32 0.0, %v2263
        %v2265 = vpop.f32.mrb[0].mxu0
        %2266 = vmatprep.mubr.bf16.mxu0 %v2103
        %2267 = vmatmul.mubr.bf16.gmra.mrb[0].mxu0 %v2102
        %v2268 = vpop.f32.mrb[0].mxu0
        %v2269 = vadd.f32 0.0, %v2268
        %v2270 = vpop.f32.mrb[0].mxu0
        %v2271 = vpop.f32.mrb[0].mxu0
        %v2272 = vadd.f32 0.0, %v2271
        %v2273 = vpop.f32.mrb[0].mxu0
        %2274 = vmatprep.mubr.bf16.mxu0 %v2107
        %2275 = vmatmul.mubr.bf16.gmra.mrb[0].mxu0 %v2106
        %v2276 = vpop.f32.mrb[0].mxu0
        %v2277 = vadd.f32 0.0, %v2276
        %v2278 = vpop.f32.mrb[0].mxu0
        %v2279 = vpop.f32.mrb[0].mxu0
        %v2280 = vadd.f32 0.0, %v2279
        %v2281 = vpop.f32.mrb[0].mxu0
        %2282 = vmatprep.mubr.bf16.mxu0 %v2111
        %2283 = vmatmul.mubr.bf16.gmra.mrb[0].mxu0 %v2110
        %v2284 = vpop.f32.mrb[0].mxu0
        %v2285 = vadd.f32 0.0, %v2284
        %v2286 = vpop.f32.mrb[0].mxu0
        %v2287 = vpop.f32.mrb[0].mxu0
        %v2288 = vadd.f32 0.0, %v2287
        %v2289 = vpop.f32.mrb[0].mxu0
        %2290 = vmatprep.mubr.bf16.mxu0 %v2115
        %2291 = vmatmul.mubr.bf16.gmra.mrb[0].mxu0 %v2114
        %v2292 = vpop.f32.mrb[0].mxu0
        %v2293 = vadd.f32 0.0, %v2292
        %v2294 = vpop.f32.mrb[0].mxu0
        %v2295 = vpop.f32.mrb[0].mxu0
        %v2296 = vadd.f32 0.0, %v2295
        %v2297 = vpop.f32.mrb[0].mxu0
        %2298 = vmatprep.mubr.bf16.mxu0 %v2119
        %2299 = vmatmul.mubr.bf16.gmra.mrb[0].mxu0 %v2118
        %v2300 = vpop.f32.mrb[0].mxu0
        %v2301 = vadd.f32 0.0, %v2300
        %v2302 = vpop.f32.mrb[0].mxu0
        %v2303 = vpop.f32.mrb[0].mxu0
        %v2304 = vadd.f32 0.0, %v2303
        %v2305 = vpop.f32.mrb[0].mxu0
        %2306 = vmatprep.mubr.bf16.mxu0 %v2123
        %2307 = vmatmul.mubr.bf16.gmra.mrb[0].mxu0 %v2122
        %v2308 = vpop.f32.mrb[0].mxu0
        %v2309 = vadd.f32 0.0, %v2308
        %v2310 = vpop.f32.mrb[0].mxu0
        %v2311 = vpop.f32.mrb[0].mxu0
        %v2312 = vadd.f32 0.0, %v2311
        %v2313 = vpop.f32.mrb[0].mxu0
        %2314 = vmatprep.mubr.bf16.mxu0 %v2127
        %2315 = vmatmul.mubr.bf16.gmra.mrb[0].mxu0 %v2126
        %v2316 = vpop.f32.mrb[0].mxu0
        %v2317 = vadd.f32 0.0, %v2316
        %v2318 = vpop.f32.mrb[0].mxu0
        %v2319 = vpop.f32.mrb[0].mxu0
        %v2320 = vadd.f32 0.0, %v2319
        %v2321 = vpop.f32.mrb[0].mxu0
        %2322 = vmatprep.mubr.bf16.mxu0 %v2131
        %2323 = vmatmul.mubr.bf16.gmra.mrb[0].mxu0 %v2130
        %v2324 = vpop.f32.mrb[0].mxu0
        %v2325 = vadd.f32 0.0, %v2324
        %v2326 = vpop.f32.mrb[0].mxu0
        %v2327 = vpop.f32.mrb[0].mxu0
        %v2328 = vadd.f32 0.0, %v2327
        %v2329 = vpop.f32.mrb[0].mxu0
        %2330 = vmatprep.mubr.bf16.mxu0 %v2135
        %2331 = vmatmul.mubr.bf16.gmra.mrb[0].mxu0 %v2134
        %v2332 = vpop.f32.mrb[0].mxu0
        %v2333 = vadd.f32 0.0, %v2332
        %v2334 = vpop.f32.mrb[0].mxu0
        %v2335 = vpop.f32.mrb[0].mxu0
        %v2336 = vadd.f32 0.0, %v2335
        %v2337 = vpop.f32.mrb[0].mxu0
        %2338 = vmatprep.mubr.bf16.mxu0 %v2139
        %2339 = vmatmul.mubr.bf16.gmra.mrb[0].mxu0 %v2138
        %v2340 = vpop.f32.mrb[0].mxu0
        %v2341 = vadd.f32 0.0, %v2340
        %v2342 = vpop.f32.mrb[0].mxu0
        %v2343 = vpop.f32.mrb[0].mxu0
        %v2344 = vadd.f32 0.0, %v2343
        %v2345 = vpop.f32.mrb[0].mxu0
        %2346 = vmatprep.mubr.bf16.mxu0 %v2143
        %2347 = vmatmul.mubr.bf16.gmra.mrb[0].mxu0 %v2142
        %v2348 = vpop.f32.mrb[0].mxu0
        %v2349 = vadd.f32 0.0, %v2348
        %v2350 = vpop.f32.mrb[0].mxu0
        %v2351 = vpop.f32.mrb[0].mxu0
        %v2352 = vadd.f32 0.0, %v2351
        %v2353 = vpop.f32.mrb[0].mxu0
        %2354 = vmatprep.mubr.bf16.mxu0 %v2147
        %2355 = vmatmul.mubr.bf16.gmra.mrb[0].mxu0 %v2146
        %v2356 = vpop.f32.mrb[0].mxu0
        %v2357 = vadd.f32 0.0, %v2356
        %v2358 = vpop.f32.mrb[0].mxu0
        %v2359 = vpop.f32.mrb[0].mxu0
        %v2360 = vadd.f32 0.0, %v2359
        %v2361 = vpop.f32.mrb[0].mxu0
        %2362 = vmatprep.mubr.bf16.mxu0 %v2151
        %2363 = vmatmul.mubr.bf16.gmra.mrb[0].mxu0 %v2150
        %v2364 = vpop.f32.mrb[0].mxu0
        %v2365 = vadd.f32 0.0, %v2364
        %v2366 = vpop.f32.mrb[0].mxu0
        %v2367 = vpop.f32.mrb[0].mxu0
        %v2368 = vadd.f32 0.0, %v2367
        %v2369 = vpop.f32.mrb[0].mxu0
        %2370 = vmatprep.mubr.bf16.mxu0 %v2155
        %2371 = vmatmul.mubr.bf16.gmra.mrb[0].mxu0 %v2154
        %v2372 = vpop.f32.mrb[0].mxu0
        %v2373 = vadd.f32 0.0, %v2372
        %v2374 = vpop.f32.mrb[0].mxu0
        %v2375 = vpop.f32.mrb[0].mxu0
        %v2376 = vadd.f32 0.0, %v2375
        %v2377 = vpop.f32.mrb[0].mxu0
        %2378 = vmatprep.mubr.bf16.mxu0 %v2159
        %2379 = vmatmul.mubr.bf16.gmra.mrb[0].mxu0 %v2158
        %v2380 = vpop.f32.mrb[0].mxu0
        %v2381 = vadd.f32 0.0, %v2380
        %v2382 = vpop.f32.mrb[0].mxu0
        %v2383 = vpop.f32.mrb[0].mxu0
        %v2384 = vadd.f32 0.0, %v2383
        %v2385 = vpop.f32.mrb[0].mxu0
        %2386 = vdwg.mxu0
        %2387 = vmatprep.subr.bf16.mxu0 0
        %2388 = vmatpush1.bf16.msra.mxu0 %v1890
        %2389 = vmatprep.subr.bf16.mxu0 0
        %2390 = vmatpush1.bf16.msra.mxu0 %v1891
        %2391 = vmatprep.subr.bf16.mxu0 0
        %2392 = vmatpush1.bf16.msra.mxu0 %v1892
        %2393 = vmatprep.subr.bf16.mxu0 0
        %2394 = vmatpush1.bf16.msra.mxu0 %v1893
        %2395 = vmatprep.subr.bf16.mxu0 0
        %2396 = vmatpush1.bf16.msra.mxu0 %v1894
        %2397 = vmatprep.subr.bf16.mxu0 0
        %2398 = vmatpush1.bf16.msra.mxu0 %v1895
        %2399 = vmatprep.subr.bf16.mxu0 0
        %2400 = vmatpush1.bf16.msra.mxu0 %v1896
        %2401 = vmatprep.subr.bf16.mxu0 0
        %2402 = vmatpush1.bf16.msra.mxu0 %v1897
        %2403 = vmatprep.subr.bf16.mxu0 0
        %2404 = vmatpush1.bf16.msra.mxu0 %v1898
        %2405 = vmatprep.subr.bf16.mxu0 0
        %2406 = vmatpush1.bf16.msra.mxu0 %v1899
        %2407 = vmatprep.subr.bf16.mxu0 0
        %2408 = vmatpush1.bf16.msra.mxu0 %v1900
        %2409 = vmatprep.subr.bf16.mxu0 0
        %2410 = vmatpush1.bf16.msra.mxu0 %v1901
        %2411 = vmatprep.subr.bf16.mxu0 0
        %2412 = vmatpush1.bf16.msra.mxu0 %v1902
        %2413 = vmatprep.subr.bf16.mxu0 0
        %2414 = vmatpush1.bf16.msra.mxu0 %v1903
        %2415 = vmatprep.subr.bf16.mxu0 0
        %2416 = vmatpush1.bf16.msra.mxu0 %v1904
        %2417 = vmatprep.subr.bf16.mxu0 0
        %2418 = vmatpush1.bf16.msra.mxu0 %v1905
        %2419 = vmatprep.mubr.bf16.mxu0 %v2101
        %2420 = vmatmul.mubr.bf16.gmra.mrb[0].mxu0 %v2100
        %v2421 = vpop.f32.mrb[0].mxu0
        %v2422 = vadd.f32 %v2261, %v2421
        %v2423 = vpop.f32.mrb[0].mxu0
        %v2424 = vpop.f32.mrb[0].mxu0
        %v2425 = vadd.f32 %v2264, %v2424
        %v2426 = vpop.f32.mrb[0].mxu0
        %2427 = vmatprep.mubr.bf16.mxu0 %v2105
        %2428 = vmatmul.mubr.bf16.gmra.mrb[0].mxu0 %v2104
        %v2429 = vpop.f32.mrb[0].mxu0
        %v2430 = vadd.f32 %v2269, %v2429
        %v2431 = vpop.f32.mrb[0].mxu0
        %v2432 = vpop.f32.mrb[0].mxu0
        %v2433 = vadd.f32 %v2272, %v2432
        %v2434 = vpop.f32.mrb[0].mxu0
        %2435 = vmatprep.mubr.bf16.mxu0 %v2109
        %2436 = vmatmul.mubr.bf16.gmra.mrb[0].mxu0 %v2108
        %v2437 = vpop.f32.mrb[0].mxu0
        %v2438 = vadd.f32 %v2277, %v2437
        %v2439 = vpop.f32.mrb[0].mxu0
        %v2440 = vpop.f32.mrb[0].mxu0
        %v2441 = vadd.f32 %v2280, %v2440
        %v2442 = vpop.f32.mrb[0].mxu0
        %2443 = vmatprep.mubr.bf16.mxu0 %v2113
        %2444 = vmatmul.mubr.bf16.gmra.mrb[0].mxu0 %v2112
        %v2445 = vpop.f32.mrb[0].mxu0
        %v2446 = vadd.f32 %v2285, %v2445
        %v2447 = vpop.f32.mrb[0].mxu0
        %v2448 = vpop.f32.mrb[0].mxu0
        %v2449 = vadd.f32 %v2288, %v2448
        %v2450 = vpop.f32.mrb[0].mxu0
        %2451 = vmatprep.mubr.bf16.mxu0 %v2117
        %2452 = vmatmul.mubr.bf16.gmra.mrb[0].mxu0 %v2116
        %v2453 = vpop.f32.mrb[0].mxu0
        %v2454 = vadd.f32 %v2293, %v2453
        %v2455 = vpop.f32.mrb[0].mxu0
        %v2456 = vpop.f32.mrb[0].mxu0
        %v2457 = vadd.f32 %v2296, %v2456
        %v2458 = vpop.f32.mrb[0].mxu0
        %2459 = vmatprep.mubr.bf16.mxu0 %v2121
        %2460 = vmatmul.mubr.bf16.gmra.mrb[0].mxu0 %v2120
        %v2461 = vpop.f32.mrb[0].mxu0
        %v2462 = vadd.f32 %v2301, %v2461
        %v2463 = vpop.f32.mrb[0].mxu0
        %v2464 = vpop.f32.mrb[0].mxu0
        %v2465 = vadd.f32 %v2304, %v2464
        %v2466 = vpop.f32.mrb[0].mxu0
        %2467 = vmatprep.mubr.bf16.mxu0 %v2125
        %2468 = vmatmul.mubr.bf16.gmra.mrb[0].mxu0 %v2124
        %v2469 = vpop.f32.mrb[0].mxu0
        %v2470 = vadd.f32 %v2309, %v2469
        %v2471 = vpop.f32.mrb[0].mxu0
        %v2472 = vpop.f32.mrb[0].mxu0
        %v2473 = vadd.f32 %v2312, %v2472
        %v2474 = vpop.f32.mrb[0].mxu0
        %2475 = vmatprep.mubr.bf16.mxu0 %v2129
        %2476 = vmatmul.mubr.bf16.gmra.mrb[0].mxu0 %v2128
        %v2477 = vpop.f32.mrb[0].mxu0
        %v2478 = vadd.f32 %v2317, %v2477
        %v2479 = vpop.f32.mrb[0].mxu0
        %v2480 = vpop.f32.mrb[0].mxu0
        %v2481 = vadd.f32 %v2320, %v2480
        %v2482 = vpop.f32.mrb[0].mxu0
        %2483 = vmatprep.mubr.bf16.mxu0 %v2133
        %2484 = vmatmul.mubr.bf16.gmra.mrb[0].mxu0 %v2132
        %v2485 = vpop.f32.mrb[0].mxu0
        %v2486 = vadd.f32 %v2325, %v2485
        %v2487 = vpop.f32.mrb[0].mxu0
        %v2488 = vpop.f32.mrb[0].mxu0
        %v2489 = vadd.f32 %v2328, %v2488
        %v2490 = vpop.f32.mrb[0].mxu0
        %2491 = vmatprep.mubr.bf16.mxu0 %v2137
        %2492 = vmatmul.mubr.bf16.gmra.mrb[0].mxu0 %v2136
        %v2493 = vpop.f32.mrb[0].mxu0
        %v2494 = vadd.f32 %v2333, %v2493
        %v2495 = vpop.f32.mrb[0].mxu0
        %v2496 = vpop.f32.mrb[0].mxu0
        %v2497 = vadd.f32 %v2336, %v2496
        %v2498 = vpop.f32.mrb[0].mxu0
        %2499 = vmatprep.mubr.bf16.mxu0 %v2141
        %2500 = vmatmul.mubr.bf16.gmra.mrb[0].mxu0 %v2140
        %v2501 = vpop.f32.mrb[0].mxu0
        %v2502 = vadd.f32 %v2341, %v2501
        %v2503 = vpop.f32.mrb[0].mxu0
        %v2504 = vpop.f32.mrb[0].mxu0
        %v2505 = vadd.f32 %v2344, %v2504
        %v2506 = vpop.f32.mrb[0].mxu0
        %2507 = vmatprep.mubr.bf16.mxu0 %v2145
        %2508 = vmatmul.mubr.bf16.gmra.mrb[0].mxu0 %v2144
        %v2509 = vpop.f32.mrb[0].mxu0
        %v2510 = vadd.f32 %v2349, %v2509
        %v2511 = vpop.f32.mrb[0].mxu0
        %v2512 = vpop.f32.mrb[0].mxu0
        %v2513 = vadd.f32 %v2352, %v2512
        %v2514 = vpop.f32.mrb[0].mxu0
        %2515 = vmatprep.mubr.bf16.mxu0 %v2149
        %2516 = vmatmul.mubr.bf16.gmra.mrb[0].mxu0 %v2148
        %v2517 = vpop.f32.mrb[0].mxu0
        %v2518 = vadd.f32 %v2357, %v2517
        %v2519 = vpop.f32.mrb[0].mxu0
        %v2520 = vpop.f32.mrb[0].mxu0
        %v2521 = vadd.f32 %v2360, %v2520
        %v2522 = vpop.f32.mrb[0].mxu0
        %2523 = vmatprep.mubr.bf16.mxu0 %v2153
        %2524 = vmatmul.mubr.bf16.gmra.mrb[0].mxu0 %v2152
        %v2525 = vpop.f32.mrb[0].mxu0
        %v2526 = vadd.f32 %v2365, %v2525
        %v2527 = vpop.f32.mrb[0].mxu0
        %v2528 = vpop.f32.mrb[0].mxu0
        %v2529 = vadd.f32 %v2368, %v2528
        %v2530 = vpop.f32.mrb[0].mxu0
        %2531 = vmatprep.mubr.bf16.mxu0 %v2157
        %2532 = vmatmul.mubr.bf16.gmra.mrb[0].mxu0 %v2156
        %v2533 = vpop.f32.mrb[0].mxu0
        %v2534 = vadd.f32 %v2373, %v2533
        %v2535 = vpop.f32.mrb[0].mxu0
        %v2536 = vpop.f32.mrb[0].mxu0
        %v2537 = vadd.f32 %v2376, %v2536
        %v2538 = vpop.f32.mrb[0].mxu0
        %2539 = vmatprep.mubr.bf16.mxu0 %v2161
        %2540 = vmatmul.mubr.bf16.gmra.mrb[0].mxu0 %v2160
        %v2541 = vpop.f32.mrb[0].mxu0
        %v2542 = vadd.f32 %v2381, %v2541
        %v2543 = vpop.f32.mrb[0].mxu0
        %v2544 = vpop.f32.mrb[0].mxu0
        %v2545 = vadd.f32 %v2384, %v2544
        %v2546 = vpop.f32.mrb[0].mxu0
        %2547 = vdwg.mxu0
        %v2548 = vadd.f32 %v1154, %v1155
        %v2549 = vadd.f32 %v2548, %v1156
        %v2550 = vadd.f32 %v2549, %v1157
        %v2551 = vadd.f32 %v2550, %v1158
        %v2552 = vadd.f32 %v2551, %v1159
        %v2553 = vadd.f32 %v2552, %v1160
        %v2554 = vadd.f32 %v2553, %v1161
        %v2555 = vadd.f32 %v2554, %v1162
        %v2556 = vadd.f32 %v2555, %v1163
        %v2557 = vadd.f32 %v2556, %v1164
        %v2558 = vadd.f32 %v2557, %v1165
        %v2559 = vadd.f32 %v2558, %v1166
        %v2560 = vadd.f32 %v2559, %v1167
        %v2561 = vadd.f32 %v2560, %v1168
        %v2562 = vadd.f32 %v2561, %v1169
        %v2563 = vadd.f32 %v2562, %v1170
        %v2564 = vadd.f32 %v2563, %v1171
        %v2565 = vadd.f32 %v2564, %v1172
        %v2566 = vadd.f32 %v2565, %v1173
        %v2567 = vadd.f32 %v2566, %v1174
        %v2568 = vadd.f32 %v2567, %v1175
        %v2569 = vadd.f32 %v2568, %v1176
        %v2570 = vadd.f32 %v2569, %v1177
        %v2571 = vadd.f32 %v2570, %v1178
        %v2572 = vadd.f32 %v2571, %v1179
        %v2573 = vadd.f32 %v2572, %v1180
        %v2574 = vadd.f32 %v2573, %v1181
        %v2575 = vadd.f32 %v2574, %v1182
        %v2576 = vadd.f32 %v2575, %v1183
        %v2577 = vadd.f32 %v2576, %v1184
        %v2578 = vadd.f32 %v2577, %v1185
        %v2579 = vrot.slane %v2578, 4
        %v2580 = vadd.f32 %v2578, %v2579
        %v2581 = vrot.slane %v2580, 2
        %v2582 = vadd.f32 %v2580, %v2581
        %v2583 = vrot.slane %v2582, 1
        %v2584 = vadd.f32 %v2582, %v2583
        %v2585 = vmul.f32 %v1154, %v1154
        %v2586 = vmul.f32 %v1155, %v1155
        %v2587 = vmul.f32 %v1156, %v1156
        %v2588 = vmul.f32 %v1157, %v1157
        %v2589 = vmul.f32 %v1158, %v1158
        %v2590 = vmul.f32 %v1159, %v1159
        %v2591 = vmul.f32 %v1160, %v1160
        %v2592 = vmul.f32 %v1161, %v1161
        %v2593 = vmul.f32 %v1162, %v1162
        %v2594 = vmul.f32 %v1163, %v1163
        %v2595 = vmul.f32 %v1164, %v1164
        %v2596 = vmul.f32 %v1165, %v1165
        %v2597 = vmul.f32 %v1166, %v1166
        %v2598 = vmul.f32 %v1167, %v1167
        %v2599 = vmul.f32 %v1168, %v1168
        %v2600 = vmul.f32 %v1169, %v1169
        %v2601 = vmul.f32 %v1170, %v1170
        %v2602 = vmul.f32 %v1171, %v1171
        %v2603 = vmul.f32 %v1172, %v1172
        %v2604 = vmul.f32 %v1173, %v1173
        %v2605 = vmul.f32 %v1174, %v1174
        %v2606 = vmul.f32 %v1175, %v1175
        %v2607 = vmul.f32 %v1176, %v1176
        %v2608 = vmul.f32 %v1177, %v1177
        %v2609 = vmul.f32 %v1178, %v1178
        %v2610 = vmul.f32 %v1179, %v1179
        %v2611 = vmul.f32 %v1180, %v1180
        %v2612 = vmul.f32 %v1181, %v1181
        %v2613 = vmul.f32 %v1182, %v1182
        %v2614 = vmul.f32 %v1183, %v1183
        %v2615 = vmul.f32 %v1184, %v1184
        %v2616 = vmul.f32 %v1185, %v1185
        %v2617 = vadd.f32 %v2585, %v2586
        %v2618 = vadd.f32 %v2617, %v2587
        %v2619 = vadd.f32 %v2618, %v2588
        %v2620 = vadd.f32 %v2619, %v2589
        %v2621 = vadd.f32 %v2620, %v2590
        %v2622 = vadd.f32 %v2621, %v2591
        %v2623 = vadd.f32 %v2622, %v2592
        %v2624 = vadd.f32 %v2623, %v2593
        %v2625 = vadd.f32 %v2624, %v2594
        %v2626 = vadd.f32 %v2625, %v2595
        %v2627 = vadd.f32 %v2626, %v2596
        %v2628 = vadd.f32 %v2627, %v2597
        %v2629 = vadd.f32 %v2628, %v2598
        %v2630 = vadd.f32 %v2629, %v2599
        %v2631 = vadd.f32 %v2630, %v2600
        %v2632 = vadd.f32 %v2631, %v2601
        %v2633 = vadd.f32 %v2632, %v2602
        %v2634 = vadd.f32 %v2633, %v2603
        %v2635 = vadd.f32 %v2634, %v2604
        %v2636 = vadd.f32 %v2635, %v2605
        %v2637 = vadd.f32 %v2636, %v2606
        %v2638 = vadd.f32 %v2637, %v2607
        %v2639 = vadd.f32 %v2638, %v2608
        %v2640 = vadd.f32 %v2639, %v2609
        %v2641 = vadd.f32 %v2640, %v2610
        %v2642 = vadd.f32 %v2641, %v2611
        %v2643 = vadd.f32 %v2642, %v2612
        %v2644 = vadd.f32 %v2643, %v2613
        %v2645 = vadd.f32 %v2644, %v2614
        %v2646 = vadd.f32 %v2645, %v2615
        %v2647 = vadd.f32 %v2646, %v2616
        %v2648 = vrot.slane %v2647, 4
        %v2649 = vadd.f32 %v2647, %v2648
        %v2650 = vrot.slane %v2649, 2
        %v2651 = vadd.f32 %v2649, %v2650
        %v2652 = vrot.slane %v2651, 1
        %v2653 = vadd.f32 %v2651, %v2652
        %v2654 = vstv %s680
        %v2655 = vmul.f32 %v2584, %v2654
        %v2656 = vmul.f32 %v2653, %v2654
        %v2657 = vmul.f32 %v2655, %v2655
        %v2658 = vsub.f32 %v2656, %v2657
        %v2659 = vmax.f32 %v2658, 0.0
        %v2660 = vadd.f32 %v2659, 1e-05
        %v2661 = vrsqrt.pop %v2660
        %v2662 = vmul.f32 %v2661, %v814
        %v2663 = vsub.f32 %v1154, %v2655
        %v2664 = vsub.f32 %v1155, %v2655
        %v2665 = vsub.f32 %v1156, %v2655
        %v2666 = vsub.f32 %v1157, %v2655
        %v2667 = vsub.f32 %v1158, %v2655
        %v2668 = vsub.f32 %v1159, %v2655
        %v2669 = vsub.f32 %v1160, %v2655
        %v2670 = vsub.f32 %v1161, %v2655
        %v2671 = vsub.f32 %v1162, %v2655
        %v2672 = vsub.f32 %v1163, %v2655
        %v2673 = vsub.f32 %v1164, %v2655
        %v2674 = vsub.f32 %v1165, %v2655
        %v2675 = vsub.f32 %v1166, %v2655
        %v2676 = vsub.f32 %v1167, %v2655
        %v2677 = vsub.f32 %v1168, %v2655
        %v2678 = vsub.f32 %v1169, %v2655
        %v2679 = vsub.f32 %v1170, %v2655
        %v2680 = vsub.f32 %v1171, %v2655
        %v2681 = vsub.f32 %v1172, %v2655
        %v2682 = vsub.f32 %v1173, %v2655
        %v2683 = vsub.f32 %v1174, %v2655
        %v2684 = vsub.f32 %v1175, %v2655
        %v2685 = vsub.f32 %v1176, %v2655
        %v2686 = vsub.f32 %v1177, %v2655
        %v2687 = vsub.f32 %v1178, %v2655
        %v2688 = vsub.f32 %v1179, %v2655
        %v2689 = vsub.f32 %v1180, %v2655
        %v2690 = vsub.f32 %v1181, %v2655
        %v2691 = vsub.f32 %v1182, %v2655
        %v2692 = vsub.f32 %v1183, %v2655
        %v2693 = vsub.f32 %v1184, %v2655
        %v2694 = vsub.f32 %v1185, %v2655
        %v2695 = vlaneseq
        %v2696 = vshrl.u32 %v2695, 7
        %v2697 = vsub.s32 0, %v2696
        %v2698 = vrot.slane %v2662, %v2697
        %v2699 = vmul.f32 %v2663, %v2698
        %v2700 = vmul.f32 %v2664, %v2698
        %v2701 = vmul.f32 %v2665, %v2698
        %v2702 = vmul.f32 %v2666, %v2698
        %v2703 = vmul.f32 %v2667, %v2698
        %v2704 = vmul.f32 %v2668, %v2698
        %v2705 = vmul.f32 %v2669, %v2698
        %v2706 = vmul.f32 %v2670, %v2698
        %v2707 = vmul.f32 %v2671, %v2698
        %v2708 = vmul.f32 %v2672, %v2698
        %v2709 = vmul.f32 %v2673, %v2698
        %v2710 = vmul.f32 %v2674, %v2698
        %v2711 = vmul.f32 %v2675, %v2698
        %v2712 = vmul.f32 %v2676, %v2698
        %v2713 = vmul.f32 %v2677, %v2698
        %v2714 = vmul.f32 %v2678, %v2698
        %v2715 = vmul.f32 %v2679, %v2698
        %v2716 = vmul.f32 %v2680, %v2698
        %v2717 = vmul.f32 %v2681, %v2698
        %v2718 = vmul.f32 %v2682, %v2698
        %v2719 = vmul.f32 %v2683, %v2698
        %v2720 = vmul.f32 %v2684, %v2698
        %v2721 = vmul.f32 %v2685, %v2698
        %v2722 = vmul.f32 %v2686, %v2698
        %v2723 = vmul.f32 %v2687, %v2698
        %v2724 = vmul.f32 %v2688, %v2698
        %v2725 = vmul.f32 %v2689, %v2698
        %v2726 = vmul.f32 %v2690, %v2698
        %v2727 = vmul.f32 %v2691, %v2698
        %v2728 = vmul.f32 %v2692, %v2698
        %v2729 = vmul.f32 %v2693, %v2698
        %v2730 = vmul.f32 %v2694, %v2698
        %v2731 = vlaneseq
        %v2732 = vshrl.u32 %v2731, 7
        %v2733 = vsub.s32 0, %v2732
        %v2734 = vrot.slane %v815, %v2733
        %v2735 = vadd.f32 %v2699, %v2734
        %v2736 = vadd.f32 %v2700, %v2734
        %v2737 = vadd.f32 %v2701, %v2734
        %v2738 = vadd.f32 %v2702, %v2734
        %v2739 = vadd.f32 %v2703, %v2734
        %v2740 = vadd.f32 %v2704, %v2734
        %v2741 = vadd.f32 %v2705, %v2734
        %v2742 = vadd.f32 %v2706, %v2734
        %v2743 = vadd.f32 %v2707, %v2734
        %v2744 = vadd.f32 %v2708, %v2734
        %v2745 = vadd.f32 %v2709, %v2734
        %v2746 = vadd.f32 %v2710, %v2734
        %v2747 = vadd.f32 %v2711, %v2734
        %v2748 = vadd.f32 %v2712, %v2734
        %v2749 = vadd.f32 %v2713, %v2734
        %v2750 = vadd.f32 %v2714, %v2734
        %v2751 = vadd.f32 %v2715, %v2734
        %v2752 = vadd.f32 %v2716, %v2734
        %v2753 = vadd.f32 %v2717, %v2734
        %v2754 = vadd.f32 %v2718, %v2734
        %v2755 = vadd.f32 %v2719, %v2734
        %v2756 = vadd.f32 %v2720, %v2734
        %v2757 = vadd.f32 %v2721, %v2734
        %v2758 = vadd.f32 %v2722, %v2734
        %v2759 = vadd.f32 %v2723, %v2734
        %v2760 = vadd.f32 %v2724, %v2734
        %v2761 = vadd.f32 %v2725, %v2734
        %v2762 = vadd.f32 %v2726, %v2734
        %v2763 = vadd.f32 %v2727, %v2734
        %v2764 = vadd.f32 %v2728, %v2734
        %v2765 = vadd.f32 %v2729, %v2734
        %v2766 = vadd.f32 %v2730, %v2734
        %v2767 = vpack.c.bf16 %v2736, %v2735
        %v2768 = vpack.c.bf16 %v2738, %v2737
        %v2769 = vpack.c.bf16 %v2740, %v2739
        %v2770 = vpack.c.bf16 %v2742, %v2741
        %v2771 = vpack.c.bf16 %v2744, %v2743
        %v2772 = vpack.c.bf16 %v2746, %v2745
        %v2773 = vpack.c.bf16 %v2748, %v2747
        %v2774 = vpack.c.bf16 %v2750, %v2749
        %v2775 = vpack.c.bf16 %v2752, %v2751
        %v2776 = vpack.c.bf16 %v2754, %v2753
        %v2777 = vpack.c.bf16 %v2756, %v2755
        %v2778 = vpack.c.bf16 %v2758, %v2757
        %v2779 = vpack.c.bf16 %v2760, %v2759
        %v2780 = vpack.c.bf16 %v2762, %v2761
        %v2781 = vpack.c.bf16 %v2764, %v2763
        %v2782 = vpack.c.bf16 %v2766, %v2765
        %v2783 = vld [vmem:[%s663] sm:$0xff]
        %v2784 = vld [vmem:[%s663 + $0x8] sm:$0xff]
        %v2785 = vld [vmem:[%s663 + $0x10] sm:$0xff]
        %v2786 = vld [vmem:[%s663 + $0x18] sm:$0xff]
        %v2787 = vld [vmem:[%s663 + $0x20] sm:$0xff]
        %v2788 = vld [vmem:[%s663 + $0x28] sm:$0xff]
        %v2789 = vld [vmem:[%s663 + $0x30] sm:$0xff]
        %v2790 = vld [vmem:[%s663 + $0x38] sm:$0xff]
        %v2791 = vld [vmem:[%s663 + $0x40] sm:$0xff]
        %v2792 = vld [vmem:[%s663 + $0x48] sm:$0xff]
        %v2793 = vld [vmem:[%s663 + $0x50] sm:$0xff]
        %v2794 = vld [vmem:[%s663 + $0x58] sm:$0xff]
        %v2795 = vld [vmem:[%s663 + $0x60] sm:$0xff]
        %v2796 = vld [vmem:[%s663 + $0x68] sm:$0xff]
        %v2797 = vld [vmem:[%s663 + $0x70] sm:$0xff]
        %v2798 = vld [vmem:[%s663 + $0x78] sm:$0xff]
        %v2799 = vld [vmem:[%s663 + $0x80] sm:$0xff]
        %v2800 = vld [vmem:[%s663 + $0x88] sm:$0xff]
        %v2801 = vld [vmem:[%s663 + $0x90] sm:$0xff]
        %v2802 = vld [vmem:[%s663 + $0x98] sm:$0xff]
        %v2803 = vld [vmem:[%s663 + $0xa0] sm:$0xff]
        %v2804 = vld [vmem:[%s663 + $0xa8] sm:$0xff]
        %v2805 = vld [vmem:[%s663 + $0xb0] sm:$0xff]
        %v2806 = vld [vmem:[%s663 + $0xb8] sm:$0xff]
        %v2807 = vld [vmem:[%s663 + $0xc0] sm:$0xff]
        %v2808 = vld [vmem:[%s663 + $0xc8] sm:$0xff]
        %v2809 = vld [vmem:[%s663 + $0xd0] sm:$0xff]
        %v2810 = vld [vmem:[%s663 + $0xd8] sm:$0xff]
        %v2811 = vld [vmem:[%s663 + $0xe0] sm:$0xff]
        %v2812 = vld [vmem:[%s663 + $0xe8] sm:$0xff]
        %v2813 = vld [vmem:[%s663 + $0xf0] sm:$0xff]
        %v2814 = vld [vmem:[%s663 + $0xf8] sm:$0xff]
        %v2847 = vunpack.c.l.b16 %v2783
        %v2848 = vunpack.c.h.b16 %v2783
        %v2849 = vunpack.c.l.b16 %v2784
        %v2850 = vunpack.c.h.b16 %v2784
        %v2851 = vunpack.c.l.b16 %v2785
        %v2852 = vunpack.c.h.b16 %v2785
        %v2853 = vunpack.c.l.b16 %v2786
        %v2854 = vunpack.c.h.b16 %v2786
        %v2855 = vunpack.c.l.b16 %v2787
        %v2856 = vunpack.c.h.b16 %v2787
        %v2857 = vunpack.c.l.b16 %v2788
        %v2858 = vunpack.c.h.b16 %v2788
        %v2859 = vunpack.c.l.b16 %v2789
        %v2860 = vunpack.c.h.b16 %v2789
        %v2861 = vunpack.c.l.b16 %v2790
        %v2862 = vunpack.c.h.b16 %v2790
        %v2863 = vunpack.c.l.b16 %v2791
        %v2864 = vunpack.c.h.b16 %v2791
        %v2865 = vunpack.c.l.b16 %v2792
        %v2866 = vunpack.c.h.b16 %v2792
        %v2867 = vunpack.c.l.b16 %v2793
        %v2868 = vunpack.c.h.b16 %v2793
        %v2869 = vunpack.c.l.b16 %v2794
        %v2870 = vunpack.c.h.b16 %v2794
        %v2871 = vunpack.c.l.b16 %v2795
        %v2872 = vunpack.c.h.b16 %v2795
        %v2873 = vunpack.c.l.b16 %v2796
        %v2874 = vunpack.c.h.b16 %v2796
        %v2875 = vunpack.c.l.b16 %v2797
        %v2876 = vunpack.c.h.b16 %v2797
        %v2877 = vunpack.c.l.b16 %v2798
        %v2878 = vunpack.c.h.b16 %v2798
        %v2879 = vunpack.c.l.b16 %v2799
        %v2880 = vunpack.c.h.b16 %v2799
        %v2881 = vunpack.c.l.b16 %v2800
        %v2882 = vunpack.c.h.b16 %v2800
        %v2883 = vunpack.c.l.b16 %v2801
        %v2884 = vunpack.c.h.b16 %v2801
        %v2885 = vunpack.c.l.b16 %v2802
        %v2886 = vunpack.c.h.b16 %v2802
        %v2887 = vunpack.c.l.b16 %v2803
        %v2888 = vunpack.c.h.b16 %v2803
        %v2889 = vunpack.c.l.b16 %v2804
        %v2890 = vunpack.c.h.b16 %v2804
        %v2891 = vunpack.c.l.b16 %v2805
        %v2892 = vunpack.c.h.b16 %v2805
        %v2893 = vunpack.c.l.b16 %v2806
        %v2894 = vunpack.c.h.b16 %v2806
        %v2895 = vunpack.c.l.b16 %v2807
        %v2896 = vunpack.c.h.b16 %v2807
        %v2897 = vunpack.c.l.b16 %v2808
        %v2898 = vunpack.c.h.b16 %v2808
        %v2899 = vunpack.c.l.b16 %v2809
        %v2900 = vunpack.c.h.b16 %v2809
        %v2901 = vunpack.c.l.b16 %v2810
        %v2902 = vunpack.c.h.b16 %v2810
        %v2903 = vunpack.c.l.b16 %v2811
        %v2904 = vunpack.c.h.b16 %v2811
        %v2905 = vunpack.c.l.b16 %v2812
        %v2906 = vunpack.c.h.b16 %v2812
        %v2907 = vunpack.c.l.b16 %v2813
        %v2908 = vunpack.c.h.b16 %v2813
        %v2909 = vunpack.c.l.b16 %v2814
        %v2910 = vunpack.c.h.b16 %v2814
        %v2911 = vpack.c.b16 %v2849, %v2847
        %v2912 = vpack.c.b16 %v2850, %v2848
        %v2913 = vpack.c.b16 %v2853, %v2851
        %v2914 = vpack.c.b16 %v2854, %v2852
        %v2915 = vpack.c.b16 %v2857, %v2855
        %v2916 = vpack.c.b16 %v2858, %v2856
        %v2917 = vpack.c.b16 %v2861, %v2859
        %v2918 = vpack.c.b16 %v2862, %v2860
        %v2919 = vpack.c.b16 %v2865, %v2863
        %v2920 = vpack.c.b16 %v2866, %v2864
        %v2921 = vpack.c.b16 %v2869, %v2867
        %v2922 = vpack.c.b16 %v2870, %v2868
        %v2923 = vpack.c.b16 %v2873, %v2871
        %v2924 = vpack.c.b16 %v2874, %v2872
        %v2925 = vpack.c.b16 %v2877, %v2875
        %v2926 = vpack.c.b16 %v2878, %v2876
        %v2927 = vpack.c.b16 %v2881, %v2879
        %v2928 = vpack.c.b16 %v2882, %v2880
        %v2929 = vpack.c.b16 %v2885, %v2883
        %v2930 = vpack.c.b16 %v2886, %v2884
        %v2931 = vpack.c.b16 %v2889, %v2887
        %v2932 = vpack.c.b16 %v2890, %v2888
        %v2933 = vpack.c.b16 %v2893, %v2891
        %v2934 = vpack.c.b16 %v2894, %v2892
        %v2935 = vpack.c.b16 %v2897, %v2895
        %v2936 = vpack.c.b16 %v2898, %v2896
        %v2937 = vpack.c.b16 %v2901, %v2899
        %v2938 = vpack.c.b16 %v2902, %v2900
        %v2939 = vpack.c.b16 %v2905, %v2903
        %v2940 = vpack.c.b16 %v2906, %v2904
        %v2941 = vpack.c.b16 %v2909, %v2907
        %v2942 = vpack.c.b16 %v2910, %v2908
        %2975 = vmatprep.subr.bf16.mxu0 0
        %2976 = vmatpush1.bf16.msra.mxu0 %v2767
        %2977 = vmatprep.subr.bf16.mxu0 0
        %2978 = vmatpush1.bf16.msra.mxu0 %v2768
        %2979 = vmatprep.subr.bf16.mxu0 0
        %2980 = vmatpush1.bf16.msra.mxu0 %v2769
        %2981 = vmatprep.subr.bf16.mxu0 0
        %2982 = vmatpush1.bf16.msra.mxu0 %v2770
        %2983 = vmatprep.subr.bf16.mxu0 0
        %2984 = vmatpush1.bf16.msra.mxu0 %v2771
        %2985 = vmatprep.subr.bf16.mxu0 0
        %2986 = vmatpush1.bf16.msra.mxu0 %v2772
        %2987 = vmatprep.subr.bf16.mxu0 0
        %2988 = vmatpush1.bf16.msra.mxu0 %v2773
        %2989 = vmatprep.subr.bf16.mxu0 0
        %2990 = vmatpush1.bf16.msra.mxu0 %v2774
        %2991 = vmatprep.subr.bf16.mxu0 0
        %2992 = vmatpush1.bf16.msra.mxu0 %v2775
        %2993 = vmatprep.subr.bf16.mxu0 0
        %2994 = vmatpush1.bf16.msra.mxu0 %v2776
        %2995 = vmatprep.subr.bf16.mxu0 0
        %2996 = vmatpush1.bf16.msra.mxu0 %v2777
        %2997 = vmatprep.subr.bf16.mxu0 0
        %2998 = vmatpush1.bf16.msra.mxu0 %v2778
        %2999 = vmatprep.subr.bf16.mxu0 0
        %3000 = vmatpush1.bf16.msra.mxu0 %v2779
        %3001 = vmatprep.subr.bf16.mxu0 0
        %3002 = vmatpush1.bf16.msra.mxu0 %v2780
        %3003 = vmatprep.subr.bf16.mxu0 0
        %3004 = vmatpush1.bf16.msra.mxu0 %v2781
        %3005 = vmatprep.subr.bf16.mxu0 0
        %3006 = vmatpush1.bf16.msra.mxu0 %v2782
        %3007 = vmatprep.mubr.bf16.mxu0 %v2912
        %3008 = vmatmul.mubr.bf16.gmra.mrb[0].mxu0 %v2911
        %v3009 = vpop.f32.mrb[0].mxu0
        %v3010 = vadd.f32 %v2422, %v3009
        %v3011 = vpop.f32.mrb[0].mxu0
        %v3012 = vpop.f32.mrb[0].mxu0
        %v3013 = vadd.f32 %v2425, %v3012
        %v3014 = vpop.f32.mrb[0].mxu0
        %3015 = vmatprep.mubr.bf16.mxu0 %v2914
        %3016 = vmatmul.mubr.bf16.gmra.mrb[0].mxu0 %v2913
        %v3017 = vpop.f32.mrb[0].mxu0
        %v3018 = vadd.f32 %v2430, %v3017
        %v3019 = vpop.f32.mrb[0].mxu0
        %v3020 = vpop.f32.mrb[0].mxu0
        %v3021 = vadd.f32 %v2433, %v3020
        %v3022 = vpop.f32.mrb[0].mxu0
        %3023 = vmatprep.mubr.bf16.mxu0 %v2916
        %3024 = vmatmul.mubr.bf16.gmra.mrb[0].mxu0 %v2915
        %v3025 = vpop.f32.mrb[0].mxu0
        %v3026 = vadd.f32 %v2438, %v3025
        %v3027 = vpop.f32.mrb[0].mxu0
        %v3028 = vpop.f32.mrb[0].mxu0
        %v3029 = vadd.f32 %v2441, %v3028
        %v3030 = vpop.f32.mrb[0].mxu0
        %3031 = vmatprep.mubr.bf16.mxu0 %v2918
        %3032 = vmatmul.mubr.bf16.gmra.mrb[0].mxu0 %v2917
        %v3033 = vpop.f32.mrb[0].mxu0
        %v3034 = vadd.f32 %v2446, %v3033
        %v3035 = vpop.f32.mrb[0].mxu0
        %v3036 = vpop.f32.mrb[0].mxu0
        %v3037 = vadd.f32 %v2449, %v3036
        %v3038 = vpop.f32.mrb[0].mxu0
        %3039 = vmatprep.mubr.bf16.mxu0 %v2920
        %3040 = vmatmul.mubr.bf16.gmra.mrb[0].mxu0 %v2919
        %v3041 = vpop.f32.mrb[0].mxu0
        %v3042 = vadd.f32 %v2454, %v3041
        %v3043 = vpop.f32.mrb[0].mxu0
        %v3044 = vpop.f32.mrb[0].mxu0
        %v3045 = vadd.f32 %v2457, %v3044
        %v3046 = vpop.f32.mrb[0].mxu0
        %3047 = vmatprep.mubr.bf16.mxu0 %v2922
        %3048 = vmatmul.mubr.bf16.gmra.mrb[0].mxu0 %v2921
        %v3049 = vpop.f32.mrb[0].mxu0
        %v3050 = vadd.f32 %v2462, %v3049
        %v3051 = vpop.f32.mrb[0].mxu0
        %v3052 = vpop.f32.mrb[0].mxu0
        %v3053 = vadd.f32 %v2465, %v3052
        %v3054 = vpop.f32.mrb[0].mxu0
        %3055 = vmatprep.mubr.bf16.mxu0 %v2924
        %3056 = vmatmul.mubr.bf16.gmra.mrb[0].mxu0 %v2923
        %v3057 = vpop.f32.mrb[0].mxu0
        %v3058 = vadd.f32 %v2470, %v3057
        %v3059 = vpop.f32.mrb[0].mxu0
        %v3060 = vpop.f32.mrb[0].mxu0
        %v3061 = vadd.f32 %v2473, %v3060
        %v3062 = vpop.f32.mrb[0].mxu0
        %3063 = vmatprep.mubr.bf16.mxu0 %v2926
        %3064 = vmatmul.mubr.bf16.gmra.mrb[0].mxu0 %v2925
        %v3065 = vpop.f32.mrb[0].mxu0
        %v3066 = vadd.f32 %v2478, %v3065
        %v3067 = vpop.f32.mrb[0].mxu0
        %v3068 = vpop.f32.mrb[0].mxu0
        %v3069 = vadd.f32 %v2481, %v3068
        %v3070 = vpop.f32.mrb[0].mxu0
        %3071 = vmatprep.mubr.bf16.mxu0 %v2928
        %3072 = vmatmul.mubr.bf16.gmra.mrb[0].mxu0 %v2927
        %v3073 = vpop.f32.mrb[0].mxu0
        %v3074 = vadd.f32 %v2486, %v3073
        %v3075 = vpop.f32.mrb[0].mxu0
        %v3076 = vpop.f32.mrb[0].mxu0
        %v3077 = vadd.f32 %v2489, %v3076
        %v3078 = vpop.f32.mrb[0].mxu0
        %3079 = vmatprep.mubr.bf16.mxu0 %v2930
        %3080 = vmatmul.mubr.bf16.gmra.mrb[0].mxu0 %v2929
        %v3081 = vpop.f32.mrb[0].mxu0
        %v3082 = vadd.f32 %v2494, %v3081
        %v3083 = vpop.f32.mrb[0].mxu0
        %v3084 = vpop.f32.mrb[0].mxu0
        %v3085 = vadd.f32 %v2497, %v3084
        %v3086 = vpop.f32.mrb[0].mxu0
        %3087 = vmatprep.mubr.bf16.mxu0 %v2932
        %3088 = vmatmul.mubr.bf16.gmra.mrb[0].mxu0 %v2931
        %v3089 = vpop.f32.mrb[0].mxu0
        %v3090 = vadd.f32 %v2502, %v3089
        %v3091 = vpop.f32.mrb[0].mxu0
        %v3092 = vpop.f32.mrb[0].mxu0
        %v3093 = vadd.f32 %v2505, %v3092
        %v3094 = vpop.f32.mrb[0].mxu0
        %3095 = vmatprep.mubr.bf16.mxu0 %v2934
        %3096 = vmatmul.mubr.bf16.gmra.mrb[0].mxu0 %v2933
        %v3097 = vpop.f32.mrb[0].mxu0
        %v3098 = vadd.f32 %v2510, %v3097
        %v3099 = vpop.f32.mrb[0].mxu0
        %v3100 = vpop.f32.mrb[0].mxu0
        %v3101 = vadd.f32 %v2513, %v3100
        %v3102 = vpop.f32.mrb[0].mxu0
        %3103 = vmatprep.mubr.bf16.mxu0 %v2936
        %3104 = vmatmul.mubr.bf16.gmra.mrb[0].mxu0 %v2935
        %v3105 = vpop.f32.mrb[0].mxu0
        %v3106 = vadd.f32 %v2518, %v3105
        %v3107 = vpop.f32.mrb[0].mxu0
        %v3108 = vpop.f32.mrb[0].mxu0
        %v3109 = vadd.f32 %v2521, %v3108
        %v3110 = vpop.f32.mrb[0].mxu0
        %3111 = vmatprep.mubr.bf16.mxu0 %v2938
        %3112 = vmatmul.mubr.bf16.gmra.mrb[0].mxu0 %v2937
        %v3113 = vpop.f32.mrb[0].mxu0
        %v3114 = vadd.f32 %v2526, %v3113
        %v3115 = vpop.f32.mrb[0].mxu0
        %v3116 = vpop.f32.mrb[0].mxu0
        %v3117 = vadd.f32 %v2529, %v3116
        %v3118 = vpop.f32.mrb[0].mxu0
        %3119 = vmatprep.mubr.bf16.mxu0 %v2940
        %3120 = vmatmul.mubr.bf16.gmra.mrb[0].mxu0 %v2939
        %v3121 = vpop.f32.mrb[0].mxu0
        %v3122 = vadd.f32 %v2534, %v3121
        %v3123 = vpop.f32.mrb[0].mxu0
        %v3124 = vpop.f32.mrb[0].mxu0
        %v3125 = vadd.f32 %v2537, %v3124
        %v3126 = vpop.f32.mrb[0].mxu0
        %3127 = vmatprep.mubr.bf16.mxu0 %v2942
        %3128 = vmatmul.mubr.bf16.gmra.mrb[0].mxu0 %v2941
        %v3129 = vpop.f32.mrb[0].mxu0
        %v3130 = vadd.f32 %v2542, %v3129
        %v3131 = vpop.f32.mrb[0].mxu0
        %v3132 = vpop.f32.mrb[0].mxu0
        %v3133 = vadd.f32 %v2545, %v3132
        %v3134 = vpop.f32.mrb[0].mxu0
        %3135 = vdwg.mxu0
        %v3136 = vstv %s811
        %v3137 = vmul.f32 %v3136, %v2735
        %v3138 = vmul.f32 %v3136, %v2736
        %v3139 = vmul.f32 %v3136, %v2737
        %v3140 = vmul.f32 %v3136, %v2738
        %v3141 = vmul.f32 %v3136, %v2739
        %v3142 = vmul.f32 %v3136, %v2740
        %v3143 = vmul.f32 %v3136, %v2741
        %v3144 = vmul.f32 %v3136, %v2742
        %v3145 = vmul.f32 %v3136, %v2743
        %v3146 = vmul.f32 %v3136, %v2744
        %v3147 = vmul.f32 %v3136, %v2745
        %v3148 = vmul.f32 %v3136, %v2746
        %v3149 = vmul.f32 %v3136, %v2747
        %v3150 = vmul.f32 %v3136, %v2748
        %v3151 = vmul.f32 %v3136, %v2749
        %v3152 = vmul.f32 %v3136, %v2750
        %v3153 = vmul.f32 %v3136, %v2751
        %v3154 = vmul.f32 %v3136, %v2752
        %v3155 = vmul.f32 %v3136, %v2753
        %v3156 = vmul.f32 %v3136, %v2754
        %v3157 = vmul.f32 %v3136, %v2755
        %v3158 = vmul.f32 %v3136, %v2756
        %v3159 = vmul.f32 %v3136, %v2757
        %v3160 = vmul.f32 %v3136, %v2758
        %v3161 = vmul.f32 %v3136, %v2759
        %v3162 = vmul.f32 %v3136, %v2760
        %v3163 = vmul.f32 %v3136, %v2761
        %v3164 = vmul.f32 %v3136, %v2762
        %v3165 = vmul.f32 %v3136, %v2763
        %v3166 = vmul.f32 %v3136, %v2764
        %v3167 = vmul.f32 %v3136, %v2765
        %v3168 = vmul.f32 %v3136, %v2766
        %v3169 = vadd.f32 %v3137, %v3010
        %v3170 = vadd.f32 %v3138, %v3013
        %v3171 = vadd.f32 %v3139, %v3018
        %v3172 = vadd.f32 %v3140, %v3021
        %v3173 = vadd.f32 %v3141, %v3026
        %v3174 = vadd.f32 %v3142, %v3029
        %v3175 = vadd.f32 %v3143, %v3034
        %v3176 = vadd.f32 %v3144, %v3037
        %v3177 = vadd.f32 %v3145, %v3042
        %v3178 = vadd.f32 %v3146, %v3045
        %v3179 = vadd.f32 %v3147, %v3050
        %v3180 = vadd.f32 %v3148, %v3053
        %v3181 = vadd.f32 %v3149, %v3058
        %v3182 = vadd.f32 %v3150, %v3061
        %v3183 = vadd.f32 %v3151, %v3066
        %v3184 = vadd.f32 %v3152, %v3069
        %v3185 = vadd.f32 %v3153, %v3074
        %v3186 = vadd.f32 %v3154, %v3077
        %v3187 = vadd.f32 %v3155, %v3082
        %v3188 = vadd.f32 %v3156, %v3085
        %v3189 = vadd.f32 %v3157, %v3090
        %v3190 = vadd.f32 %v3158, %v3093
        %v3191 = vadd.f32 %v3159, %v3098
        %v3192 = vadd.f32 %v3160, %v3101
        %v3193 = vadd.f32 %v3161, %v3106
        %v3194 = vadd.f32 %v3162, %v3109
        %v3195 = vadd.f32 %v3163, %v3114
        %v3196 = vadd.f32 %v3164, %v3117
        %v3197 = vadd.f32 %v3165, %v3122
        %v3198 = vadd.f32 %v3166, %v3125
        %v3199 = vadd.f32 %v3167, %v3130
        %v3200 = vadd.f32 %v3168, %v3133
        %v3201 = vpack.c.bf16 %v3170, %v3169
        %v3202 = vpack.c.bf16 %v3172, %v3171
        %v3203 = vpack.c.bf16 %v3174, %v3173
        %v3204 = vpack.c.bf16 %v3176, %v3175
        %v3205 = vpack.c.bf16 %v3178, %v3177
        %v3206 = vpack.c.bf16 %v3180, %v3179
        %v3207 = vpack.c.bf16 %v3182, %v3181
        %v3208 = vpack.c.bf16 %v3184, %v3183
        %v3209 = vpack.c.bf16 %v3186, %v3185
        %v3210 = vpack.c.bf16 %v3188, %v3187
        %v3211 = vpack.c.bf16 %v3190, %v3189
        %v3212 = vpack.c.bf16 %v3192, %v3191
        %v3213 = vpack.c.bf16 %v3194, %v3193
        %v3214 = vpack.c.bf16 %v3196, %v3195
        %v3215 = vpack.c.bf16 %v3198, %v3197
        %v3216 = vpack.c.bf16 %v3200, %v3199
        %v3217 = vld [vmem:[%s13] sm:$0xf]
        %v3218 = vld [vmem:[%s13 + $0x4] sm:$0xf]
        %v3219 = vld [vmem:[%s13 + $0x8] sm:$0xf]
        %v3220 = vld [vmem:[%s13 + $0xc] sm:$0xf]
        %v3221 = vld [vmem:[%s13 + $0x10] sm:$0xf]
        %v3222 = vld [vmem:[%s13 + $0x14] sm:$0xf]
        %v3223 = vld [vmem:[%s13 + $0x18] sm:$0xf]
        %v3224 = vld [vmem:[%s13 + $0x1c] sm:$0xf]
        %v3225 = vld [vmem:[%s13 + $0x20] sm:$0xf]
        %v3226 = vld [vmem:[%s13 + $0x24] sm:$0xf]
        %v3227 = vld [vmem:[%s13 + $0x28] sm:$0xf]
        %v3228 = vld [vmem:[%s13 + $0x2c] sm:$0xf]
        %v3229 = vld [vmem:[%s13 + $0x30] sm:$0xf]
        %v3230 = vld [vmem:[%s13 + $0x34] sm:$0xf]
        %v3231 = vld [vmem:[%s13 + $0x38] sm:$0xf]
        %v3232 = vld [vmem:[%s13 + $0x3c] sm:$0xf]
        %v3233 = vlaneseq
        %v3234 = vshrl.u32 %v3233, 7
        %v3235 = vsub.s32 0, %v3234
        %v3236 = vrot.slane %v816, %v3235
        %v3253 = vunpack.c.l.b16 %v3217
        %v3254 = vunpack.c.l.b16 %v3218
        %v3255 = vunpack.c.l.b16 %v3219
        %v3256 = vunpack.c.l.b16 %v3220
        %v3257 = vunpack.c.l.b16 %v3221
        %v3258 = vunpack.c.l.b16 %v3222
        %v3259 = vunpack.c.l.b16 %v3223
        %v3260 = vunpack.c.l.b16 %v3224
        %v3261 = vunpack.c.l.b16 %v3225
        %v3262 = vunpack.c.l.b16 %v3226
        %v3263 = vunpack.c.l.b16 %v3227
        %v3264 = vunpack.c.l.b16 %v3228
        %v3265 = vunpack.c.l.b16 %v3229
        %v3266 = vunpack.c.l.b16 %v3230
        %v3267 = vunpack.c.l.b16 %v3231
        %v3268 = vunpack.c.l.b16 %v3232
        %v3269 = vpack.c.b16 %v3254, %v3253
        %v3270 = vpack.c.b16 %v3256, %v3255
        %v3271 = vpack.c.b16 %v3258, %v3257
        %v3272 = vpack.c.b16 %v3260, %v3259
        %v3273 = vpack.c.b16 %v3262, %v3261
        %v3274 = vpack.c.b16 %v3264, %v3263
        %v3275 = vpack.c.b16 %v3266, %v3265
        %v3276 = vpack.c.b16 %v3268, %v3267
        %3285 = vmatprep.subr.bf16.mxu0 0
        %3286 = vmatpush1.bf16.msra.mxu0 %v3269
        %3287 = vmatprep.subr.bf16.mxu0 0
        %3288 = vmatpush1.bf16.msra.mxu0 %v3270
        %3289 = vmatprep.subr.bf16.mxu0 0
        %3290 = vmatpush1.bf16.msra.mxu0 %v3271
        %3291 = vmatprep.subr.bf16.mxu0 0
        %3292 = vmatpush1.bf16.msra.mxu0 %v3272
        %3293 = vmatprep.subr.bf16.mxu0 0
        %3294 = vmatpush1.bf16.msra.mxu0 %v3273
        %3295 = vmatprep.subr.bf16.mxu0 0
        %3296 = vmatpush1.bf16.msra.mxu0 %v3274
        %3297 = vmatprep.subr.bf16.mxu0 0
        %3298 = vmatpush1.bf16.msra.mxu0 %v3275
        %3299 = vmatprep.subr.bf16.mxu0 0
        %3300 = vmatpush1.bf16.msra.mxu0 %v3276
        %3301 = vmatprep.subr.bf16.mxu0 0
        %3302 = vmatpush1.bf16.msra.mxu0 0
        %3303 = vmatprep.subr.bf16.mxu0 0
        %3304 = vmatpush1.bf16.msra.mxu0 0
        %3305 = vmatprep.subr.bf16.mxu0 0
        %3306 = vmatpush1.bf16.msra.mxu0 0
        %3307 = vmatprep.subr.bf16.mxu0 0
        %3308 = vmatpush1.bf16.msra.mxu0 0
        %3309 = vmatprep.subr.bf16.mxu0 0
        %3310 = vmatpush1.bf16.msra.mxu0 0
        %3311 = vmatprep.subr.bf16.mxu0 0
        %3312 = vmatpush1.bf16.msra.mxu0 0
        %3313 = vmatprep.subr.bf16.mxu0 0
        %3314 = vmatpush1.bf16.msra.mxu0 0
        %3315 = vmatprep.subr.bf16.mxu0 0
        %3316 = vmatpush1.bf16.msra.mxu0 0
        %3317 = vmatprep.mubr.bf16.mxu0 0
        %3318 = vmatmul.mubr.bf16.gmra.mrb[0].mxu0 %v3201
        %v3319 = vpop.f32.mrb[0].mxu0
        %v3320 = vadd.f32 %v3236, %v3319
        %v3321 = vpop.f32.mrb[0].mxu0
        %v3322 = vpop.f32.mrb[0].mxu0
        %v3323 = vadd.f32 %v3236, %v3322
        %v3324 = vpop.f32.mrb[0].mxu0
        %3325 = vmatprep.mubr.bf16.mxu0 0
        %3326 = vmatmul.mubr.bf16.gmra.mrb[0].mxu0 %v3202
        %v3327 = vpop.f32.mrb[0].mxu0
        %v3328 = vadd.f32 %v3236, %v3327
        %v3329 = vpop.f32.mrb[0].mxu0
        %v3330 = vpop.f32.mrb[0].mxu0
        %v3331 = vadd.f32 %v3236, %v3330
        %v3332 = vpop.f32.mrb[0].mxu0
        %3333 = vmatprep.mubr.bf16.mxu0 0
        %3334 = vmatmul.mubr.bf16.gmra.mrb[0].mxu0 %v3203
        %v3335 = vpop.f32.mrb[0].mxu0
        %v3336 = vadd.f32 %v3236, %v3335
        %v3337 = vpop.f32.mrb[0].mxu0
        %v3338 = vpop.f32.mrb[0].mxu0
        %v3339 = vadd.f32 %v3236, %v3338
        %v3340 = vpop.f32.mrb[0].mxu0
        %3341 = vmatprep.mubr.bf16.mxu0 0
        %3342 = vmatmul.mubr.bf16.gmra.mrb[0].mxu0 %v3204
        %v3343 = vpop.f32.mrb[0].mxu0
        %v3344 = vadd.f32 %v3236, %v3343
        %v3345 = vpop.f32.mrb[0].mxu0
        %v3346 = vpop.f32.mrb[0].mxu0
        %v3347 = vadd.f32 %v3236, %v3346
        %v3348 = vpop.f32.mrb[0].mxu0
        %3349 = vmatprep.mubr.bf16.mxu0 0
        %3350 = vmatmul.mubr.bf16.gmra.mrb[0].mxu0 %v3205
        %v3351 = vpop.f32.mrb[0].mxu0
        %v3352 = vadd.f32 %v3236, %v3351
        %v3353 = vpop.f32.mrb[0].mxu0
        %v3354 = vpop.f32.mrb[0].mxu0
        %v3355 = vadd.f32 %v3236, %v3354
        %v3356 = vpop.f32.mrb[0].mxu0
        %3357 = vmatprep.mubr.bf16.mxu0 0
        %3358 = vmatmul.mubr.bf16.gmra.mrb[0].mxu0 %v3206
        %v3359 = vpop.f32.mrb[0].mxu0
        %v3360 = vadd.f32 %v3236, %v3359
        %v3361 = vpop.f32.mrb[0].mxu0
        %v3362 = vpop.f32.mrb[0].mxu0
        %v3363 = vadd.f32 %v3236, %v3362
        %v3364 = vpop.f32.mrb[0].mxu0
        %3365 = vmatprep.mubr.bf16.mxu0 0
        %3366 = vmatmul.mubr.bf16.gmra.mrb[0].mxu0 %v3207
        %v3367 = vpop.f32.mrb[0].mxu0
        %v3368 = vadd.f32 %v3236, %v3367
        %v3369 = vpop.f32.mrb[0].mxu0
        %v3370 = vpop.f32.mrb[0].mxu0
        %v3371 = vadd.f32 %v3236, %v3370
        %v3372 = vpop.f32.mrb[0].mxu0
        %3373 = vmatprep.mubr.bf16.mxu0 0
        %3374 = vmatmul.mubr.bf16.gmra.mrb[0].mxu0 %v3208
        %v3375 = vpop.f32.mrb[0].mxu0
        %v3376 = vadd.f32 %v3236, %v3375
        %v3377 = vpop.f32.mrb[0].mxu0
        %v3378 = vpop.f32.mrb[0].mxu0
        %v3379 = vadd.f32 %v3236, %v3378
        %v3380 = vpop.f32.mrb[0].mxu0
        %3381 = vmatprep.mubr.bf16.mxu0 0
        %3382 = vmatmul.mubr.bf16.gmra.mrb[0].mxu0 %v3209
        %v3383 = vpop.f32.mrb[0].mxu0
        %v3384 = vadd.f32 %v3236, %v3383
        %v3385 = vpop.f32.mrb[0].mxu0
        %v3386 = vpop.f32.mrb[0].mxu0
        %v3387 = vadd.f32 %v3236, %v3386
        %v3388 = vpop.f32.mrb[0].mxu0
        %3389 = vmatprep.mubr.bf16.mxu0 0
        %3390 = vmatmul.mubr.bf16.gmra.mrb[0].mxu0 %v3210
        %v3391 = vpop.f32.mrb[0].mxu0
        %v3392 = vadd.f32 %v3236, %v3391
        %v3393 = vpop.f32.mrb[0].mxu0
        %v3394 = vpop.f32.mrb[0].mxu0
        %v3395 = vadd.f32 %v3236, %v3394
        %v3396 = vpop.f32.mrb[0].mxu0
        %3397 = vmatprep.mubr.bf16.mxu0 0
        %3398 = vmatmul.mubr.bf16.gmra.mrb[0].mxu0 %v3211
        %v3399 = vpop.f32.mrb[0].mxu0
        %v3400 = vadd.f32 %v3236, %v3399
        %v3401 = vpop.f32.mrb[0].mxu0
        %v3402 = vpop.f32.mrb[0].mxu0
        %v3403 = vadd.f32 %v3236, %v3402
        %v3404 = vpop.f32.mrb[0].mxu0
        %3405 = vmatprep.mubr.bf16.mxu0 0
        %3406 = vmatmul.mubr.bf16.gmra.mrb[0].mxu0 %v3212
        %v3407 = vpop.f32.mrb[0].mxu0
        %v3408 = vadd.f32 %v3236, %v3407
        %v3409 = vpop.f32.mrb[0].mxu0
        %v3410 = vpop.f32.mrb[0].mxu0
        %v3411 = vadd.f32 %v3236, %v3410
        %v3412 = vpop.f32.mrb[0].mxu0
        %3413 = vmatprep.mubr.bf16.mxu0 0
        %3414 = vmatmul.mubr.bf16.gmra.mrb[0].mxu0 %v3213
        %v3415 = vpop.f32.mrb[0].mxu0
        %v3416 = vadd.f32 %v3236, %v3415
        %v3417 = vpop.f32.mrb[0].mxu0
        %v3418 = vpop.f32.mrb[0].mxu0
        %v3419 = vadd.f32 %v3236, %v3418
        %v3420 = vpop.f32.mrb[0].mxu0
        %3421 = vmatprep.mubr.bf16.mxu0 0
        %3422 = vmatmul.mubr.bf16.gmra.mrb[0].mxu0 %v3214
        %v3423 = vpop.f32.mrb[0].mxu0
        %v3424 = vadd.f32 %v3236, %v3423
        %v3425 = vpop.f32.mrb[0].mxu0
        %v3426 = vpop.f32.mrb[0].mxu0
        %v3427 = vadd.f32 %v3236, %v3426
        %v3428 = vpop.f32.mrb[0].mxu0
        %3429 = vmatprep.mubr.bf16.mxu0 0
        %3430 = vmatmul.mubr.bf16.gmra.mrb[0].mxu0 %v3215
        %v3431 = vpop.f32.mrb[0].mxu0
        %v3432 = vadd.f32 %v3236, %v3431
        %v3433 = vpop.f32.mrb[0].mxu0
        %v3434 = vpop.f32.mrb[0].mxu0
        %v3435 = vadd.f32 %v3236, %v3434
        %v3436 = vpop.f32.mrb[0].mxu0
        %3437 = vmatprep.mubr.bf16.mxu0 0
        %3438 = vmatmul.mubr.bf16.gmra.mrb[0].mxu0 %v3216
        %v3439 = vpop.f32.mrb[0].mxu0
        %v3440 = vadd.f32 %v3236, %v3439
        %v3441 = vpop.f32.mrb[0].mxu0
        %v3442 = vpop.f32.mrb[0].mxu0
        %v3443 = vadd.f32 %v3236, %v3442
        %v3444 = vpop.f32.mrb[0].mxu0
        %3445 = vdwg.mxu0
        %v3446 = vmax.f32 %v3320, 0.0
        %v3447 = vmax.f32 %v3323, 0.0
        %v3448 = vmax.f32 %v3328, 0.0
        %v3449 = vmax.f32 %v3331, 0.0
        %v3450 = vmax.f32 %v3336, 0.0
        %v3451 = vmax.f32 %v3339, 0.0
        %v3452 = vmax.f32 %v3344, 0.0
        %v3453 = vmax.f32 %v3347, 0.0
        %v3454 = vmax.f32 %v3352, 0.0
        %v3455 = vmax.f32 %v3355, 0.0
        %v3456 = vmax.f32 %v3360, 0.0
        %v3457 = vmax.f32 %v3363, 0.0
        %v3458 = vmax.f32 %v3368, 0.0
        %v3459 = vmax.f32 %v3371, 0.0
        %v3460 = vmax.f32 %v3376, 0.0
        %v3461 = vmax.f32 %v3379, 0.0
        %v3462 = vmax.f32 %v3384, 0.0
        %v3463 = vmax.f32 %v3387, 0.0
        %v3464 = vmax.f32 %v3392, 0.0
        %v3465 = vmax.f32 %v3395, 0.0
        %v3466 = vmax.f32 %v3400, 0.0
        %v3467 = vmax.f32 %v3403, 0.0
        %v3468 = vmax.f32 %v3408, 0.0
        %v3469 = vmax.f32 %v3411, 0.0
        %v3470 = vmax.f32 %v3416, 0.0
        %v3471 = vmax.f32 %v3419, 0.0
        %v3472 = vmax.f32 %v3424, 0.0
        %v3473 = vmax.f32 %v3427, 0.0
        %v3474 = vmax.f32 %v3432, 0.0
        %v3475 = vmax.f32 %v3435, 0.0
        %v3476 = vmax.f32 %v3440, 0.0
        %v3477 = vmax.f32 %v3443, 0.0
        %v3478 = vmul.f32 %v3446, %v779
        %v3479 = vmul.f32 %v3447, %v780
        %v3480 = vmul.f32 %v3448, %v781
        %v3481 = vmul.f32 %v3449, %v782
        %v3482 = vmul.f32 %v3450, %v783
        %v3483 = vmul.f32 %v3451, %v784
        %v3484 = vmul.f32 %v3452, %v785
        %v3485 = vmul.f32 %v3453, %v786
        %v3486 = vmul.f32 %v3454, %v787
        %v3487 = vmul.f32 %v3455, %v788
        %v3488 = vmul.f32 %v3456, %v789
        %v3489 = vmul.f32 %v3457, %v790
        %v3490 = vmul.f32 %v3458, %v791
        %v3491 = vmul.f32 %v3459, %v792
        %v3492 = vmul.f32 %v3460, %v793
        %v3493 = vmul.f32 %v3461, %v794
        %v3494 = vmul.f32 %v3462, %v795
        %v3495 = vmul.f32 %v3463, %v796
        %v3496 = vmul.f32 %v3464, %v797
        %v3497 = vmul.f32 %v3465, %v798
        %v3498 = vmul.f32 %v3466, %v799
        %v3499 = vmul.f32 %v3467, %v800
        %v3500 = vmul.f32 %v3468, %v801
        %v3501 = vmul.f32 %v3469, %v802
        %v3502 = vmul.f32 %v3470, %v803
        %v3503 = vmul.f32 %v3471, %v804
        %v3504 = vmul.f32 %v3472, %v805
        %v3505 = vmul.f32 %v3473, %v806
        %v3506 = vmul.f32 %v3474, %v807
        %v3507 = vmul.f32 %v3475, %v808
        %v3508 = vmul.f32 %v3476, %v809
        %v3509 = vmul.f32 %v3477, %v810
        %v3510 = vadd.f32 %v3478, %v3479
        %v3511 = vadd.f32 %v3510, %v3480
        %v3512 = vadd.f32 %v3511, %v3481
        %v3513 = vadd.f32 %v3512, %v3482
        %v3514 = vadd.f32 %v3513, %v3483
        %v3515 = vadd.f32 %v3514, %v3484
        %v3516 = vadd.f32 %v3515, %v3485
        %v3517 = vadd.f32 %v3516, %v3486
        %v3518 = vadd.f32 %v3517, %v3487
        %v3519 = vadd.f32 %v3518, %v3488
        %v3520 = vadd.f32 %v3519, %v3489
        %v3521 = vadd.f32 %v3520, %v3490
        %v3522 = vadd.f32 %v3521, %v3491
        %v3523 = vadd.f32 %v3522, %v3492
        %v3524 = vadd.f32 %v3523, %v3493
        %v3525 = vadd.f32 %v3524, %v3494
        %v3526 = vadd.f32 %v3525, %v3495
        %v3527 = vadd.f32 %v3526, %v3496
        %v3528 = vadd.f32 %v3527, %v3497
        %v3529 = vadd.f32 %v3528, %v3498
        %v3530 = vadd.f32 %v3529, %v3499
        %v3531 = vadd.f32 %v3530, %v3500
        %v3532 = vadd.f32 %v3531, %v3501
        %v3533 = vadd.f32 %v3532, %v3502
        %v3534 = vadd.f32 %v3533, %v3503
        %v3535 = vadd.f32 %v3534, %v3504
        %v3536 = vadd.f32 %v3535, %v3505
        %v3537 = vadd.f32 %v3536, %v3506
        %v3538 = vadd.f32 %v3537, %v3507
        %v3539 = vadd.f32 %v3538, %v3508
        %v3540 = vadd.f32 %v3539, %v3509
        %v3541 = vrot.slane %v3540, 4
        %v3542 = vadd.f32 %v3540, %v3541
        %v3543 = vrot.slane %v3542, 2
        %v3544 = vadd.f32 %v3542, %v3543
        %v3545 = vrot.slane %v3544, 1
        %v3546 = vadd.f32 %v3544, %v3545
        %v3547 = vmul.f32 %v3478, %v3478
        %v3548 = vmul.f32 %v3479, %v3479
        %v3549 = vmul.f32 %v3480, %v3480
        %v3550 = vmul.f32 %v3481, %v3481
        %v3551 = vmul.f32 %v3482, %v3482
        %v3552 = vmul.f32 %v3483, %v3483
        %v3553 = vmul.f32 %v3484, %v3484
        %v3554 = vmul.f32 %v3485, %v3485
        %v3555 = vmul.f32 %v3486, %v3486
        %v3556 = vmul.f32 %v3487, %v3487
        %v3557 = vmul.f32 %v3488, %v3488
        %v3558 = vmul.f32 %v3489, %v3489
        %v3559 = vmul.f32 %v3490, %v3490
        %v3560 = vmul.f32 %v3491, %v3491
        %v3561 = vmul.f32 %v3492, %v3492
        %v3562 = vmul.f32 %v3493, %v3493
        %v3563 = vmul.f32 %v3494, %v3494
        %v3564 = vmul.f32 %v3495, %v3495
        %v3565 = vmul.f32 %v3496, %v3496
        %v3566 = vmul.f32 %v3497, %v3497
        %v3567 = vmul.f32 %v3498, %v3498
        %v3568 = vmul.f32 %v3499, %v3499
        %v3569 = vmul.f32 %v3500, %v3500
        %v3570 = vmul.f32 %v3501, %v3501
        %v3571 = vmul.f32 %v3502, %v3502
        %v3572 = vmul.f32 %v3503, %v3503
        %v3573 = vmul.f32 %v3504, %v3504
        %v3574 = vmul.f32 %v3505, %v3505
        %v3575 = vmul.f32 %v3506, %v3506
        %v3576 = vmul.f32 %v3507, %v3507
        %v3577 = vmul.f32 %v3508, %v3508
        %v3578 = vmul.f32 %v3509, %v3509
        %v3579 = vadd.f32 %v3547, %v3548
        %v3580 = vadd.f32 %v3579, %v3549
        %v3581 = vadd.f32 %v3580, %v3550
        %v3582 = vadd.f32 %v3581, %v3551
        %v3583 = vadd.f32 %v3582, %v3552
        %v3584 = vadd.f32 %v3583, %v3553
        %v3585 = vadd.f32 %v3584, %v3554
        %v3586 = vadd.f32 %v3585, %v3555
        %v3587 = vadd.f32 %v3586, %v3556
        %v3588 = vadd.f32 %v3587, %v3557
        %v3589 = vadd.f32 %v3588, %v3558
        %v3590 = vadd.f32 %v3589, %v3559
        %v3591 = vadd.f32 %v3590, %v3560
        %v3592 = vadd.f32 %v3591, %v3561
        %v3593 = vadd.f32 %v3592, %v3562
        %v3594 = vadd.f32 %v3593, %v3563
        %v3595 = vadd.f32 %v3594, %v3564
        %v3596 = vadd.f32 %v3595, %v3565
        %v3597 = vadd.f32 %v3596, %v3566
        %v3598 = vadd.f32 %v3597, %v3567
        %v3599 = vadd.f32 %v3598, %v3568
        %v3600 = vadd.f32 %v3599, %v3569
        %v3601 = vadd.f32 %v3600, %v3570
        %v3602 = vadd.f32 %v3601, %v3571
        %v3603 = vadd.f32 %v3602, %v3572
        %v3604 = vadd.f32 %v3603, %v3573
        %v3605 = vadd.f32 %v3604, %v3574
        %v3606 = vadd.f32 %v3605, %v3575
        %v3607 = vadd.f32 %v3606, %v3576
        %v3608 = vadd.f32 %v3607, %v3577
        %v3609 = vadd.f32 %v3608, %v3578
        %v3610 = vrot.slane %v3609, 4
        %v3611 = vadd.f32 %v3609, %v3610
        %v3612 = vrot.slane %v3611, 2
        %v3613 = vadd.f32 %v3611, %v3612
        %v3614 = vrot.slane %v3613, 1
        %v3615 = vadd.f32 %v3613, %v3614
        %v3616 = vmul.f32 %v3546, %v2654
        %v3617 = vmul.f32 %v3615, %v2654
        %v3618 = vmul.f32 %v3616, %v3616
        %v3619 = vsub.f32 %v3617, %v3618
        %v3620 = vmax.f32 %v3619, 0.0
        %v3621 = vadd.f32 %v3620, 1e-05
        %v3622 = vrsqrt.pop %v3621
        %v3623 = vmul.f32 %v3622, %v814
        %v3624 = vsub.f32 %v3478, %v3616
        %v3625 = vsub.f32 %v3479, %v3616
        %v3626 = vsub.f32 %v3480, %v3616
        %v3627 = vsub.f32 %v3481, %v3616
        %v3628 = vsub.f32 %v3482, %v3616
        %v3629 = vsub.f32 %v3483, %v3616
        %v3630 = vsub.f32 %v3484, %v3616
        %v3631 = vsub.f32 %v3485, %v3616
        %v3632 = vsub.f32 %v3486, %v3616
        %v3633 = vsub.f32 %v3487, %v3616
        %v3634 = vsub.f32 %v3488, %v3616
        %v3635 = vsub.f32 %v3489, %v3616
        %v3636 = vsub.f32 %v3490, %v3616
        %v3637 = vsub.f32 %v3491, %v3616
        %v3638 = vsub.f32 %v3492, %v3616
        %v3639 = vsub.f32 %v3493, %v3616
        %v3640 = vsub.f32 %v3494, %v3616
        %v3641 = vsub.f32 %v3495, %v3616
        %v3642 = vsub.f32 %v3496, %v3616
        %v3643 = vsub.f32 %v3497, %v3616
        %v3644 = vsub.f32 %v3498, %v3616
        %v3645 = vsub.f32 %v3499, %v3616
        %v3646 = vsub.f32 %v3500, %v3616
        %v3647 = vsub.f32 %v3501, %v3616
        %v3648 = vsub.f32 %v3502, %v3616
        %v3649 = vsub.f32 %v3503, %v3616
        %v3650 = vsub.f32 %v3504, %v3616
        %v3651 = vsub.f32 %v3505, %v3616
        %v3652 = vsub.f32 %v3506, %v3616
        %v3653 = vsub.f32 %v3507, %v3616
        %v3654 = vsub.f32 %v3508, %v3616
        %v3655 = vsub.f32 %v3509, %v3616
        %v3656 = vlaneseq
        %v3657 = vshrl.u32 %v3656, 7
        %v3658 = vsub.s32 1, %v3657
        %v3659 = vrot.slane %v3623, %v3658
        %v3660 = vmul.f32 %v3624, %v3659
        %v3661 = vmul.f32 %v3625, %v3659
        %v3662 = vmul.f32 %v3626, %v3659
        %v3663 = vmul.f32 %v3627, %v3659
        %v3664 = vmul.f32 %v3628, %v3659
        %v3665 = vmul.f32 %v3629, %v3659
        %v3666 = vmul.f32 %v3630, %v3659
        %v3667 = vmul.f32 %v3631, %v3659
        %v3668 = vmul.f32 %v3632, %v3659
        %v3669 = vmul.f32 %v3633, %v3659
        %v3670 = vmul.f32 %v3634, %v3659
        %v3671 = vmul.f32 %v3635, %v3659
        %v3672 = vmul.f32 %v3636, %v3659
        %v3673 = vmul.f32 %v3637, %v3659
        %v3674 = vmul.f32 %v3638, %v3659
        %v3675 = vmul.f32 %v3639, %v3659
        %v3676 = vmul.f32 %v3640, %v3659
        %v3677 = vmul.f32 %v3641, %v3659
        %v3678 = vmul.f32 %v3642, %v3659
        %v3679 = vmul.f32 %v3643, %v3659
        %v3680 = vmul.f32 %v3644, %v3659
        %v3681 = vmul.f32 %v3645, %v3659
        %v3682 = vmul.f32 %v3646, %v3659
        %v3683 = vmul.f32 %v3647, %v3659
        %v3684 = vmul.f32 %v3648, %v3659
        %v3685 = vmul.f32 %v3649, %v3659
        %v3686 = vmul.f32 %v3650, %v3659
        %v3687 = vmul.f32 %v3651, %v3659
        %v3688 = vmul.f32 %v3652, %v3659
        %v3689 = vmul.f32 %v3653, %v3659
        %v3690 = vmul.f32 %v3654, %v3659
        %v3691 = vmul.f32 %v3655, %v3659
        %v3692 = vlaneseq
        %v3693 = vshrl.u32 %v3692, 7
        %v3694 = vsub.s32 1, %v3693
        %v3695 = vrot.slane %v815, %v3694
        %v3696 = vadd.f32 %v3660, %v3695
        %v3697 = vadd.f32 %v3661, %v3695
        %v3698 = vadd.f32 %v3662, %v3695
        %v3699 = vadd.f32 %v3663, %v3695
        %v3700 = vadd.f32 %v3664, %v3695
        %v3701 = vadd.f32 %v3665, %v3695
        %v3702 = vadd.f32 %v3666, %v3695
        %v3703 = vadd.f32 %v3667, %v3695
        %v3704 = vadd.f32 %v3668, %v3695
        %v3705 = vadd.f32 %v3669, %v3695
        %v3706 = vadd.f32 %v3670, %v3695
        %v3707 = vadd.f32 %v3671, %v3695
        %v3708 = vadd.f32 %v3672, %v3695
        %v3709 = vadd.f32 %v3673, %v3695
        %v3710 = vadd.f32 %v3674, %v3695
        %v3711 = vadd.f32 %v3675, %v3695
        %v3712 = vadd.f32 %v3676, %v3695
        %v3713 = vadd.f32 %v3677, %v3695
        %v3714 = vadd.f32 %v3678, %v3695
        %v3715 = vadd.f32 %v3679, %v3695
        %v3716 = vadd.f32 %v3680, %v3695
        %v3717 = vadd.f32 %v3681, %v3695
        %v3718 = vadd.f32 %v3682, %v3695
        %v3719 = vadd.f32 %v3683, %v3695
        %v3720 = vadd.f32 %v3684, %v3695
        %v3721 = vadd.f32 %v3685, %v3695
        %v3722 = vadd.f32 %v3686, %v3695
        %v3723 = vadd.f32 %v3687, %v3695
        %v3724 = vadd.f32 %v3688, %v3695
        %v3725 = vadd.f32 %v3689, %v3695
        %v3726 = vadd.f32 %v3690, %v3695
        %v3727 = vadd.f32 %v3691, %v3695
        %v3728 = vpack.c.bf16 %v3697, %v3696
        %v3729 = vpack.c.bf16 %v3699, %v3698
        %v3730 = vpack.c.bf16 %v3701, %v3700
        %v3731 = vpack.c.bf16 %v3703, %v3702
        %v3732 = vpack.c.bf16 %v3705, %v3704
        %v3733 = vpack.c.bf16 %v3707, %v3706
        %v3734 = vpack.c.bf16 %v3709, %v3708
        %v3735 = vpack.c.bf16 %v3711, %v3710
        %v3736 = vpack.c.bf16 %v3713, %v3712
        %v3737 = vpack.c.bf16 %v3715, %v3714
        %v3738 = vpack.c.bf16 %v3717, %v3716
        %v3739 = vpack.c.bf16 %v3719, %v3718
        %v3740 = vpack.c.bf16 %v3721, %v3720
        %v3741 = vpack.c.bf16 %v3723, %v3722
        %v3742 = vpack.c.bf16 %v3725, %v3724
        %v3743 = vpack.c.bf16 %v3727, %v3726
        %3744 = vmatprep.subr.bf16.mxu0 0
        %3745 = vmatpush1.bf16.msra.mxu0 %v3728
        %3746 = vmatprep.subr.bf16.mxu0 0
        %3747 = vmatpush1.bf16.msra.mxu0 %v3729
        %3748 = vmatprep.subr.bf16.mxu0 0
        %3749 = vmatpush1.bf16.msra.mxu0 %v3730
        %3750 = vmatprep.subr.bf16.mxu0 0
        %3751 = vmatpush1.bf16.msra.mxu0 %v3731
        %3752 = vmatprep.subr.bf16.mxu0 0
        %3753 = vmatpush1.bf16.msra.mxu0 %v3732
        %3754 = vmatprep.subr.bf16.mxu0 0
        %3755 = vmatpush1.bf16.msra.mxu0 %v3733
        %3756 = vmatprep.subr.bf16.mxu0 0
        %3757 = vmatpush1.bf16.msra.mxu0 %v3734
        %3758 = vmatprep.subr.bf16.mxu0 0
        %3759 = vmatpush1.bf16.msra.mxu0 %v3735
        %3760 = vmatprep.subr.bf16.mxu0 0
        %3761 = vmatpush1.bf16.msra.mxu0 %v3736
        %3762 = vmatprep.subr.bf16.mxu0 0
        %3763 = vmatpush1.bf16.msra.mxu0 %v3737
        %3764 = vmatprep.subr.bf16.mxu0 0
        %3765 = vmatpush1.bf16.msra.mxu0 %v3738
        %3766 = vmatprep.subr.bf16.mxu0 0
        %3767 = vmatpush1.bf16.msra.mxu0 %v3739
        %3768 = vmatprep.subr.bf16.mxu0 0
        %3769 = vmatpush1.bf16.msra.mxu0 %v3740
        %3770 = vmatprep.subr.bf16.mxu0 0
        %3771 = vmatpush1.bf16.msra.mxu0 %v3741
        %3772 = vmatprep.subr.bf16.mxu0 0
        %3773 = vmatpush1.bf16.msra.mxu0 %v3742
        %3774 = vmatprep.subr.bf16.mxu0 0
        %3775 = vmatpush1.bf16.msra.mxu0 %v3743
        %3776 = vmatprep.mubr.bf16.mxu0 %v2912
        %3777 = vmatmul.mubr.bf16.gmra.mrb[0].mxu0 %v2911
        %v3778 = vpop.f32.mrb[0].mxu0
        %v3779 = vadd.f32 %v2422, %v3778
        %v3780 = vpop.f32.mrb[0].mxu0
        %v3781 = vpop.f32.mrb[0].mxu0
        %v3782 = vadd.f32 %v2425, %v3781
        %v3783 = vpop.f32.mrb[0].mxu0
        %3784 = vmatprep.mubr.bf16.mxu0 %v2914
        %3785 = vmatmul.mubr.bf16.gmra.mrb[0].mxu0 %v2913
        %v3786 = vpop.f32.mrb[0].mxu0
        %v3787 = vadd.f32 %v2430, %v3786
        %v3788 = vpop.f32.mrb[0].mxu0
        %v3789 = vpop.f32.mrb[0].mxu0
        %v3790 = vadd.f32 %v2433, %v3789
        %v3791 = vpop.f32.mrb[0].mxu0
        %3792 = vmatprep.mubr.bf16.mxu0 %v2916
        %3793 = vmatmul.mubr.bf16.gmra.mrb[0].mxu0 %v2915
        %v3794 = vpop.f32.mrb[0].mxu0
        %v3795 = vadd.f32 %v2438, %v3794
        %v3796 = vpop.f32.mrb[0].mxu0
        %v3797 = vpop.f32.mrb[0].mxu0
        %v3798 = vadd.f32 %v2441, %v3797
        %v3799 = vpop.f32.mrb[0].mxu0
        %3800 = vmatprep.mubr.bf16.mxu0 %v2918
        %3801 = vmatmul.mubr.bf16.gmra.mrb[0].mxu0 %v2917
        %v3802 = vpop.f32.mrb[0].mxu0
        %v3803 = vadd.f32 %v2446, %v3802
        %v3804 = vpop.f32.mrb[0].mxu0
        %v3805 = vpop.f32.mrb[0].mxu0
        %v3806 = vadd.f32 %v2449, %v3805
        %v3807 = vpop.f32.mrb[0].mxu0
        %3808 = vmatprep.mubr.bf16.mxu0 %v2920
        %3809 = vmatmul.mubr.bf16.gmra.mrb[0].mxu0 %v2919
        %v3810 = vpop.f32.mrb[0].mxu0
        %v3811 = vadd.f32 %v2454, %v3810
        %v3812 = vpop.f32.mrb[0].mxu0
        %v3813 = vpop.f32.mrb[0].mxu0
        %v3814 = vadd.f32 %v2457, %v3813
        %v3815 = vpop.f32.mrb[0].mxu0
        %3816 = vmatprep.mubr.bf16.mxu0 %v2922
        %3817 = vmatmul.mubr.bf16.gmra.mrb[0].mxu0 %v2921
        %v3818 = vpop.f32.mrb[0].mxu0
        %v3819 = vadd.f32 %v2462, %v3818
        %v3820 = vpop.f32.mrb[0].mxu0
        %v3821 = vpop.f32.mrb[0].mxu0
        %v3822 = vadd.f32 %v2465, %v3821
        %v3823 = vpop.f32.mrb[0].mxu0
        %3824 = vmatprep.mubr.bf16.mxu0 %v2924
        %3825 = vmatmul.mubr.bf16.gmra.mrb[0].mxu0 %v2923
        %v3826 = vpop.f32.mrb[0].mxu0
        %v3827 = vadd.f32 %v2470, %v3826
        %v3828 = vpop.f32.mrb[0].mxu0
        %v3829 = vpop.f32.mrb[0].mxu0
        %v3830 = vadd.f32 %v2473, %v3829
        %v3831 = vpop.f32.mrb[0].mxu0
        %3832 = vmatprep.mubr.bf16.mxu0 %v2926
        %3833 = vmatmul.mubr.bf16.gmra.mrb[0].mxu0 %v2925
        %v3834 = vpop.f32.mrb[0].mxu0
        %v3835 = vadd.f32 %v2478, %v3834
        %v3836 = vpop.f32.mrb[0].mxu0
        %v3837 = vpop.f32.mrb[0].mxu0
        %v3838 = vadd.f32 %v2481, %v3837
        %v3839 = vpop.f32.mrb[0].mxu0
        %3840 = vmatprep.mubr.bf16.mxu0 %v2928
        %3841 = vmatmul.mubr.bf16.gmra.mrb[0].mxu0 %v2927
        %v3842 = vpop.f32.mrb[0].mxu0
        %v3843 = vadd.f32 %v2486, %v3842
        %v3844 = vpop.f32.mrb[0].mxu0
        %v3845 = vpop.f32.mrb[0].mxu0
        %v3846 = vadd.f32 %v2489, %v3845
        %v3847 = vpop.f32.mrb[0].mxu0
        %3848 = vmatprep.mubr.bf16.mxu0 %v2930
        %3849 = vmatmul.mubr.bf16.gmra.mrb[0].mxu0 %v2929
        %v3850 = vpop.f32.mrb[0].mxu0
        %v3851 = vadd.f32 %v2494, %v3850
        %v3852 = vpop.f32.mrb[0].mxu0
        %v3853 = vpop.f32.mrb[0].mxu0
        %v3854 = vadd.f32 %v2497, %v3853
        %v3855 = vpop.f32.mrb[0].mxu0
        %3856 = vmatprep.mubr.bf16.mxu0 %v2932
        %3857 = vmatmul.mubr.bf16.gmra.mrb[0].mxu0 %v2931
        %v3858 = vpop.f32.mrb[0].mxu0
        %v3859 = vadd.f32 %v2502, %v3858
        %v3860 = vpop.f32.mrb[0].mxu0
        %v3861 = vpop.f32.mrb[0].mxu0
        %v3862 = vadd.f32 %v2505, %v3861
        %v3863 = vpop.f32.mrb[0].mxu0
        %3864 = vmatprep.mubr.bf16.mxu0 %v2934
        %3865 = vmatmul.mubr.bf16.gmra.mrb[0].mxu0 %v2933
        %v3866 = vpop.f32.mrb[0].mxu0
        %v3867 = vadd.f32 %v2510, %v3866
        %v3868 = vpop.f32.mrb[0].mxu0
        %v3869 = vpop.f32.mrb[0].mxu0
        %v3870 = vadd.f32 %v2513, %v3869
        %v3871 = vpop.f32.mrb[0].mxu0
        %3872 = vmatprep.mubr.bf16.mxu0 %v2936
        %3873 = vmatmul.mubr.bf16.gmra.mrb[0].mxu0 %v2935
        %v3874 = vpop.f32.mrb[0].mxu0
        %v3875 = vadd.f32 %v2518, %v3874
        %v3876 = vpop.f32.mrb[0].mxu0
        %v3877 = vpop.f32.mrb[0].mxu0
        %v3878 = vadd.f32 %v2521, %v3877
        %v3879 = vpop.f32.mrb[0].mxu0
        %3880 = vmatprep.mubr.bf16.mxu0 %v2938
        %3881 = vmatmul.mubr.bf16.gmra.mrb[0].mxu0 %v2937
        %v3882 = vpop.f32.mrb[0].mxu0
        %v3883 = vadd.f32 %v2526, %v3882
        %v3884 = vpop.f32.mrb[0].mxu0
        %v3885 = vpop.f32.mrb[0].mxu0
        %v3886 = vadd.f32 %v2529, %v3885
        %v3887 = vpop.f32.mrb[0].mxu0
        %3888 = vmatprep.mubr.bf16.mxu0 %v2940
        %3889 = vmatmul.mubr.bf16.gmra.mrb[0].mxu0 %v2939
        %v3890 = vpop.f32.mrb[0].mxu0
        %v3891 = vadd.f32 %v2534, %v3890
        %v3892 = vpop.f32.mrb[0].mxu0
        %v3893 = vpop.f32.mrb[0].mxu0
        %v3894 = vadd.f32 %v2537, %v3893
        %v3895 = vpop.f32.mrb[0].mxu0
        %3896 = vmatprep.mubr.bf16.mxu0 %v2942
        %3897 = vmatmul.mubr.bf16.gmra.mrb[0].mxu0 %v2941
        %v3898 = vpop.f32.mrb[0].mxu0
        %v3899 = vadd.f32 %v2542, %v3898
        %v3900 = vpop.f32.mrb[0].mxu0
        %v3901 = vpop.f32.mrb[0].mxu0
        %v3902 = vadd.f32 %v2545, %v3901
        %v3903 = vpop.f32.mrb[0].mxu0
        %3904 = vdwg.mxu0
        %v3905 = vstv %s812
        %v3906 = vmul.f32 %v3905, %v3696
        %v3907 = vmul.f32 %v3905, %v3697
        %v3908 = vmul.f32 %v3905, %v3698
        %v3909 = vmul.f32 %v3905, %v3699
        %v3910 = vmul.f32 %v3905, %v3700
        %v3911 = vmul.f32 %v3905, %v3701
        %v3912 = vmul.f32 %v3905, %v3702
        %v3913 = vmul.f32 %v3905, %v3703
        %v3914 = vmul.f32 %v3905, %v3704
        %v3915 = vmul.f32 %v3905, %v3705
        %v3916 = vmul.f32 %v3905, %v3706
        %v3917 = vmul.f32 %v3905, %v3707
        %v3918 = vmul.f32 %v3905, %v3708
        %v3919 = vmul.f32 %v3905, %v3709
        %v3920 = vmul.f32 %v3905, %v3710
        %v3921 = vmul.f32 %v3905, %v3711
        %v3922 = vmul.f32 %v3905, %v3712
        %v3923 = vmul.f32 %v3905, %v3713
        %v3924 = vmul.f32 %v3905, %v3714
        %v3925 = vmul.f32 %v3905, %v3715
        %v3926 = vmul.f32 %v3905, %v3716
        %v3927 = vmul.f32 %v3905, %v3717
        %v3928 = vmul.f32 %v3905, %v3718
        %v3929 = vmul.f32 %v3905, %v3719
        %v3930 = vmul.f32 %v3905, %v3720
        %v3931 = vmul.f32 %v3905, %v3721
        %v3932 = vmul.f32 %v3905, %v3722
        %v3933 = vmul.f32 %v3905, %v3723
        %v3934 = vmul.f32 %v3905, %v3724
        %v3935 = vmul.f32 %v3905, %v3725
        %v3936 = vmul.f32 %v3905, %v3726
        %v3937 = vmul.f32 %v3905, %v3727
        %v3938 = vadd.f32 %v3906, %v3779
        %v3939 = vadd.f32 %v3907, %v3782
        %v3940 = vadd.f32 %v3908, %v3787
        %v3941 = vadd.f32 %v3909, %v3790
        %v3942 = vadd.f32 %v3910, %v3795
        %v3943 = vadd.f32 %v3911, %v3798
        %v3944 = vadd.f32 %v3912, %v3803
        %v3945 = vadd.f32 %v3913, %v3806
        %v3946 = vadd.f32 %v3914, %v3811
        %v3947 = vadd.f32 %v3915, %v3814
        %v3948 = vadd.f32 %v3916, %v3819
        %v3949 = vadd.f32 %v3917, %v3822
        %v3950 = vadd.f32 %v3918, %v3827
        %v3951 = vadd.f32 %v3919, %v3830
        %v3952 = vadd.f32 %v3920, %v3835
        %v3953 = vadd.f32 %v3921, %v3838
        %v3954 = vadd.f32 %v3922, %v3843
        %v3955 = vadd.f32 %v3923, %v3846
        %v3956 = vadd.f32 %v3924, %v3851
        %v3957 = vadd.f32 %v3925, %v3854
        %v3958 = vadd.f32 %v3926, %v3859
        %v3959 = vadd.f32 %v3927, %v3862
        %v3960 = vadd.f32 %v3928, %v3867
        %v3961 = vadd.f32 %v3929, %v3870
        %v3962 = vadd.f32 %v3930, %v3875
        %v3963 = vadd.f32 %v3931, %v3878
        %v3964 = vadd.f32 %v3932, %v3883
        %v3965 = vadd.f32 %v3933, %v3886
        %v3966 = vadd.f32 %v3934, %v3891
        %v3967 = vadd.f32 %v3935, %v3894
        %v3968 = vadd.f32 %v3936, %v3899
        %v3969 = vadd.f32 %v3937, %v3902
        %v3970 = vpack.c.bf16 %v3939, %v3938
        %v3971 = vpack.c.bf16 %v3941, %v3940
        %v3972 = vpack.c.bf16 %v3943, %v3942
        %v3973 = vpack.c.bf16 %v3945, %v3944
        %v3974 = vpack.c.bf16 %v3947, %v3946
        %v3975 = vpack.c.bf16 %v3949, %v3948
        %v3976 = vpack.c.bf16 %v3951, %v3950
        %v3977 = vpack.c.bf16 %v3953, %v3952
        %v3978 = vpack.c.bf16 %v3955, %v3954
        %v3979 = vpack.c.bf16 %v3957, %v3956
        %v3980 = vpack.c.bf16 %v3959, %v3958
        %v3981 = vpack.c.bf16 %v3961, %v3960
        %v3982 = vpack.c.bf16 %v3963, %v3962
        %v3983 = vpack.c.bf16 %v3965, %v3964
        %v3984 = vpack.c.bf16 %v3967, %v3966
        %v3985 = vpack.c.bf16 %v3969, %v3968
        %s3986 = scalar_lea.vmem %s13, 64
        %v3987 = vld [vmem:[%s3986] sm:$0xf]
        %v3988 = vld [vmem:[%s3986 + $0x4] sm:$0xf]
        %v3989 = vld [vmem:[%s3986 + $0x8] sm:$0xf]
        %v3990 = vld [vmem:[%s3986 + $0xc] sm:$0xf]
        %v3991 = vld [vmem:[%s3986 + $0x10] sm:$0xf]
        %v3992 = vld [vmem:[%s3986 + $0x14] sm:$0xf]
        %v3993 = vld [vmem:[%s3986 + $0x18] sm:$0xf]
        %v3994 = vld [vmem:[%s3986 + $0x1c] sm:$0xf]
        %v3995 = vld [vmem:[%s3986 + $0x20] sm:$0xf]
        %v3996 = vld [vmem:[%s3986 + $0x24] sm:$0xf]
        %v3997 = vld [vmem:[%s3986 + $0x28] sm:$0xf]
        %v3998 = vld [vmem:[%s3986 + $0x2c] sm:$0xf]
        %v3999 = vld [vmem:[%s3986 + $0x30] sm:$0xf]
        %v4000 = vld [vmem:[%s3986 + $0x34] sm:$0xf]
        %v4001 = vld [vmem:[%s3986 + $0x38] sm:$0xf]
        %v4002 = vld [vmem:[%s3986 + $0x3c] sm:$0xf]
        %v4003 = vlaneseq
        %v4004 = vshrl.u32 %v4003, 7
        %v4005 = vsub.s32 1, %v4004
        %v4006 = vrot.slane %v816, %v4005
        %v4023 = vunpack.c.l.b16 %v3987
        %v4024 = vunpack.c.l.b16 %v3988
        %v4025 = vunpack.c.l.b16 %v3989
        %v4026 = vunpack.c.l.b16 %v3990
        %v4027 = vunpack.c.l.b16 %v3991
        %v4028 = vunpack.c.l.b16 %v3992
        %v4029 = vunpack.c.l.b16 %v3993
        %v4030 = vunpack.c.l.b16 %v3994
        %v4031 = vunpack.c.l.b16 %v3995
        %v4032 = vunpack.c.l.b16 %v3996
        %v4033 = vunpack.c.l.b16 %v3997
        %v4034 = vunpack.c.l.b16 %v3998
        %v4035 = vunpack.c.l.b16 %v3999
        %v4036 = vunpack.c.l.b16 %v4000
        %v4037 = vunpack.c.l.b16 %v4001
        %v4038 = vunpack.c.l.b16 %v4002
        %v4039 = vpack.c.b16 %v4024, %v4023
        %v4040 = vpack.c.b16 %v4026, %v4025
        %v4041 = vpack.c.b16 %v4028, %v4027
        %v4042 = vpack.c.b16 %v4030, %v4029
        %v4043 = vpack.c.b16 %v4032, %v4031
        %v4044 = vpack.c.b16 %v4034, %v4033
        %v4045 = vpack.c.b16 %v4036, %v4035
        %v4046 = vpack.c.b16 %v4038, %v4037
        %4055 = vmatprep.subr.bf16.mxu0 0
        %4056 = vmatpush1.bf16.msra.mxu0 %v4039
        %4057 = vmatprep.subr.bf16.mxu0 0
        %4058 = vmatpush1.bf16.msra.mxu0 %v4040
        %4059 = vmatprep.subr.bf16.mxu0 0
        %4060 = vmatpush1.bf16.msra.mxu0 %v4041
        %4061 = vmatprep.subr.bf16.mxu0 0
        %4062 = vmatpush1.bf16.msra.mxu0 %v4042
        %4063 = vmatprep.subr.bf16.mxu0 0
        %4064 = vmatpush1.bf16.msra.mxu0 %v4043
        %4065 = vmatprep.subr.bf16.mxu0 0
        %4066 = vmatpush1.bf16.msra.mxu0 %v4044
        %4067 = vmatprep.subr.bf16.mxu0 0
        %4068 = vmatpush1.bf16.msra.mxu0 %v4045
        %4069 = vmatprep.subr.bf16.mxu0 0
        %4070 = vmatpush1.bf16.msra.mxu0 %v4046
        %4071 = vmatprep.subr.bf16.mxu0 0
        %4072 = vmatpush1.bf16.msra.mxu0 0
        %4073 = vmatprep.subr.bf16.mxu0 0
        %4074 = vmatpush1.bf16.msra.mxu0 0
        %4075 = vmatprep.subr.bf16.mxu0 0
        %4076 = vmatpush1.bf16.msra.mxu0 0
        %4077 = vmatprep.subr.bf16.mxu0 0
        %4078 = vmatpush1.bf16.msra.mxu0 0
        %4079 = vmatprep.subr.bf16.mxu0 0
        %4080 = vmatpush1.bf16.msra.mxu0 0
        %4081 = vmatprep.subr.bf16.mxu0 0
        %4082 = vmatpush1.bf16.msra.mxu0 0
        %4083 = vmatprep.subr.bf16.mxu0 0
        %4084 = vmatpush1.bf16.msra.mxu0 0
        %4085 = vmatprep.subr.bf16.mxu0 0
        %4086 = vmatpush1.bf16.msra.mxu0 0
        %4087 = vmatprep.mubr.bf16.mxu0 0
        %4088 = vmatmul.mubr.bf16.gmra.mrb[0].mxu0 %v3970
        %v4089 = vpop.f32.mrb[0].mxu0
        %v4090 = vadd.f32 %v4006, %v4089
        %v4091 = vpop.f32.mrb[0].mxu0
        %v4092 = vpop.f32.mrb[0].mxu0
        %v4093 = vadd.f32 %v4006, %v4092
        %v4094 = vpop.f32.mrb[0].mxu0
        %4095 = vmatprep.mubr.bf16.mxu0 0
        %4096 = vmatmul.mubr.bf16.gmra.mrb[0].mxu0 %v3971
        %v4097 = vpop.f32.mrb[0].mxu0
        %v4098 = vadd.f32 %v4006, %v4097
        %v4099 = vpop.f32.mrb[0].mxu0
        %v4100 = vpop.f32.mrb[0].mxu0
        %v4101 = vadd.f32 %v4006, %v4100
        %v4102 = vpop.f32.mrb[0].mxu0
        %4103 = vmatprep.mubr.bf16.mxu0 0
        %4104 = vmatmul.mubr.bf16.gmra.mrb[0].mxu0 %v3972
        %v4105 = vpop.f32.mrb[0].mxu0
        %v4106 = vadd.f32 %v4006, %v4105
        %v4107 = vpop.f32.mrb[0].mxu0
        %v4108 = vpop.f32.mrb[0].mxu0
        %v4109 = vadd.f32 %v4006, %v4108
        %v4110 = vpop.f32.mrb[0].mxu0
        %4111 = vmatprep.mubr.bf16.mxu0 0
        %4112 = vmatmul.mubr.bf16.gmra.mrb[0].mxu0 %v3973
        %v4113 = vpop.f32.mrb[0].mxu0
        %v4114 = vadd.f32 %v4006, %v4113
        %v4115 = vpop.f32.mrb[0].mxu0
        %v4116 = vpop.f32.mrb[0].mxu0
        %v4117 = vadd.f32 %v4006, %v4116
        %v4118 = vpop.f32.mrb[0].mxu0
        %4119 = vmatprep.mubr.bf16.mxu0 0
        %4120 = vmatmul.mubr.bf16.gmra.mrb[0].mxu0 %v3974
        %v4121 = vpop.f32.mrb[0].mxu0
        %v4122 = vadd.f32 %v4006, %v4121
        %v4123 = vpop.f32.mrb[0].mxu0
        %v4124 = vpop.f32.mrb[0].mxu0
        %v4125 = vadd.f32 %v4006, %v4124
        %v4126 = vpop.f32.mrb[0].mxu0
        %4127 = vmatprep.mubr.bf16.mxu0 0
        %4128 = vmatmul.mubr.bf16.gmra.mrb[0].mxu0 %v3975
        %v4129 = vpop.f32.mrb[0].mxu0
        %v4130 = vadd.f32 %v4006, %v4129
        %v4131 = vpop.f32.mrb[0].mxu0
        %v4132 = vpop.f32.mrb[0].mxu0
        %v4133 = vadd.f32 %v4006, %v4132
        %v4134 = vpop.f32.mrb[0].mxu0
        %4135 = vmatprep.mubr.bf16.mxu0 0
        %4136 = vmatmul.mubr.bf16.gmra.mrb[0].mxu0 %v3976
        %v4137 = vpop.f32.mrb[0].mxu0
        %v4138 = vadd.f32 %v4006, %v4137
        %v4139 = vpop.f32.mrb[0].mxu0
        %v4140 = vpop.f32.mrb[0].mxu0
        %v4141 = vadd.f32 %v4006, %v4140
        %v4142 = vpop.f32.mrb[0].mxu0
        %4143 = vmatprep.mubr.bf16.mxu0 0
        %4144 = vmatmul.mubr.bf16.gmra.mrb[0].mxu0 %v3977
        %v4145 = vpop.f32.mrb[0].mxu0
        %v4146 = vadd.f32 %v4006, %v4145
        %v4147 = vpop.f32.mrb[0].mxu0
        %v4148 = vpop.f32.mrb[0].mxu0
        %v4149 = vadd.f32 %v4006, %v4148
        %v4150 = vpop.f32.mrb[0].mxu0
        %4151 = vmatprep.mubr.bf16.mxu0 0
        %4152 = vmatmul.mubr.bf16.gmra.mrb[0].mxu0 %v3978
        %v4153 = vpop.f32.mrb[0].mxu0
        %v4154 = vadd.f32 %v4006, %v4153
        %v4155 = vpop.f32.mrb[0].mxu0
        %v4156 = vpop.f32.mrb[0].mxu0
        %v4157 = vadd.f32 %v4006, %v4156
        %v4158 = vpop.f32.mrb[0].mxu0
        %4159 = vmatprep.mubr.bf16.mxu0 0
        %4160 = vmatmul.mubr.bf16.gmra.mrb[0].mxu0 %v3979
        %v4161 = vpop.f32.mrb[0].mxu0
        %v4162 = vadd.f32 %v4006, %v4161
        %v4163 = vpop.f32.mrb[0].mxu0
        %v4164 = vpop.f32.mrb[0].mxu0
        %v4165 = vadd.f32 %v4006, %v4164
        %v4166 = vpop.f32.mrb[0].mxu0
        %4167 = vmatprep.mubr.bf16.mxu0 0
        %4168 = vmatmul.mubr.bf16.gmra.mrb[0].mxu0 %v3980
        %v4169 = vpop.f32.mrb[0].mxu0
        %v4170 = vadd.f32 %v4006, %v4169
        %v4171 = vpop.f32.mrb[0].mxu0
        %v4172 = vpop.f32.mrb[0].mxu0
        %v4173 = vadd.f32 %v4006, %v4172
        %v4174 = vpop.f32.mrb[0].mxu0
        %4175 = vmatprep.mubr.bf16.mxu0 0
        %4176 = vmatmul.mubr.bf16.gmra.mrb[0].mxu0 %v3981
        %v4177 = vpop.f32.mrb[0].mxu0
        %v4178 = vadd.f32 %v4006, %v4177
        %v4179 = vpop.f32.mrb[0].mxu0
        %v4180 = vpop.f32.mrb[0].mxu0
        %v4181 = vadd.f32 %v4006, %v4180
        %v4182 = vpop.f32.mrb[0].mxu0
        %4183 = vmatprep.mubr.bf16.mxu0 0
        %4184 = vmatmul.mubr.bf16.gmra.mrb[0].mxu0 %v3982
        %v4185 = vpop.f32.mrb[0].mxu0
        %v4186 = vadd.f32 %v4006, %v4185
        %v4187 = vpop.f32.mrb[0].mxu0
        %v4188 = vpop.f32.mrb[0].mxu0
        %v4189 = vadd.f32 %v4006, %v4188
        %v4190 = vpop.f32.mrb[0].mxu0
        %4191 = vmatprep.mubr.bf16.mxu0 0
        %4192 = vmatmul.mubr.bf16.gmra.mrb[0].mxu0 %v3983
        %v4193 = vpop.f32.mrb[0].mxu0
        %v4194 = vadd.f32 %v4006, %v4193
        %v4195 = vpop.f32.mrb[0].mxu0
        %v4196 = vpop.f32.mrb[0].mxu0
        %v4197 = vadd.f32 %v4006, %v4196
        %v4198 = vpop.f32.mrb[0].mxu0
        %4199 = vmatprep.mubr.bf16.mxu0 0
        %4200 = vmatmul.mubr.bf16.gmra.mrb[0].mxu0 %v3984
        %v4201 = vpop.f32.mrb[0].mxu0
        %v4202 = vadd.f32 %v4006, %v4201
        %v4203 = vpop.f32.mrb[0].mxu0
        %v4204 = vpop.f32.mrb[0].mxu0
        %v4205 = vadd.f32 %v4006, %v4204
        %v4206 = vpop.f32.mrb[0].mxu0
        %4207 = vmatprep.mubr.bf16.mxu0 0
        %4208 = vmatmul.mubr.bf16.gmra.mrb[0].mxu0 %v3985
        %v4209 = vpop.f32.mrb[0].mxu0
        %v4210 = vadd.f32 %v4006, %v4209
        %v4211 = vpop.f32.mrb[0].mxu0
        %v4212 = vpop.f32.mrb[0].mxu0
        %v4213 = vadd.f32 %v4006, %v4212
        %v4214 = vpop.f32.mrb[0].mxu0
        %4215 = vdwg.mxu0
        %v4216 = vmax.f32 %v4090, 0.0
        %v4217 = vmax.f32 %v4093, 0.0
        %v4218 = vmax.f32 %v4098, 0.0
        %v4219 = vmax.f32 %v4101, 0.0
        %v4220 = vmax.f32 %v4106, 0.0
        %v4221 = vmax.f32 %v4109, 0.0
        %v4222 = vmax.f32 %v4114, 0.0
        %v4223 = vmax.f32 %v4117, 0.0
        %v4224 = vmax.f32 %v4122, 0.0
        %v4225 = vmax.f32 %v4125, 0.0
        %v4226 = vmax.f32 %v4130, 0.0
        %v4227 = vmax.f32 %v4133, 0.0
        %v4228 = vmax.f32 %v4138, 0.0
        %v4229 = vmax.f32 %v4141, 0.0
        %v4230 = vmax.f32 %v4146, 0.0
        %v4231 = vmax.f32 %v4149, 0.0
        %v4232 = vmax.f32 %v4154, 0.0
        %v4233 = vmax.f32 %v4157, 0.0
        %v4234 = vmax.f32 %v4162, 0.0
        %v4235 = vmax.f32 %v4165, 0.0
        %v4236 = vmax.f32 %v4170, 0.0
        %v4237 = vmax.f32 %v4173, 0.0
        %v4238 = vmax.f32 %v4178, 0.0
        %v4239 = vmax.f32 %v4181, 0.0
        %v4240 = vmax.f32 %v4186, 0.0
        %v4241 = vmax.f32 %v4189, 0.0
        %v4242 = vmax.f32 %v4194, 0.0
        %v4243 = vmax.f32 %v4197, 0.0
        %v4244 = vmax.f32 %v4202, 0.0
        %v4245 = vmax.f32 %v4205, 0.0
        %v4246 = vmax.f32 %v4210, 0.0
        %v4247 = vmax.f32 %v4213, 0.0
        %v4248 = vmul.f32 %v4216, %v779
        %v4249 = vmul.f32 %v4217, %v780
        %v4250 = vmul.f32 %v4218, %v781
        %v4251 = vmul.f32 %v4219, %v782
        %v4252 = vmul.f32 %v4220, %v783
        %v4253 = vmul.f32 %v4221, %v784
        %v4254 = vmul.f32 %v4222, %v785
        %v4255 = vmul.f32 %v4223, %v786
        %v4256 = vmul.f32 %v4224, %v787
        %v4257 = vmul.f32 %v4225, %v788
        %v4258 = vmul.f32 %v4226, %v789
        %v4259 = vmul.f32 %v4227, %v790
        %v4260 = vmul.f32 %v4228, %v791
        %v4261 = vmul.f32 %v4229, %v792
        %v4262 = vmul.f32 %v4230, %v793
        %v4263 = vmul.f32 %v4231, %v794
        %v4264 = vmul.f32 %v4232, %v795
        %v4265 = vmul.f32 %v4233, %v796
        %v4266 = vmul.f32 %v4234, %v797
        %v4267 = vmul.f32 %v4235, %v798
        %v4268 = vmul.f32 %v4236, %v799
        %v4269 = vmul.f32 %v4237, %v800
        %v4270 = vmul.f32 %v4238, %v801
        %v4271 = vmul.f32 %v4239, %v802
        %v4272 = vmul.f32 %v4240, %v803
        %v4273 = vmul.f32 %v4241, %v804
        %v4274 = vmul.f32 %v4242, %v805
        %v4275 = vmul.f32 %v4243, %v806
        %v4276 = vmul.f32 %v4244, %v807
        %v4277 = vmul.f32 %v4245, %v808
        %v4278 = vmul.f32 %v4246, %v809
        %v4279 = vmul.f32 %v4247, %v810
        %v4280 = vadd.f32 %v4248, %v4249
        %v4281 = vadd.f32 %v4280, %v4250
        %v4282 = vadd.f32 %v4281, %v4251
        %v4283 = vadd.f32 %v4282, %v4252
        %v4284 = vadd.f32 %v4283, %v4253
        %v4285 = vadd.f32 %v4284, %v4254
        %v4286 = vadd.f32 %v4285, %v4255
        %v4287 = vadd.f32 %v4286, %v4256
        %v4288 = vadd.f32 %v4287, %v4257
        %v4289 = vadd.f32 %v4288, %v4258
        %v4290 = vadd.f32 %v4289, %v4259
        %v4291 = vadd.f32 %v4290, %v4260
        %v4292 = vadd.f32 %v4291, %v4261
        %v4293 = vadd.f32 %v4292, %v4262
        %v4294 = vadd.f32 %v4293, %v4263
        %v4295 = vadd.f32 %v4294, %v4264
        %v4296 = vadd.f32 %v4295, %v4265
        %v4297 = vadd.f32 %v4296, %v4266
        %v4298 = vadd.f32 %v4297, %v4267
        %v4299 = vadd.f32 %v4298, %v4268
        %v4300 = vadd.f32 %v4299, %v4269
        %v4301 = vadd.f32 %v4300, %v4270
        %v4302 = vadd.f32 %v4301, %v4271
        %v4303 = vadd.f32 %v4302, %v4272
        %v4304 = vadd.f32 %v4303, %v4273
        %v4305 = vadd.f32 %v4304, %v4274
        %v4306 = vadd.f32 %v4305, %v4275
        %v4307 = vadd.f32 %v4306, %v4276
        %v4308 = vadd.f32 %v4307, %v4277
        %v4309 = vadd.f32 %v4308, %v4278
        %v4310 = vadd.f32 %v4309, %v4279
        %v4311 = vrot.slane %v4310, 4
        %v4312 = vadd.f32 %v4310, %v4311
        %v4313 = vrot.slane %v4312, 2
        %v4314 = vadd.f32 %v4312, %v4313
        %v4315 = vrot.slane %v4314, 1
        %v4316 = vadd.f32 %v4314, %v4315
        %v4317 = vmul.f32 %v4248, %v4248
        %v4318 = vmul.f32 %v4249, %v4249
        %v4319 = vmul.f32 %v4250, %v4250
        %v4320 = vmul.f32 %v4251, %v4251
        %v4321 = vmul.f32 %v4252, %v4252
        %v4322 = vmul.f32 %v4253, %v4253
        %v4323 = vmul.f32 %v4254, %v4254
        %v4324 = vmul.f32 %v4255, %v4255
        %v4325 = vmul.f32 %v4256, %v4256
        %v4326 = vmul.f32 %v4257, %v4257
        %v4327 = vmul.f32 %v4258, %v4258
        %v4328 = vmul.f32 %v4259, %v4259
        %v4329 = vmul.f32 %v4260, %v4260
        %v4330 = vmul.f32 %v4261, %v4261
        %v4331 = vmul.f32 %v4262, %v4262
        %v4332 = vmul.f32 %v4263, %v4263
        %v4333 = vmul.f32 %v4264, %v4264
        %v4334 = vmul.f32 %v4265, %v4265
        %v4335 = vmul.f32 %v4266, %v4266
        %v4336 = vmul.f32 %v4267, %v4267
        %v4337 = vmul.f32 %v4268, %v4268
        %v4338 = vmul.f32 %v4269, %v4269
        %v4339 = vmul.f32 %v4270, %v4270
        %v4340 = vmul.f32 %v4271, %v4271
        %v4341 = vmul.f32 %v4272, %v4272
        %v4342 = vmul.f32 %v4273, %v4273
        %v4343 = vmul.f32 %v4274, %v4274
        %v4344 = vmul.f32 %v4275, %v4275
        %v4345 = vmul.f32 %v4276, %v4276
        %v4346 = vmul.f32 %v4277, %v4277
        %v4347 = vmul.f32 %v4278, %v4278
        %v4348 = vmul.f32 %v4279, %v4279
        %v4349 = vadd.f32 %v4317, %v4318
        %v4350 = vadd.f32 %v4349, %v4319
        %v4351 = vadd.f32 %v4350, %v4320
        %v4352 = vadd.f32 %v4351, %v4321
        %v4353 = vadd.f32 %v4352, %v4322
        %v4354 = vadd.f32 %v4353, %v4323
        %v4355 = vadd.f32 %v4354, %v4324
        %v4356 = vadd.f32 %v4355, %v4325
        %v4357 = vadd.f32 %v4356, %v4326
        %v4358 = vadd.f32 %v4357, %v4327
        %v4359 = vadd.f32 %v4358, %v4328
        %v4360 = vadd.f32 %v4359, %v4329
        %v4361 = vadd.f32 %v4360, %v4330
        %v4362 = vadd.f32 %v4361, %v4331
        %v4363 = vadd.f32 %v4362, %v4332
        %v4364 = vadd.f32 %v4363, %v4333
        %v4365 = vadd.f32 %v4364, %v4334
        %v4366 = vadd.f32 %v4365, %v4335
        %v4367 = vadd.f32 %v4366, %v4336
        %v4368 = vadd.f32 %v4367, %v4337
        %v4369 = vadd.f32 %v4368, %v4338
        %v4370 = vadd.f32 %v4369, %v4339
        %v4371 = vadd.f32 %v4370, %v4340
        %v4372 = vadd.f32 %v4371, %v4341
        %v4373 = vadd.f32 %v4372, %v4342
        %v4374 = vadd.f32 %v4373, %v4343
        %v4375 = vadd.f32 %v4374, %v4344
        %v4376 = vadd.f32 %v4375, %v4345
        %v4377 = vadd.f32 %v4376, %v4346
        %v4378 = vadd.f32 %v4377, %v4347
        %v4379 = vadd.f32 %v4378, %v4348
        %v4380 = vrot.slane %v4379, 4
        %v4381 = vadd.f32 %v4379, %v4380
        %v4382 = vrot.slane %v4381, 2
        %v4383 = vadd.f32 %v4381, %v4382
        %v4384 = vrot.slane %v4383, 1
        %v4385 = vadd.f32 %v4383, %v4384
        %v4386 = vmul.f32 %v4316, %v2654
        %v4387 = vmul.f32 %v4385, %v2654
        %v4388 = vmul.f32 %v4386, %v4386
        %v4389 = vsub.f32 %v4387, %v4388
        %v4390 = vmax.f32 %v4389, 0.0
        %v4391 = vadd.f32 %v4390, 1e-05
        %v4392 = vrsqrt.pop %v4391
        %v4393 = vmul.f32 %v4392, %v814
        %v4394 = vsub.f32 %v4248, %v4386
        %v4395 = vsub.f32 %v4249, %v4386
        %v4396 = vsub.f32 %v4250, %v4386
        %v4397 = vsub.f32 %v4251, %v4386
        %v4398 = vsub.f32 %v4252, %v4386
        %v4399 = vsub.f32 %v4253, %v4386
        %v4400 = vsub.f32 %v4254, %v4386
        %v4401 = vsub.f32 %v4255, %v4386
        %v4402 = vsub.f32 %v4256, %v4386
        %v4403 = vsub.f32 %v4257, %v4386
        %v4404 = vsub.f32 %v4258, %v4386
        %v4405 = vsub.f32 %v4259, %v4386
        %v4406 = vsub.f32 %v4260, %v4386
        %v4407 = vsub.f32 %v4261, %v4386
        %v4408 = vsub.f32 %v4262, %v4386
        %v4409 = vsub.f32 %v4263, %v4386
        %v4410 = vsub.f32 %v4264, %v4386
        %v4411 = vsub.f32 %v4265, %v4386
        %v4412 = vsub.f32 %v4266, %v4386
        %v4413 = vsub.f32 %v4267, %v4386
        %v4414 = vsub.f32 %v4268, %v4386
        %v4415 = vsub.f32 %v4269, %v4386
        %v4416 = vsub.f32 %v4270, %v4386
        %v4417 = vsub.f32 %v4271, %v4386
        %v4418 = vsub.f32 %v4272, %v4386
        %v4419 = vsub.f32 %v4273, %v4386
        %v4420 = vsub.f32 %v4274, %v4386
        %v4421 = vsub.f32 %v4275, %v4386
        %v4422 = vsub.f32 %v4276, %v4386
        %v4423 = vsub.f32 %v4277, %v4386
        %v4424 = vsub.f32 %v4278, %v4386
        %v4425 = vsub.f32 %v4279, %v4386
        %v4426 = vlaneseq
        %v4427 = vshrl.u32 %v4426, 7
        %v4428 = vsub.s32 2, %v4427
        %v4429 = vrot.slane %v4393, %v4428
        %v4430 = vmul.f32 %v4394, %v4429
        %v4431 = vmul.f32 %v4395, %v4429
        %v4432 = vmul.f32 %v4396, %v4429
        %v4433 = vmul.f32 %v4397, %v4429
        %v4434 = vmul.f32 %v4398, %v4429
        %v4435 = vmul.f32 %v4399, %v4429
        %v4436 = vmul.f32 %v4400, %v4429
        %v4437 = vmul.f32 %v4401, %v4429
        %v4438 = vmul.f32 %v4402, %v4429
        %v4439 = vmul.f32 %v4403, %v4429
        %v4440 = vmul.f32 %v4404, %v4429
        %v4441 = vmul.f32 %v4405, %v4429
        %v4442 = vmul.f32 %v4406, %v4429
        %v4443 = vmul.f32 %v4407, %v4429
        %v4444 = vmul.f32 %v4408, %v4429
        %v4445 = vmul.f32 %v4409, %v4429
        %v4446 = vmul.f32 %v4410, %v4429
        %v4447 = vmul.f32 %v4411, %v4429
        %v4448 = vmul.f32 %v4412, %v4429
        %v4449 = vmul.f32 %v4413, %v4429
        %v4450 = vmul.f32 %v4414, %v4429
        %v4451 = vmul.f32 %v4415, %v4429
        %v4452 = vmul.f32 %v4416, %v4429
        %v4453 = vmul.f32 %v4417, %v4429
        %v4454 = vmul.f32 %v4418, %v4429
        %v4455 = vmul.f32 %v4419, %v4429
        %v4456 = vmul.f32 %v4420, %v4429
        %v4457 = vmul.f32 %v4421, %v4429
        %v4458 = vmul.f32 %v4422, %v4429
        %v4459 = vmul.f32 %v4423, %v4429
        %v4460 = vmul.f32 %v4424, %v4429
        %v4461 = vmul.f32 %v4425, %v4429
        %v4462 = vlaneseq
        %v4463 = vshrl.u32 %v4462, 7
        %v4464 = vsub.s32 2, %v4463
        %v4465 = vrot.slane %v815, %v4464
        %v4466 = vadd.f32 %v4430, %v4465
        %v4467 = vadd.f32 %v4431, %v4465
        %v4468 = vadd.f32 %v4432, %v4465
        %v4469 = vadd.f32 %v4433, %v4465
        %v4470 = vadd.f32 %v4434, %v4465
        %v4471 = vadd.f32 %v4435, %v4465
        %v4472 = vadd.f32 %v4436, %v4465
        %v4473 = vadd.f32 %v4437, %v4465
        %v4474 = vadd.f32 %v4438, %v4465
        %v4475 = vadd.f32 %v4439, %v4465
        %v4476 = vadd.f32 %v4440, %v4465
        %v4477 = vadd.f32 %v4441, %v4465
        %v4478 = vadd.f32 %v4442, %v4465
        %v4479 = vadd.f32 %v4443, %v4465
        %v4480 = vadd.f32 %v4444, %v4465
        %v4481 = vadd.f32 %v4445, %v4465
        %v4482 = vadd.f32 %v4446, %v4465
        %v4483 = vadd.f32 %v4447, %v4465
        %v4484 = vadd.f32 %v4448, %v4465
        %v4485 = vadd.f32 %v4449, %v4465
        %v4486 = vadd.f32 %v4450, %v4465
        %v4487 = vadd.f32 %v4451, %v4465
        %v4488 = vadd.f32 %v4452, %v4465
        %v4489 = vadd.f32 %v4453, %v4465
        %v4490 = vadd.f32 %v4454, %v4465
        %v4491 = vadd.f32 %v4455, %v4465
        %v4492 = vadd.f32 %v4456, %v4465
        %v4493 = vadd.f32 %v4457, %v4465
        %v4494 = vadd.f32 %v4458, %v4465
        %v4495 = vadd.f32 %v4459, %v4465
        %v4496 = vadd.f32 %v4460, %v4465
        %v4497 = vadd.f32 %v4461, %v4465
        %v4498 = vpack.c.bf16 %v4467, %v4466
        %v4499 = vpack.c.bf16 %v4469, %v4468
        %v4500 = vpack.c.bf16 %v4471, %v4470
        %v4501 = vpack.c.bf16 %v4473, %v4472
        %v4502 = vpack.c.bf16 %v4475, %v4474
        %v4503 = vpack.c.bf16 %v4477, %v4476
        %v4504 = vpack.c.bf16 %v4479, %v4478
        %v4505 = vpack.c.bf16 %v4481, %v4480
        %v4506 = vpack.c.bf16 %v4483, %v4482
        %v4507 = vpack.c.bf16 %v4485, %v4484
        %v4508 = vpack.c.bf16 %v4487, %v4486
        %v4509 = vpack.c.bf16 %v4489, %v4488
        %v4510 = vpack.c.bf16 %v4491, %v4490
        %v4511 = vpack.c.bf16 %v4493, %v4492
        %v4512 = vpack.c.bf16 %v4495, %v4494
        %v4513 = vpack.c.bf16 %v4497, %v4496
        %4514 = vmatprep.subr.bf16.mxu0 0
        %4515 = vmatpush1.bf16.msra.mxu0 %v4498
        %4516 = vmatprep.subr.bf16.mxu0 0
        %4517 = vmatpush1.bf16.msra.mxu0 %v4499
        %4518 = vmatprep.subr.bf16.mxu0 0
        %4519 = vmatpush1.bf16.msra.mxu0 %v4500
        %4520 = vmatprep.subr.bf16.mxu0 0
        %4521 = vmatpush1.bf16.msra.mxu0 %v4501
        %4522 = vmatprep.subr.bf16.mxu0 0
        %4523 = vmatpush1.bf16.msra.mxu0 %v4502
        %4524 = vmatprep.subr.bf16.mxu0 0
        %4525 = vmatpush1.bf16.msra.mxu0 %v4503
        %4526 = vmatprep.subr.bf16.mxu0 0
        %4527 = vmatpush1.bf16.msra.mxu0 %v4504
        %4528 = vmatprep.subr.bf16.mxu0 0
        %4529 = vmatpush1.bf16.msra.mxu0 %v4505
        %4530 = vmatprep.subr.bf16.mxu0 0
        %4531 = vmatpush1.bf16.msra.mxu0 %v4506
        %4532 = vmatprep.subr.bf16.mxu0 0
        %4533 = vmatpush1.bf16.msra.mxu0 %v4507
        %4534 = vmatprep.subr.bf16.mxu0 0
        %4535 = vmatpush1.bf16.msra.mxu0 %v4508
        %4536 = vmatprep.subr.bf16.mxu0 0
        %4537 = vmatpush1.bf16.msra.mxu0 %v4509
        %4538 = vmatprep.subr.bf16.mxu0 0
        %4539 = vmatpush1.bf16.msra.mxu0 %v4510
        %4540 = vmatprep.subr.bf16.mxu0 0
        %4541 = vmatpush1.bf16.msra.mxu0 %v4511
        %4542 = vmatprep.subr.bf16.mxu0 0
        %4543 = vmatpush1.bf16.msra.mxu0 %v4512
        %4544 = vmatprep.subr.bf16.mxu0 0
        %4545 = vmatpush1.bf16.msra.mxu0 %v4513
        %4546 = vmatprep.mubr.bf16.mxu0 %v2912
        %4547 = vmatmul.mubr.bf16.gmra.mrb[0].mxu0 %v2911
        %v4548 = vpop.f32.mrb[0].mxu0
        %v4549 = vadd.f32 %v2422, %v4548
        %v4550 = vpop.f32.mrb[0].mxu0
        %v4551 = vpop.f32.mrb[0].mxu0
        %v4552 = vadd.f32 %v2425, %v4551
        %v4553 = vpop.f32.mrb[0].mxu0
        %4554 = vmatprep.mubr.bf16.mxu0 %v2914
        %4555 = vmatmul.mubr.bf16.gmra.mrb[0].mxu0 %v2913
        %v4556 = vpop.f32.mrb[0].mxu0
        %v4557 = vadd.f32 %v2430, %v4556
        %v4558 = vpop.f32.mrb[0].mxu0
        %v4559 = vpop.f32.mrb[0].mxu0
        %v4560 = vadd.f32 %v2433, %v4559
        %v4561 = vpop.f32.mrb[0].mxu0
        %4562 = vmatprep.mubr.bf16.mxu0 %v2916
        %4563 = vmatmul.mubr.bf16.gmra.mrb[0].mxu0 %v2915
        %v4564 = vpop.f32.mrb[0].mxu0
        %v4565 = vadd.f32 %v2438, %v4564
        %v4566 = vpop.f32.mrb[0].mxu0
        %v4567 = vpop.f32.mrb[0].mxu0
        %v4568 = vadd.f32 %v2441, %v4567
        %v4569 = vpop.f32.mrb[0].mxu0
        %4570 = vmatprep.mubr.bf16.mxu0 %v2918
        %4571 = vmatmul.mubr.bf16.gmra.mrb[0].mxu0 %v2917
        %v4572 = vpop.f32.mrb[0].mxu0
        %v4573 = vadd.f32 %v2446, %v4572
        %v4574 = vpop.f32.mrb[0].mxu0
        %v4575 = vpop.f32.mrb[0].mxu0
        %v4576 = vadd.f32 %v2449, %v4575
        %v4577 = vpop.f32.mrb[0].mxu0
        %4578 = vmatprep.mubr.bf16.mxu0 %v2920
        %4579 = vmatmul.mubr.bf16.gmra.mrb[0].mxu0 %v2919
        %v4580 = vpop.f32.mrb[0].mxu0
        %v4581 = vadd.f32 %v2454, %v4580
        %v4582 = vpop.f32.mrb[0].mxu0
        %v4583 = vpop.f32.mrb[0].mxu0
        %v4584 = vadd.f32 %v2457, %v4583
        %v4585 = vpop.f32.mrb[0].mxu0
        %4586 = vmatprep.mubr.bf16.mxu0 %v2922
        %4587 = vmatmul.mubr.bf16.gmra.mrb[0].mxu0 %v2921
        %v4588 = vpop.f32.mrb[0].mxu0
        %v4589 = vadd.f32 %v2462, %v4588
        %v4590 = vpop.f32.mrb[0].mxu0
        %v4591 = vpop.f32.mrb[0].mxu0
        %v4592 = vadd.f32 %v2465, %v4591
        %v4593 = vpop.f32.mrb[0].mxu0
        %4594 = vmatprep.mubr.bf16.mxu0 %v2924
        %4595 = vmatmul.mubr.bf16.gmra.mrb[0].mxu0 %v2923
        %v4596 = vpop.f32.mrb[0].mxu0
        %v4597 = vadd.f32 %v2470, %v4596
        %v4598 = vpop.f32.mrb[0].mxu0
        %v4599 = vpop.f32.mrb[0].mxu0
        %v4600 = vadd.f32 %v2473, %v4599
        %v4601 = vpop.f32.mrb[0].mxu0
        %4602 = vmatprep.mubr.bf16.mxu0 %v2926
        %4603 = vmatmul.mubr.bf16.gmra.mrb[0].mxu0 %v2925
        %v4604 = vpop.f32.mrb[0].mxu0
        %v4605 = vadd.f32 %v2478, %v4604
        %v4606 = vpop.f32.mrb[0].mxu0
        %v4607 = vpop.f32.mrb[0].mxu0
        %v4608 = vadd.f32 %v2481, %v4607
        %v4609 = vpop.f32.mrb[0].mxu0
        %4610 = vmatprep.mubr.bf16.mxu0 %v2928
        %4611 = vmatmul.mubr.bf16.gmra.mrb[0].mxu0 %v2927
        %v4612 = vpop.f32.mrb[0].mxu0
        %v4613 = vadd.f32 %v2486, %v4612
        %v4614 = vpop.f32.mrb[0].mxu0
        %v4615 = vpop.f32.mrb[0].mxu0
        %v4616 = vadd.f32 %v2489, %v4615
        %v4617 = vpop.f32.mrb[0].mxu0
        %4618 = vmatprep.mubr.bf16.mxu0 %v2930
        %4619 = vmatmul.mubr.bf16.gmra.mrb[0].mxu0 %v2929
        %v4620 = vpop.f32.mrb[0].mxu0
        %v4621 = vadd.f32 %v2494, %v4620
        %v4622 = vpop.f32.mrb[0].mxu0
        %v4623 = vpop.f32.mrb[0].mxu0
        %v4624 = vadd.f32 %v2497, %v4623
        %v4625 = vpop.f32.mrb[0].mxu0
        %4626 = vmatprep.mubr.bf16.mxu0 %v2932
        %4627 = vmatmul.mubr.bf16.gmra.mrb[0].mxu0 %v2931
        %v4628 = vpop.f32.mrb[0].mxu0
        %v4629 = vadd.f32 %v2502, %v4628
        %v4630 = vpop.f32.mrb[0].mxu0
        %v4631 = vpop.f32.mrb[0].mxu0
        %v4632 = vadd.f32 %v2505, %v4631
        %v4633 = vpop.f32.mrb[0].mxu0
        %4634 = vmatprep.mubr.bf16.mxu0 %v2934
        %4635 = vmatmul.mubr.bf16.gmra.mrb[0].mxu0 %v2933
        %v4636 = vpop.f32.mrb[0].mxu0
        %v4637 = vadd.f32 %v2510, %v4636
        %v4638 = vpop.f32.mrb[0].mxu0
        %v4639 = vpop.f32.mrb[0].mxu0
        %v4640 = vadd.f32 %v2513, %v4639
        %v4641 = vpop.f32.mrb[0].mxu0
        %4642 = vmatprep.mubr.bf16.mxu0 %v2936
        %4643 = vmatmul.mubr.bf16.gmra.mrb[0].mxu0 %v2935
        %v4644 = vpop.f32.mrb[0].mxu0
        %v4645 = vadd.f32 %v2518, %v4644
        %v4646 = vpop.f32.mrb[0].mxu0
        %v4647 = vpop.f32.mrb[0].mxu0
        %v4648 = vadd.f32 %v2521, %v4647
        %v4649 = vpop.f32.mrb[0].mxu0
        %4650 = vmatprep.mubr.bf16.mxu0 %v2938
        %4651 = vmatmul.mubr.bf16.gmra.mrb[0].mxu0 %v2937
        %v4652 = vpop.f32.mrb[0].mxu0
        %v4653 = vadd.f32 %v2526, %v4652
        %v4654 = vpop.f32.mrb[0].mxu0
        %v4655 = vpop.f32.mrb[0].mxu0
        %v4656 = vadd.f32 %v2529, %v4655
        %v4657 = vpop.f32.mrb[0].mxu0
        %4658 = vmatprep.mubr.bf16.mxu0 %v2940
        %4659 = vmatmul.mubr.bf16.gmra.mrb[0].mxu0 %v2939
        %v4660 = vpop.f32.mrb[0].mxu0
        %v4661 = vadd.f32 %v2534, %v4660
        %v4662 = vpop.f32.mrb[0].mxu0
        %v4663 = vpop.f32.mrb[0].mxu0
        %v4664 = vadd.f32 %v2537, %v4663
        %v4665 = vpop.f32.mrb[0].mxu0
        %4666 = vmatprep.mubr.bf16.mxu0 %v2942
        %4667 = vmatmul.mubr.bf16.gmra.mrb[0].mxu0 %v2941
        %v4668 = vpop.f32.mrb[0].mxu0
        %v4669 = vadd.f32 %v2542, %v4668
        %v4670 = vpop.f32.mrb[0].mxu0
        %v4671 = vpop.f32.mrb[0].mxu0
        %v4672 = vadd.f32 %v2545, %v4671
        %v4673 = vpop.f32.mrb[0].mxu0
        %4674 = vdwg.mxu0
        %v4675 = vstv %s813
        %v4676 = vmul.f32 %v4675, %v4466
        %v4677 = vmul.f32 %v4675, %v4467
        %v4678 = vmul.f32 %v4675, %v4468
        %v4679 = vmul.f32 %v4675, %v4469
        %v4680 = vmul.f32 %v4675, %v4470
        %v4681 = vmul.f32 %v4675, %v4471
        %v4682 = vmul.f32 %v4675, %v4472
        %v4683 = vmul.f32 %v4675, %v4473
        %v4684 = vmul.f32 %v4675, %v4474
        %v4685 = vmul.f32 %v4675, %v4475
        %v4686 = vmul.f32 %v4675, %v4476
        %v4687 = vmul.f32 %v4675, %v4477
        %v4688 = vmul.f32 %v4675, %v4478
        %v4689 = vmul.f32 %v4675, %v4479
        %v4690 = vmul.f32 %v4675, %v4480
        %v4691 = vmul.f32 %v4675, %v4481
        %v4692 = vmul.f32 %v4675, %v4482
        %v4693 = vmul.f32 %v4675, %v4483
        %v4694 = vmul.f32 %v4675, %v4484
        %v4695 = vmul.f32 %v4675, %v4485
        %v4696 = vmul.f32 %v4675, %v4486
        %v4697 = vmul.f32 %v4675, %v4487
        %v4698 = vmul.f32 %v4675, %v4488
        %v4699 = vmul.f32 %v4675, %v4489
        %v4700 = vmul.f32 %v4675, %v4490
        %v4701 = vmul.f32 %v4675, %v4491
        %v4702 = vmul.f32 %v4675, %v4492
        %v4703 = vmul.f32 %v4675, %v4493
        %v4704 = vmul.f32 %v4675, %v4494
        %v4705 = vmul.f32 %v4675, %v4495
        %v4706 = vmul.f32 %v4675, %v4496
        %v4707 = vmul.f32 %v4675, %v4497
        %v4708 = vadd.f32 %v4676, %v4549
        %v4709 = vadd.f32 %v4677, %v4552
        %v4710 = vadd.f32 %v4678, %v4557
        %v4711 = vadd.f32 %v4679, %v4560
        %v4712 = vadd.f32 %v4680, %v4565
        %v4713 = vadd.f32 %v4681, %v4568
        %v4714 = vadd.f32 %v4682, %v4573
        %v4715 = vadd.f32 %v4683, %v4576
        %v4716 = vadd.f32 %v4684, %v4581
        %v4717 = vadd.f32 %v4685, %v4584
        %v4718 = vadd.f32 %v4686, %v4589
        %v4719 = vadd.f32 %v4687, %v4592
        %v4720 = vadd.f32 %v4688, %v4597
        %v4721 = vadd.f32 %v4689, %v4600
        %v4722 = vadd.f32 %v4690, %v4605
        %v4723 = vadd.f32 %v4691, %v4608
        %v4724 = vadd.f32 %v4692, %v4613
        %v4725 = vadd.f32 %v4693, %v4616
        %v4726 = vadd.f32 %v4694, %v4621
        %v4727 = vadd.f32 %v4695, %v4624
        %v4728 = vadd.f32 %v4696, %v4629
        %v4729 = vadd.f32 %v4697, %v4632
        %v4730 = vadd.f32 %v4698, %v4637
        %v4731 = vadd.f32 %v4699, %v4640
        %v4732 = vadd.f32 %v4700, %v4645
        %v4733 = vadd.f32 %v4701, %v4648
        %v4734 = vadd.f32 %v4702, %v4653
        %v4735 = vadd.f32 %v4703, %v4656
        %v4736 = vadd.f32 %v4704, %v4661
        %v4737 = vadd.f32 %v4705, %v4664
        %v4738 = vadd.f32 %v4706, %v4669
        %v4739 = vadd.f32 %v4707, %v4672
        %v4740 = vpack.c.bf16 %v4709, %v4708
        %v4741 = vpack.c.bf16 %v4711, %v4710
        %v4742 = vpack.c.bf16 %v4713, %v4712
        %v4743 = vpack.c.bf16 %v4715, %v4714
        %v4744 = vpack.c.bf16 %v4717, %v4716
        %v4745 = vpack.c.bf16 %v4719, %v4718
        %v4746 = vpack.c.bf16 %v4721, %v4720
        %v4747 = vpack.c.bf16 %v4723, %v4722
        %v4748 = vpack.c.bf16 %v4725, %v4724
        %v4749 = vpack.c.bf16 %v4727, %v4726
        %v4750 = vpack.c.bf16 %v4729, %v4728
        %v4751 = vpack.c.bf16 %v4731, %v4730
        %v4752 = vpack.c.bf16 %v4733, %v4732
        %v4753 = vpack.c.bf16 %v4735, %v4734
        %v4754 = vpack.c.bf16 %v4737, %v4736
        %v4755 = vpack.c.bf16 %v4739, %v4738
        %s4756 = scalar_lea.vmem %s13, 128
        %v4757 = vld [vmem:[%s4756] sm:$0xf]
        %v4758 = vld [vmem:[%s4756 + $0x4] sm:$0xf]
        %v4759 = vld [vmem:[%s4756 + $0x8] sm:$0xf]
        %v4760 = vld [vmem:[%s4756 + $0xc] sm:$0xf]
        %v4761 = vld [vmem:[%s4756 + $0x10] sm:$0xf]
        %v4762 = vld [vmem:[%s4756 + $0x14] sm:$0xf]
        %v4763 = vld [vmem:[%s4756 + $0x18] sm:$0xf]
        %v4764 = vld [vmem:[%s4756 + $0x1c] sm:$0xf]
        %v4765 = vld [vmem:[%s4756 + $0x20] sm:$0xf]
        %v4766 = vld [vmem:[%s4756 + $0x24] sm:$0xf]
        %v4767 = vld [vmem:[%s4756 + $0x28] sm:$0xf]
        %v4768 = vld [vmem:[%s4756 + $0x2c] sm:$0xf]
        %v4769 = vld [vmem:[%s4756 + $0x30] sm:$0xf]
        %v4770 = vld [vmem:[%s4756 + $0x34] sm:$0xf]
        %v4771 = vld [vmem:[%s4756 + $0x38] sm:$0xf]
        %v4772 = vld [vmem:[%s4756 + $0x3c] sm:$0xf]
        %v4773 = vlaneseq
        %v4774 = vshrl.u32 %v4773, 7
        %v4775 = vsub.s32 2, %v4774
        %v4776 = vrot.slane %v816, %v4775
        %v4793 = vunpack.c.l.b16 %v4757
        %v4794 = vunpack.c.l.b16 %v4758
        %v4795 = vunpack.c.l.b16 %v4759
        %v4796 = vunpack.c.l.b16 %v4760
        %v4797 = vunpack.c.l.b16 %v4761
        %v4798 = vunpack.c.l.b16 %v4762
        %v4799 = vunpack.c.l.b16 %v4763
        %v4800 = vunpack.c.l.b16 %v4764
        %v4801 = vunpack.c.l.b16 %v4765
        %v4802 = vunpack.c.l.b16 %v4766
        %v4803 = vunpack.c.l.b16 %v4767
        %v4804 = vunpack.c.l.b16 %v4768
        %v4805 = vunpack.c.l.b16 %v4769
        %v4806 = vunpack.c.l.b16 %v4770
        %v4807 = vunpack.c.l.b16 %v4771
        %v4808 = vunpack.c.l.b16 %v4772
        %v4809 = vpack.c.b16 %v4794, %v4793
        %v4810 = vpack.c.b16 %v4796, %v4795
        %v4811 = vpack.c.b16 %v4798, %v4797
        %v4812 = vpack.c.b16 %v4800, %v4799
        %v4813 = vpack.c.b16 %v4802, %v4801
        %v4814 = vpack.c.b16 %v4804, %v4803
        %v4815 = vpack.c.b16 %v4806, %v4805
        %v4816 = vpack.c.b16 %v4808, %v4807
        %4825 = vmatprep.subr.bf16.mxu0 0
        %4826 = vmatpush1.bf16.msra.mxu0 %v4809
        %4827 = vmatprep.subr.bf16.mxu0 0
        %4828 = vmatpush1.bf16.msra.mxu0 %v4810
        %4829 = vmatprep.subr.bf16.mxu0 0
        %4830 = vmatpush1.bf16.msra.mxu0 %v4811
        %4831 = vmatprep.subr.bf16.mxu0 0
        %4832 = vmatpush1.bf16.msra.mxu0 %v4812
        %4833 = vmatprep.subr.bf16.mxu0 0
        %4834 = vmatpush1.bf16.msra.mxu0 %v4813
        %4835 = vmatprep.subr.bf16.mxu0 0
        %4836 = vmatpush1.bf16.msra.mxu0 %v4814
        %4837 = vmatprep.subr.bf16.mxu0 0
        %4838 = vmatpush1.bf16.msra.mxu0 %v4815
        %4839 = vmatprep.subr.bf16.mxu0 0
        %4840 = vmatpush1.bf16.msra.mxu0 %v4816
        %4841 = vmatprep.subr.bf16.mxu0 0
        %4842 = vmatpush1.bf16.msra.mxu0 0
        %4843 = vmatprep.subr.bf16.mxu0 0
        %4844 = vmatpush1.bf16.msra.mxu0 0
        %4845 = vmatprep.subr.bf16.mxu0 0
        %4846 = vmatpush1.bf16.msra.mxu0 0
        %4847 = vmatprep.subr.bf16.mxu0 0
        %4848 = vmatpush1.bf16.msra.mxu0 0
        %4849 = vmatprep.subr.bf16.mxu0 0
        %4850 = vmatpush1.bf16.msra.mxu0 0
        %4851 = vmatprep.subr.bf16.mxu0 0
        %4852 = vmatpush1.bf16.msra.mxu0 0
        %4853 = vmatprep.subr.bf16.mxu0 0
        %4854 = vmatpush1.bf16.msra.mxu0 0
        %4855 = vmatprep.subr.bf16.mxu0 0
        %4856 = vmatpush1.bf16.msra.mxu0 0
        %4857 = vmatprep.mubr.bf16.mxu0 0
        %4858 = vmatmul.mubr.bf16.gmra.mrb[0].mxu0 %v4740
        %v4859 = vpop.f32.mrb[0].mxu0
        %v4860 = vadd.f32 %v4776, %v4859
        %v4861 = vpop.f32.mrb[0].mxu0
        %v4862 = vpop.f32.mrb[0].mxu0
        %v4863 = vadd.f32 %v4776, %v4862
        %v4864 = vpop.f32.mrb[0].mxu0
        %4865 = vmatprep.mubr.bf16.mxu0 0
        %4866 = vmatmul.mubr.bf16.gmra.mrb[0].mxu0 %v4741
        %v4867 = vpop.f32.mrb[0].mxu0
        %v4868 = vadd.f32 %v4776, %v4867
        %v4869 = vpop.f32.mrb[0].mxu0
        %v4870 = vpop.f32.mrb[0].mxu0
        %v4871 = vadd.f32 %v4776, %v4870
        %v4872 = vpop.f32.mrb[0].mxu0
        %4873 = vmatprep.mubr.bf16.mxu0 0
        %4874 = vmatmul.mubr.bf16.gmra.mrb[0].mxu0 %v4742
        %v4875 = vpop.f32.mrb[0].mxu0
        %v4876 = vadd.f32 %v4776, %v4875
        %v4877 = vpop.f32.mrb[0].mxu0
        %v4878 = vpop.f32.mrb[0].mxu0
        %v4879 = vadd.f32 %v4776, %v4878
        %v4880 = vpop.f32.mrb[0].mxu0
        %4881 = vmatprep.mubr.bf16.mxu0 0
        %4882 = vmatmul.mubr.bf16.gmra.mrb[0].mxu0 %v4743
        %v4883 = vpop.f32.mrb[0].mxu0
        %v4884 = vadd.f32 %v4776, %v4883
        %v4885 = vpop.f32.mrb[0].mxu0
        %v4886 = vpop.f32.mrb[0].mxu0
        %v4887 = vadd.f32 %v4776, %v4886
        %v4888 = vpop.f32.mrb[0].mxu0
        %4889 = vmatprep.mubr.bf16.mxu0 0
        %4890 = vmatmul.mubr.bf16.gmra.mrb[0].mxu0 %v4744
        %v4891 = vpop.f32.mrb[0].mxu0
        %v4892 = vadd.f32 %v4776, %v4891
        %v4893 = vpop.f32.mrb[0].mxu0
        %v4894 = vpop.f32.mrb[0].mxu0
        %v4895 = vadd.f32 %v4776, %v4894
        %v4896 = vpop.f32.mrb[0].mxu0
        %4897 = vmatprep.mubr.bf16.mxu0 0
        %4898 = vmatmul.mubr.bf16.gmra.mrb[0].mxu0 %v4745
        %v4899 = vpop.f32.mrb[0].mxu0
        %v4900 = vadd.f32 %v4776, %v4899
        %v4901 = vpop.f32.mrb[0].mxu0
        %v4902 = vpop.f32.mrb[0].mxu0
        %v4903 = vadd.f32 %v4776, %v4902
        %v4904 = vpop.f32.mrb[0].mxu0
        %4905 = vmatprep.mubr.bf16.mxu0 0
        %4906 = vmatmul.mubr.bf16.gmra.mrb[0].mxu0 %v4746
        %v4907 = vpop.f32.mrb[0].mxu0
        %v4908 = vadd.f32 %v4776, %v4907
        %v4909 = vpop.f32.mrb[0].mxu0
        %v4910 = vpop.f32.mrb[0].mxu0
        %v4911 = vadd.f32 %v4776, %v4910
        %v4912 = vpop.f32.mrb[0].mxu0
        %4913 = vmatprep.mubr.bf16.mxu0 0
        %4914 = vmatmul.mubr.bf16.gmra.mrb[0].mxu0 %v4747
        %v4915 = vpop.f32.mrb[0].mxu0
        %v4916 = vadd.f32 %v4776, %v4915
        %v4917 = vpop.f32.mrb[0].mxu0
        %v4918 = vpop.f32.mrb[0].mxu0
        %v4919 = vadd.f32 %v4776, %v4918
        %v4920 = vpop.f32.mrb[0].mxu0
        %4921 = vmatprep.mubr.bf16.mxu0 0
        %4922 = vmatmul.mubr.bf16.gmra.mrb[0].mxu0 %v4748
        %v4923 = vpop.f32.mrb[0].mxu0
        %v4924 = vadd.f32 %v4776, %v4923
        %v4925 = vpop.f32.mrb[0].mxu0
        %v4926 = vpop.f32.mrb[0].mxu0
        %v4927 = vadd.f32 %v4776, %v4926
        %v4928 = vpop.f32.mrb[0].mxu0
        %4929 = vmatprep.mubr.bf16.mxu0 0
        %4930 = vmatmul.mubr.bf16.gmra.mrb[0].mxu0 %v4749
        %v4931 = vpop.f32.mrb[0].mxu0
        %v4932 = vadd.f32 %v4776, %v4931
        %v4933 = vpop.f32.mrb[0].mxu0
        %v4934 = vpop.f32.mrb[0].mxu0
        %v4935 = vadd.f32 %v4776, %v4934
        %v4936 = vpop.f32.mrb[0].mxu0
        %4937 = vmatprep.mubr.bf16.mxu0 0
        %4938 = vmatmul.mubr.bf16.gmra.mrb[0].mxu0 %v4750
        %v4939 = vpop.f32.mrb[0].mxu0
        %v4940 = vadd.f32 %v4776, %v4939
        %v4941 = vpop.f32.mrb[0].mxu0
        %v4942 = vpop.f32.mrb[0].mxu0
        %v4943 = vadd.f32 %v4776, %v4942
        %v4944 = vpop.f32.mrb[0].mxu0
        %4945 = vmatprep.mubr.bf16.mxu0 0
        %4946 = vmatmul.mubr.bf16.gmra.mrb[0].mxu0 %v4751
        %v4947 = vpop.f32.mrb[0].mxu0
        %v4948 = vadd.f32 %v4776, %v4947
        %v4949 = vpop.f32.mrb[0].mxu0
        %v4950 = vpop.f32.mrb[0].mxu0
        %v4951 = vadd.f32 %v4776, %v4950
        %v4952 = vpop.f32.mrb[0].mxu0
        %4953 = vmatprep.mubr.bf16.mxu0 0
        %4954 = vmatmul.mubr.bf16.gmra.mrb[0].mxu0 %v4752
        %v4955 = vpop.f32.mrb[0].mxu0
        %v4956 = vadd.f32 %v4776, %v4955
        %v4957 = vpop.f32.mrb[0].mxu0
        %v4958 = vpop.f32.mrb[0].mxu0
        %v4959 = vadd.f32 %v4776, %v4958
        %v4960 = vpop.f32.mrb[0].mxu0
        %4961 = vmatprep.mubr.bf16.mxu0 0
        %4962 = vmatmul.mubr.bf16.gmra.mrb[0].mxu0 %v4753
        %v4963 = vpop.f32.mrb[0].mxu0
        %v4964 = vadd.f32 %v4776, %v4963
        %v4965 = vpop.f32.mrb[0].mxu0
        %v4966 = vpop.f32.mrb[0].mxu0
        %v4967 = vadd.f32 %v4776, %v4966
        %v4968 = vpop.f32.mrb[0].mxu0
        %4969 = vmatprep.mubr.bf16.mxu0 0
        %4970 = vmatmul.mubr.bf16.gmra.mrb[0].mxu0 %v4754
        %v4971 = vpop.f32.mrb[0].mxu0
        %v4972 = vadd.f32 %v4776, %v4971
        %v4973 = vpop.f32.mrb[0].mxu0
        %v4974 = vpop.f32.mrb[0].mxu0
        %v4975 = vadd.f32 %v4776, %v4974
        %v4976 = vpop.f32.mrb[0].mxu0
        %4977 = vmatprep.mubr.bf16.mxu0 0
        %4978 = vmatmul.mubr.bf16.gmra.mrb[0].mxu0 %v4755
        %v4979 = vpop.f32.mrb[0].mxu0
        %v4980 = vadd.f32 %v4776, %v4979
        %v4981 = vpop.f32.mrb[0].mxu0
        %v4982 = vpop.f32.mrb[0].mxu0
        %v4983 = vadd.f32 %v4776, %v4982
        %v4984 = vpop.f32.mrb[0].mxu0
        %4985 = vdwg.mxu0
        %v4986 = vmul.f32 %v4860, %v779
        %v4987 = vmul.f32 %v4863, %v780
        %v4988 = vmul.f32 %v4868, %v781
        %v4989 = vmul.f32 %v4871, %v782
        %v4990 = vmul.f32 %v4876, %v783
        %v4991 = vmul.f32 %v4879, %v784
        %v4992 = vmul.f32 %v4884, %v785
        %v4993 = vmul.f32 %v4887, %v786
        %v4994 = vmul.f32 %v4892, %v787
        %v4995 = vmul.f32 %v4895, %v788
        %v4996 = vmul.f32 %v4900, %v789
        %v4997 = vmul.f32 %v4903, %v790
        %v4998 = vmul.f32 %v4908, %v791
        %v4999 = vmul.f32 %v4911, %v792
        %v5000 = vmul.f32 %v4916, %v793
        %v5001 = vmul.f32 %v4919, %v794
        %v5002 = vmul.f32 %v4924, %v795
        %v5003 = vmul.f32 %v4927, %v796
        %v5004 = vmul.f32 %v4932, %v797
        %v5005 = vmul.f32 %v4935, %v798
        %v5006 = vmul.f32 %v4940, %v799
        %v5007 = vmul.f32 %v4943, %v800
        %v5008 = vmul.f32 %v4948, %v801
        %v5009 = vmul.f32 %v4951, %v802
        %v5010 = vmul.f32 %v4956, %v803
        %v5011 = vmul.f32 %v4959, %v804
        %v5012 = vmul.f32 %v4964, %v805
        %v5013 = vmul.f32 %v4967, %v806
        %v5014 = vmul.f32 %v4972, %v807
        %v5015 = vmul.f32 %v4975, %v808
        %v5016 = vmul.f32 %v4980, %v809
        %v5017 = vmul.f32 %v4983, %v810
        %v5018 = vld [vmem:[%s673] sm:$0xff]
        %v5019 = vpack.c.bf16 %v4987, %v4986
        %v5020 = vpack.c.bf16 %v4989, %v4988
        %v5021 = vpack.c.bf16 %v4991, %v4990
        %v5022 = vpack.c.bf16 %v4993, %v4992
        %v5023 = vpack.c.bf16 %v4995, %v4994
        %v5024 = vpack.c.bf16 %v4997, %v4996
        %v5025 = vpack.c.bf16 %v4999, %v4998
        %v5026 = vpack.c.bf16 %v5001, %v5000
        %v5027 = vpack.c.bf16 %v5003, %v5002
        %v5028 = vpack.c.bf16 %v5005, %v5004
        %v5029 = vpack.c.bf16 %v5007, %v5006
        %v5030 = vpack.c.bf16 %v5009, %v5008
        %v5031 = vpack.c.bf16 %v5011, %v5010
        %v5032 = vpack.c.bf16 %v5013, %v5012
        %v5033 = vpack.c.bf16 %v5015, %v5014
        %v5034 = vpack.c.bf16 %v5017, %v5016
        %v5036 = vunpack.c.l.b16 %v5018
        %v5037 = vunpack.c.h.b16 %v5018
        %v5038 = vpack.c.b16 %v5036, %v5036
        %v5039 = vpack.c.b16 %v5037, %v5037
        %5042 = vmatprep.subr.bf16.mxu0 0
        %5043 = vmatpush1.bf16.msra.mxu0 %v5019
        %5044 = vmatprep.subr.bf16.mxu0 0
        %5045 = vmatpush1.bf16.msra.mxu0 %v5020
        %5046 = vmatprep.subr.bf16.mxu0 0
        %5047 = vmatpush1.bf16.msra.mxu0 %v5021
        %5048 = vmatprep.subr.bf16.mxu0 0
        %5049 = vmatpush1.bf16.msra.mxu0 %v5022
        %5050 = vmatprep.subr.bf16.mxu0 0
        %5051 = vmatpush1.bf16.msra.mxu0 %v5023
        %5052 = vmatprep.subr.bf16.mxu0 0
        %5053 = vmatpush1.bf16.msra.mxu0 %v5024
        %5054 = vmatprep.subr.bf16.mxu0 0
        %5055 = vmatpush1.bf16.msra.mxu0 %v5025
        %5056 = vmatprep.subr.bf16.mxu0 0
        %5057 = vmatpush1.bf16.msra.mxu0 %v5026
        %5058 = vmatprep.subr.bf16.mxu0 0
        %5059 = vmatpush1.bf16.msra.mxu0 %v5027
        %5060 = vmatprep.subr.bf16.mxu0 0
        %5061 = vmatpush1.bf16.msra.mxu0 %v5028
        %5062 = vmatprep.subr.bf16.mxu0 0
        %5063 = vmatpush1.bf16.msra.mxu0 %v5029
        %5064 = vmatprep.subr.bf16.mxu0 0
        %5065 = vmatpush1.bf16.msra.mxu0 %v5030
        %5066 = vmatprep.subr.bf16.mxu0 0
        %5067 = vmatpush1.bf16.msra.mxu0 %v5031
        %5068 = vmatprep.subr.bf16.mxu0 0
        %5069 = vmatpush1.bf16.msra.mxu0 %v5032
        %5070 = vmatprep.subr.bf16.mxu0 0
        %5071 = vmatpush1.bf16.msra.mxu0 %v5033
        %5072 = vmatprep.subr.bf16.mxu0 0
        %5073 = vmatpush1.bf16.msra.mxu0 %v5034
        %5074 = vmatprep.mubr.bf16.mxu0 %v5039
        %5075 = vmatmul.mubr.bf16.gmra.mrb[0].mxu0 %v5038
        %v5076 = vpop.f32.mrb[0].mxu0
        %v5077 = vadd.f32 0.0, %v5076
        %v5078 = vpop.f32.mrb[0].mxu0
        %v5079 = vpop.f32.mrb[0].mxu0
        %v5080 = vpop.f32.mrb[0].mxu0
        %5081 = vdwg.mxu0
        %v5082 = vpack.c.bf16 %v5077, %v5077
        %v5083 = vld [vmem:[%s15] sm:$0xf]
        %v5084 = vld [vmem:[%s15 + $0x4] sm:$0xf]
        %v5085 = vld [vmem:[%s15 + $0x8] sm:$0xf]
        %v5086 = vld [vmem:[%s15 + $0xc] sm:$0xf]
        %v5087 = vld [vmem:[%s15 + $0x10] sm:$0xf]
        %v5088 = vld [vmem:[%s15 + $0x14] sm:$0xf]
        %v5089 = vld [vmem:[%s15 + $0x18] sm:$0xf]
        %v5090 = vld [vmem:[%s15 + $0x1c] sm:$0xf]
        %v5091 = vld [vmem:[%s15 + $0x20] sm:$0xf]
        %v5092 = vld [vmem:[%s15 + $0x24] sm:$0xf]
        %v5093 = vld [vmem:[%s15 + $0x28] sm:$0xf]
        %v5094 = vld [vmem:[%s15 + $0x2c] sm:$0xf]
        %v5095 = vld [vmem:[%s15 + $0x30] sm:$0xf]
        %v5096 = vld [vmem:[%s15 + $0x34] sm:$0xf]
        %v5097 = vld [vmem:[%s15 + $0x38] sm:$0xf]
        %v5098 = vld [vmem:[%s15 + $0x3c] sm:$0xf]
        %v5099 = vld [vmem:[%s16] sm:$0x1]
        %v5101 = vlaneseq
        %v5102 = vshrl.u32 %v5101, 7
        %v5103 = vsub.s32 0, %v5102
        %v5104 = vrot.slane %v5099, %v5103
        %v5122 = vunpack.c.l.b16 %v5083
        %v5123 = vunpack.c.l.b16 %v5084
        %v5124 = vunpack.c.l.b16 %v5085
        %v5125 = vunpack.c.l.b16 %v5086
        %v5126 = vunpack.c.l.b16 %v5087
        %v5127 = vunpack.c.l.b16 %v5088
        %v5128 = vunpack.c.l.b16 %v5089
        %v5129 = vunpack.c.l.b16 %v5090
        %v5130 = vunpack.c.l.b16 %v5091
        %v5131 = vunpack.c.l.b16 %v5092
        %v5132 = vunpack.c.l.b16 %v5093
        %v5133 = vunpack.c.l.b16 %v5094
        %v5134 = vunpack.c.l.b16 %v5095
        %v5135 = vunpack.c.l.b16 %v5096
        %v5136 = vunpack.c.l.b16 %v5097
        %v5137 = vunpack.c.l.b16 %v5098
        %v5138 = vpack.c.b16 %v5123, %v5122
        %v5139 = vpack.c.b16 %v5125, %v5124
        %v5140 = vpack.c.b16 %v5127, %v5126
        %v5141 = vpack.c.b16 %v5129, %v5128
        %v5142 = vpack.c.b16 %v5131, %v5130
        %v5143 = vpack.c.b16 %v5133, %v5132
        %v5144 = vpack.c.b16 %v5135, %v5134
        %v5145 = vpack.c.b16 %v5137, %v5136
        %5154 = vmatprep.subr.bf16.mxu0 0
        %5155 = vmatpush1.bf16.msra.mxu0 %v5138
        %5156 = vmatprep.subr.bf16.mxu0 0
        %5157 = vmatpush1.bf16.msra.mxu0 %v5139
        %5158 = vmatprep.subr.bf16.mxu0 0
        %5159 = vmatpush1.bf16.msra.mxu0 %v5140
        %5160 = vmatprep.subr.bf16.mxu0 0
        %5161 = vmatpush1.bf16.msra.mxu0 %v5141
        %5162 = vmatprep.subr.bf16.mxu0 0
        %5163 = vmatpush1.bf16.msra.mxu0 %v5142
        %5164 = vmatprep.subr.bf16.mxu0 0
        %5165 = vmatpush1.bf16.msra.mxu0 %v5143
        %5166 = vmatprep.subr.bf16.mxu0 0
        %5167 = vmatpush1.bf16.msra.mxu0 %v5144
        %5168 = vmatprep.subr.bf16.mxu0 0
        %5169 = vmatpush1.bf16.msra.mxu0 %v5145
        %5170 = vmatprep.subr.bf16.mxu0 0
        %5171 = vmatpush1.bf16.msra.mxu0 0
        %5172 = vmatprep.subr.bf16.mxu0 0
        %5173 = vmatpush1.bf16.msra.mxu0 0
        %5174 = vmatprep.subr.bf16.mxu0 0
        %5175 = vmatpush1.bf16.msra.mxu0 0
        %5176 = vmatprep.subr.bf16.mxu0 0
        %5177 = vmatpush1.bf16.msra.mxu0 0
        %5178 = vmatprep.subr.bf16.mxu0 0
        %5179 = vmatpush1.bf16.msra.mxu0 0
        %5180 = vmatprep.subr.bf16.mxu0 0
        %5181 = vmatpush1.bf16.msra.mxu0 0
        %5182 = vmatprep.subr.bf16.mxu0 0
        %5183 = vmatpush1.bf16.msra.mxu0 0
        %5184 = vmatprep.subr.bf16.mxu0 0
        %5185 = vmatpush1.bf16.msra.mxu0 0
        %5186 = vmatprep.mubr.bf16.mxu0 0
        %5187 = vmatmul.mubr.bf16.gmra.mrb[0].mxu0 %v5082
        %v5188 = vpop.f32.mrb[0].mxu0
        %v5189 = vadd.f32 %v5104, %v5188
        %v5190 = vpop.f32.mrb[0].mxu0
        %v5191 = vpop.f32.mrb[0].mxu0
        %v5192 = vpop.f32.mrb[0].mxu0
        %5193 = vdwg.mxu0
        %5194 = vst [vmem:[%s653] sm:$0xff] %v5189
        %s5195 = sand.u32 %s426, 1
        %s5196 = scalar_lea.sflag [#allocation4], %s5195
        %s5197 = sand.u32 %s426, 1
        %s5198 = smul.addr %s5197, 8
        %s5199 = scalar_lea.vmem [#allocation9], %s5198
        // Predicated region
        $region101: #{tpu_custom_call.1} parent=87 // pred_check
          %p5200 = pneg %p436
        $region102: #{tpu_custom_call.1} parent=87 // pred_check_branch
          %5202 = sbr.rel (%p5200) target = $region104
        $region103: #{tpu_custom_call.1} parent=87 // pred_region
          %s5204 = ssub.s32 128, 128
          %5205 = vsyncadd %s5196, %s5204
          %s5206 = smul.addr %s36, 128
          %s5207 = scalar_lea.hbm %s17, %s5206
          %s5209 = sshll.u32 %s5199, 4
          %s5210 = int_to_ptr.vmem [resolvable:$true] %s5209
          %5212 = dma.vmem_to_hbm [thread:$0]  %s5210, 128, %s5207, %s5196
        $region104: #{tpu_custom_call.1} parent=87 // pred_fallthru
          _
      $region88: #{tpu_custom_call.1} parent=5 // pred_fallthru
        _
      %p5213 = scmp.le.s32.totalorder 2, %s31
      // Predicated region
      $region105: #{tpu_custom_call.1} parent=5 // pred_check
        %p5214 = pneg %p5213
      $region106: #{tpu_custom_call.1} parent=5 // pred_check_branch
        %5216 = sbr.rel (%p5214) target = $region108
      $region107: #{tpu_custom_call.1} parent=5 // pred_region
        %s5217 = ssub.s32 %s31, 2
        // Predicated region
        $region109: #{tpu_custom_call.1} parent=107 // pred_check
          %p5218 = pneg %p442
        $region110: #{tpu_custom_call.1} parent=107 // pred_check_branch
          %5220 = sbr.rel (%p5218) target = $region112
        $region111: #{tpu_custom_call.1} parent=107 // pred_region
          %s5221 = sand.u32 %s427, 1
          %s5222 = scalar_lea.sflag [#allocation4], %s5221
          %s5223 = sand.u32 %s427, 1
          %s5224 = smul.addr %s5223, 8
          %s5225 = scalar_lea.vmem [#allocation9], %s5224
          %5226 = dma.done %s5222, 128
        $region112: #{tpu_custom_call.1} parent=107 // pred_fallthru
          _
      $region108: #{tpu_custom_call.1} parent=5 // pred_fallthru
        _
    $region6: #{tpu_custom_call.1} parent=1 // loop_footer
      %s35 = sadd.s32 1, %s31
    $region7: #{tpu_custom_call.1} parent=1 // loop_footer_branch
      %30 = sbr.rel target = $region3
    $region8: #{tpu_custom_call.1} parent=1 // loop_exit
      _
    %5227 = vsyncpa [#allocation3], 1
    %s5228 = scalar_lea.sflag [#allocation3], 1
    %5229 = vsyncpa %s5228, 1
    %5230 = vsyncpa [#allocation4], 1
    %s5231 = scalar_lea.sflag [#allocation4], 1
    %5232 = vsyncpa %s5231, 1
    %5233 = vsyncpa [#allocation5], 1
    %s5234 = scalar_lea.sflag [#allocation5], 1
    %5235 = vsyncpa %s5234, 1
    %5236 = vsyncpa [#allocation7], 1

</llo_original>
